<compile_context>
chip_gen: v6e
topology: v6e:2x2x1
jax: 0.10.0
libtpu: 0.0.40
codegen_flags: <defaults>
</compile_context>

<pallas_src>
import functools

import jax
import jax.numpy as jnp
from jax.experimental import pallas as pl
from jax.experimental.pallas import tpu as pltpu

MXU_DTYPE = jnp.bfloat16     # MXU operand / inter-layer activation dtype (f32 accumulation)


# ----------------------------------------------------------------------------
# Hardware-dependent budgets and tile selection
# ----------------------------------------------------------------------------
@functools.lru_cache(maxsize=None)
def _hw_budget():
    """Returns (vmem_limit_bytes, max_time_tile), TPU-generation dependent."""
    cap = 64 * 1024 * 1024
    try:
        info = pltpu.get_tpu_info()
        cap = int(getattr(info, "vmem_capacity_bytes", cap))
    except Exception:
        pass
    if cap >= 96 * 1024 * 1024:          # v5e / v6e: 128 MiB physical VMEM
        return 96 * 1024 * 1024, 512
    return 48 * 1024 * 1024, 256         # v7x: 64 MiB physical VMEM


def _pick_tile_t(T, max_tile):
    """Largest multiple-of-8 divisor of T (<= max_tile), preferring >= 2 tiles."""
    divs = [t for t in range(8, min(T, max_tile) + 1, 8) if T % t == 0]
    if not divs:
        return T
    cand = [t for t in divs if T // t >= 2]
    return max(cand) if cand else max(divs)


def _pick_tile_c(Cout):
    for tc in (256, 128):
        if Cout % tc == 0:
            return tc
    return Cout


# ----------------------------------------------------------------------------
# Shared per-tile conv body: same-padded Conv1d + folded-BN shift (f32 epilogue)
# ----------------------------------------------------------------------------
def _conv_tile(win, w_ref, shift_ref, *, K, Cin, tile_t, use_im2col):
    """win: (tile_t + K - 1, Cin) bf16 window from the padded slab."""
    if use_im2col:
        # Small Cin: one deep MXU pass with contraction K*Cin; cols built in bf16.
        if K > 1:
            cols = jnp.concatenate([win[k:k + tile_t, :] for k in range(K)], axis=1)
        else:
            cols = win
        acc = jnp.dot(cols, w_ref[...], preferred_element_type=jnp.float32)
    else:
        # Cin >= 128: per-tap accumulation already fills the MXU and avoids the
        # K-way im2col VMEM / store blowup (binding slot on v5e).
        acc = jnp.dot(win[0:tile_t, :], w_ref[0:Cin, :],
                      preferred_element_type=jnp.float32)
        for k in range(1, K):
            acc = acc + jnp.dot(win[k:k + tile_t, :],
                                w_ref[k * Cin:(k + 1) * Cin, :],
                                preferred_element_type=jnp.float32)
    return acc + shift_ref[...]           # folded-BN shift, f32


# ----------------------------------------------------------------------------
# Kernel 1: Conv1d + BN (+ ReLU), time- and Cout-tiled.  grid = (B, nc, nt)
# ----------------------------------------------------------------------------
def _conv_bn_act_kernel(xp_ref, w_ref, shift_ref, o_ref, *,
                        K, Cin, tile_t, use_im2col, apply_relu):
    t0 = pl.multiple_of(pl.program_id(2) * tile_t, tile_t)
    win = xp_ref[pl.ds(t0, tile_t + K - 1), :]
    y = _conv_tile(win, w_ref, shift_ref, K=K, Cin=Cin, tile_t=tile_t,
                   use_im2col=use_im2col)
    if apply_relu:
        y = jnp.maximum(y, 0.0)
    o_ref[...] = y.astype(o_ref.dtype)


def conv_bn_act(x_pad, w2d, shift, *, K, T, tile_t, tile_c, apply_relu, out_dtype):
    """x_pad: (B, T + K - 1, Cin) bf16 (same-padded); w2d: (K*Cin, Cout) bf16."""
    B, Tp, Cin = x_pad.shape
    KC, Cout = w2d.shape
    assert KC == K * Cin and Tp == T + K - 1
    nt, nc = T // tile_t, Cout // tile_c
    vmem_limit, _ = _hw_budget()
    kernel = functools.partial(_conv_bn_act_kernel, K=K, Cin=Cin, tile_t=tile_t,
                               use_im2col=(Cin < 128), apply_relu=apply_relu)
    return pl.pallas_call(
        kernel,
        out_shape=jax.ShapeDtypeStruct((B, T, Cout), out_dtype),
        grid=(B, nc, nt),
        in_specs=[
            pl.BlockSpec((None, Tp, Cin), lambda b, c, t: (b, 0, 0)),   # resident padded slab
            pl.BlockSpec((KC, tile_c), lambda b, c, t: (0, c)),
            pl.BlockSpec((1, tile_c), lambda b, c, t: (0, c)),
        ],
        out_specs=pl.BlockSpec((None, tile_t, tile_c), lambda b, c, t: (b, t, c)),
        compiler_params=pltpu.CompilerParams(
            dimension_semantics=("parallel", "parallel", "parallel"),
            vmem_limit_bytes=vmem_limit),
    )(x_pad, w2d, shift.reshape(1, Cout))


# ----------------------------------------------------------------------------
# Kernel 2: last Conv1d + BN (no act) + running time-sum for SE pooling.
#   grid = (B, nc, nt); sum output is resident across the (innermost) t axis.
# ----------------------------------------------------------------------------
def _conv_bn_sum_kernel(xp_ref, w_ref, shift_ref, o_ref, sum_ref, *,
                        K, Cin, tile_t, use_im2col):
    t0 = pl.multiple_of(pl.program_id(2) * tile_t, tile_t)
    win = xp_ref[pl.ds(t0, tile_t + K - 1), :]
    y = _conv_tile(win, w_ref, shift_ref, K=K, Cin=Cin, tile_t=tile_t,
                   use_im2col=use_im2col)
    o_ref[...] = y.astype(o_ref.dtype)

    @pl.when(pl.program_id(2) == 0)
    def _():
        sum_ref[...] = jnp.zeros_like(sum_ref)

    sum_ref[...] += jnp.sum(y, axis=0, keepdims=True)


def conv_bn_sum(x_pad, w2d, shift, *, K, T, tile_t, tile_c):
    B, Tp, Cin = x_pad.shape
    KC, Cout = w2d.shape
    assert KC == K * Cin and Tp == T + K - 1
    nt, nc = T // tile_t, Cout // tile_c
    vmem_limit, _ = _hw_budget()
    kernel = functools.partial(_conv_bn_sum_kernel, K=K, Cin=Cin, tile_t=tile_t,
                               use_im2col=(Cin < 128))
    return pl.pallas_call(
        kernel,
        out_shape=(jax.ShapeDtypeStruct((B, T, Cout), MXU_DTYPE),
                   jax.ShapeDtypeStruct((B, 1, Cout), jnp.float32)),
        grid=(B, nc, nt),
        in_specs=[
            pl.BlockSpec((None, Tp, Cin), lambda b, c, t: (b, 0, 0)),
            pl.BlockSpec((KC, tile_c), lambda b, c, t: (0, c)),
            pl.BlockSpec((1, tile_c), lambda b, c, t: (0, c)),
        ],
        out_specs=(
            pl.BlockSpec((None, tile_t, tile_c), lambda b, c, t: (b, t, c)),
            pl.BlockSpec((None, 1, tile_c), lambda b, c, t: (b, 0, c)),   # accumulator
        ),
        compiler_params=pltpu.CompilerParams(
            dimension_semantics=("parallel", "parallel", "arbitrary"),
            vmem_limit_bytes=vmem_limit),
    )(x_pad, w2d, shift.reshape(1, Cout))


# ----------------------------------------------------------------------------
# Kernel 3: SE gate apply + 1x1 residual conv + BN + final ReLU.  grid=(B,nc,nt)
# ----------------------------------------------------------------------------
def _combine_kernel(h_ref, gate_ref, x0_ref, rw_ref, rshift_ref, o_ref):
    res = jnp.dot(x0_ref[...], rw_ref[...],
                  preferred_element_type=jnp.float32) + rshift_ref[...]
    y = h_ref[...].astype(jnp.float32) * gate_ref[...] + res
    o_ref[...] = jnp.maximum(y, 0.0).astype(o_ref.dtype)


def combine_se_res(h, gate, x0, res_w, res_shift, *, tile_t, tile_c):
    B, T, Cout = h.shape
    Cin = x0.shape[-1]
    nt, nc = T // tile_t, Cout // tile_c
    vmem_limit, _ = _hw_budget()
    return pl.pallas_call(
        _combine_kernel,
        out_shape=jax.ShapeDtypeStruct((B, T, Cout), jnp.float32),
        grid=(B, nc, nt),
        in_specs=[
            pl.BlockSpec((None, tile_t, tile_c), lambda b, c, t: (b, t, c)),
            pl.BlockSpec((None, 1, tile_c), lambda b, c, t: (b, 0, c)),
            pl.BlockSpec((None, tile_t, Cin), lambda b, c, t: (b, t, 0)),
            pl.BlockSpec((Cin, tile_c), lambda b, c, t: (0, c)),
            pl.BlockSpec((1, tile_c), lambda b, c, t: (0, c)),
        ],
        out_specs=pl.BlockSpec((None, tile_t, tile_c), lambda b, c, t: (b, t, c)),
        compiler_params=pltpu.CompilerParams(
            dimension_semantics=("parallel", "parallel", "parallel"),
            vmem_limit_bytes=vmem_limit),
    )(h, gate, x0, res_w, res_shift.reshape(1, Cout))


# ----------------------------------------------------------------------------
# Parameter construction (deterministic; BN in eval mode, scale folded into W)
# ----------------------------------------------------------------------------
def init_params(key, in_channels, out_channels, repeat=5, kernel_size=11, reduction=8):
    assert kernel_size % 2 == 1, "same-padding path implemented for odd kernels"
    pad = (kernel_size - 1) // 2
    keys = iter(jax.random.split(key, 5 * (repeat + 1) + 2))

    def folded_conv(cin, cout, k):
        w = jax.random.normal(next(keys), (k, cin, cout), jnp.float32) / jnp.sqrt(k * cin)
        gamma = 1.0 + 0.1 * jax.random.normal(next(keys), (cout,))
        beta = 0.1 * jax.random.normal(next(keys), (cout,))
        mean = 0.1 * jax.random.normal(next(keys), (cout,))
        var = 1.0 + 0.1 * jax.random.uniform(next(keys), (cout,))
        scale = gamma / jnp.sqrt(var + 1e-5)
        shift = (beta - mean * scale).astype(jnp.float32)
        # Fold BN scale into the conv weights; im2col layout (K*Cin, Cout), bf16.
        w2d = (w * scale[None, None, :]).reshape(k * cin, cout).astype(MXU_DTYPE)
        return w2d, shift

    convs = []
    cin = in_channels
    for _ in range(repeat - 1):                              # conv+BN+ReLU layers
        w2d, shift = folded_conv(cin, out_channels, kernel_size)
        convs.append({"w2d": w2d, "shift": shift})
        cin = out_channels
    last_w2d, last_shift = folded_conv(cin, out_channels, kernel_size)   # no activation

    cr = out_channels // reduction
    se_w1 = (jax.random.normal(next(keys), (out_channels, cr)) /
             jnp.sqrt(out_channels)).astype(MXU_DTYPE)
    se_w2 = (jax.random.normal(next(keys), (cr, out_channels)) /
             jnp.sqrt(cr)).astype(MXU_DTYPE)

    res_w, res_shift = folded_conv(in_channels, out_channels, 1)         # 1x1 residual conv

    return dict(convs=convs, last_w2d=last_w2d, last_shift=last_shift,
                se_w1=se_w1, se_w2=se_w2, res_w=res_w, res_shift=res_shift,
                K=kernel_size, pad=pad)


# ----------------------------------------------------------------------------
# Forward (PyTorch layout in/out: (batch, channels, time))
# ----------------------------------------------------------------------------
def citrinet_block_forward(x_nct, params):
    x = jnp.transpose(x_nct, (0, 2, 1)).astype(jnp.float32)     # (B, T, Cin)
    B, T, Cin = x.shape
    K, pad = params["K"], params["pad"]
    Cout = params["last_w2d"].shape[1]
    _, max_tile = _hw_budget()
    tile_t = _pick_tile_t(T, max_tile)
    tile_c = _pick_tile_c(Cout)

    x_bf = x.astype(MXU_DTYPE)
    h = x_bf
    for layer in params["convs"]:
        hp = jnp.pad(h, ((0, 0), (pad, pad), (0, 0)))            # same-pad once, in HBM
        h = conv_bn_act(hp, layer["w2d"], layer["shift"], K=K, T=T,
                        tile_t=tile_t, tile_c=tile_c, apply_relu=True,
                        out_dtype=MXU_DTYPE)
    hp = jnp.pad(h, ((0, 0), (pad, pad), (0, 0)))
    hconv, hsum = conv_bn_sum(hp, params["last_w2d"], params["last_shift"],
                              K=K, T=T, tile_t=tile_t, tile_c=tile_c)

    # SqueezeExcite gate (tiny matmuls) in plain JAX on the pooled vector.
    pooled = hsum / T                                            # (B, 1, Cout) f32
    z = jnp.einsum("bxc,cr->bxr", pooled.astype(MXU_DTYPE), params["se_w1"],
                   preferred_element_type=jnp.float32)
    z = jnp.maximum(z, 0.0)
    gate = jax.nn.sigmoid(
        jnp.einsum("bxr,rc->bxc", z.astype(MXU_DTYPE), params["se_w2"],
                   preferred_element_type=jnp.float32))          # (B, 1, Cout) f32

    out = combine_se_res(hconv, gate, x_bf, params["res_w"], params["res_shift"],
                         tile_t=tile_t, tile_c=tile_c)
    return jnp.transpose(out, (0, 2, 1))                         # (B, Cout, T)


# ----------------------------------------------------------------------------
# Pure-JAX reference (same dtype policy: bf16 operands / activations, f32 accum)
# ----------------------------------------------------------------------------
def _ref_forward(x_nct, params):
    x = jnp.transpose(x_nct, (0, 2, 1)).astype(jnp.float32)
    K, pad = params["K"], params["pad"]

    def conv_same(h_bf, w2d, shift):
        B, T, C = h_bf.shape
        hp = jnp.pad(h_bf, ((0, 0), (pad, pad), (0, 0)))
        cols = jnp.concatenate([hp[:, k:k + T, :] for k in range(K)], axis=-1)
        y = jnp.einsum("btk,kc->btc", cols, w2d, preferred_element_type=jnp.float32)
        return y + shift[None, None, :]

    h = x.astype(MXU_DTYPE)
    for layer in params["convs"]:
        h = jnp.maximum(conv_same(h, layer["w2d"], layer["shift"]), 0.0).astype(MXU_DTYPE)
    y_last = conv_same(h, params["last_w2d"], params["last_shift"])     # f32
    h_last = y_last.astype(MXU_DTYPE)                                   # stored bf16 by kernel

    pooled = jnp.mean(y_last, axis=1, keepdims=True)                    # f32 (kernel sums f32)
    z = jnp.einsum("bxc,cr->bxr", pooled.astype(MXU_DTYPE), params["se_w1"],
                   preferred_element_type=jnp.float32)
    z = jnp.maximum(z, 0.0)
    gate = jax.nn.sigmoid(
        jnp.einsum("bxr,rc->bxc", z.astype(MXU_DTYPE), params["se_w2"],
                   preferred_element_type=jnp.float32))
    res = jnp.einsum("btc,cd->btd", x.astype(MXU_DTYPE), params["res_w"],
                     preferred_element_type=jnp.float32) + params["res_shift"][None, None, :]
    out = jnp.maximum(h_last.astype(jnp.float32) * gate + res, 0.0)
    return jnp.transpose(out, (0, 2, 1))


if __name__ == "__main__":
    # NOTE: toy shapes for the correctness harness only; do not tune tiles here.
    B, Cin, Cout, T = 2, 32, 64, 32
    repeat, kernel_size = 5, 11

    key = jax.random.PRNGKey(0)
    kx, kp = jax.random.split(key)
    x = jax.random.normal(kx, (B, Cin, T), dtype=jnp.float32)    # (batch, features, time)
    params = init_params(kp, Cin, Cout, repeat=repeat, kernel_size=kernel_size)

    fwd = jax.jit(functools.partial(citrinet_block_forward, params=params))
    out = jax.block_until_ready(fwd(x))
    ref = jax.block_until_ready(_ref_forward(x, params))

    assert out.shape == (B, Cout, T), out.shape
    assert bool(jnp.all(jnp.isfinite(out)))
    max_err = float(jnp.max(jnp.abs(out - ref)))
    assert jnp.allclose(out, ref, rtol=2e-2, atol=2e-2), max_err
    print("KERNEL_OK")
</pallas_src>

<mosaic_0001>
module attributes {stable_mosaic.version = 11 : i64} {
  func.func @_conv_bn_act_kernel(%arg0: i32, %arg1: i32, %arg2: i32, %arg3: memref<1x42x32xbf16, #tpu.memory_space<vmem>>, %arg4: memref<352x64xbf16, #tpu.memory_space<vmem>>, %arg5: memref<1x64xf32, #tpu.memory_space<vmem>>, %arg6: memref<1x16x64xbf16, #tpu.memory_space<vmem>>) attributes {dimension_semantics = [#tpu.dimension_semantics<parallel>, #tpu.dimension_semantics<parallel>, #tpu.dimension_semantics<parallel>], iteration_bounds = array<i64: 2, 1, 2>, scalar_prefetch = 0 : i64, scratch_operands = 0 : i64, tpu.core_type = #tpu.core_type<tc>, window_params = [{transform_indices = @transform_0, window_bounds = array<i64: 1, 42, 32>}, {transform_indices = @transform_1, window_bounds = array<i64: 352, 64>}, {transform_indices = @transform_2, window_bounds = array<i64: 1, 64>}, {transform_indices = @transform_3, window_bounds = array<i64: 1, 16, 64>}]} {
    %c16_i32 = arith.constant 16 : i32
    %0 = arith.muli %arg2, %c16_i32 : i32
    %1 = tpu.assume_multiple %0, 16 : i32
    %c0 = arith.constant 0 : index
    %2 = arith.index_cast %1 : i32 to index
    %c0_0 = arith.constant 0 : index
    %3 = vector.load %arg3[%c0, %2, %c0_0] : memref<1x42x32xbf16, #tpu.memory_space<vmem>>, vector<1x26x32xbf16>
    %4 = vector.shape_cast %3 : vector<1x26x32xbf16> to vector<26x32xbf16>
    %5 = vector.extract_strided_slice %4 {offsets = [0, 0], sizes = [16, 32], strides = [1, 1]} : vector<26x32xbf16> to vector<16x32xbf16>
    %6 = vector.extract_strided_slice %4 {offsets = [1, 0], sizes = [16, 32], strides = [1, 1]} : vector<26x32xbf16> to vector<16x32xbf16>
    %7 = vector.extract_strided_slice %4 {offsets = [2, 0], sizes = [16, 32], strides = [1, 1]} : vector<26x32xbf16> to vector<16x32xbf16>
    %8 = vector.extract_strided_slice %4 {offsets = [3, 0], sizes = [16, 32], strides = [1, 1]} : vector<26x32xbf16> to vector<16x32xbf16>
    %9 = vector.extract_strided_slice %4 {offsets = [4, 0], sizes = [16, 32], strides = [1, 1]} : vector<26x32xbf16> to vector<16x32xbf16>
    %10 = vector.extract_strided_slice %4 {offsets = [5, 0], sizes = [16, 32], strides = [1, 1]} : vector<26x32xbf16> to vector<16x32xbf16>
    %11 = vector.extract_strided_slice %4 {offsets = [6, 0], sizes = [16, 32], strides = [1, 1]} : vector<26x32xbf16> to vector<16x32xbf16>
    %12 = vector.extract_strided_slice %4 {offsets = [7, 0], sizes = [16, 32], strides = [1, 1]} : vector<26x32xbf16> to vector<16x32xbf16>
    %13 = vector.extract_strided_slice %4 {offsets = [8, 0], sizes = [16, 32], strides = [1, 1]} : vector<26x32xbf16> to vector<16x32xbf16>
    %14 = vector.extract_strided_slice %4 {offsets = [9, 0], sizes = [16, 32], strides = [1, 1]} : vector<26x32xbf16> to vector<16x32xbf16>
    %15 = vector.extract_strided_slice %4 {offsets = [10, 0], sizes = [16, 32], strides = [1, 1]} : vector<26x32xbf16> to vector<16x32xbf16>
    %16 = tpu.concatenate %5, %6, %7, %8, %9, %10, %11, %12, %13, %14, %15 in 1 : vector<16x32xbf16>, vector<16x32xbf16>, vector<16x32xbf16>, vector<16x32xbf16>, vector<16x32xbf16>, vector<16x32xbf16>, vector<16x32xbf16>, vector<16x32xbf16>, vector<16x32xbf16>, vector<16x32xbf16>, vector<16x32xbf16> -> vector<16x352xbf16>
    %c0_1 = arith.constant 0 : index
    %c0_2 = arith.constant 0 : index
    %17 = vector.load %arg4[%c0_1, %c0_2] : memref<352x64xbf16, #tpu.memory_space<vmem>>, vector<352x64xbf16>
    %cst = arith.constant dense<0.000000e+00> : vector<16x64xf32>
    %18 = tpu.matmul %16, %17, %cst {dimension_numbers = #tpu.dot_dimension_numbers<[1], [0], [0], [1], [0, 0, 1, 1], [], []>} : vector<16x352xbf16>, vector<352x64xbf16>, vector<16x64xf32> -> vector<16x64xf32>
    %c0_3 = arith.constant 0 : index
    %c0_4 = arith.constant 0 : index
    %19 = vector.load %arg5[%c0_3, %c0_4] : memref<1x64xf32, #tpu.memory_space<vmem>>, vector<1x64xf32>
    %20 = vector.broadcast %19 : vector<1x64xf32> to vector<16x64xf32>
    %21 = arith.addf %18, %20 : vector<16x64xf32>
    %cst_5 = arith.constant 0.000000e+00 : f32
    %22 = vector.broadcast %cst_5 : f32 to vector<16x64xf32>
    %23 = arith.maximumf %21, %22 : vector<16x64xf32>
    %24 = arith.truncf %23 : vector<16x64xf32> to vector<16x64xbf16>
    %c0_6 = arith.constant 0 : index
    %c0_7 = arith.constant 0 : index
    %c0_8 = arith.constant 0 : index
    %25 = vector.load %arg6[%c0_6, %c0_7, %c0_8] : memref<1x16x64xbf16, #tpu.memory_space<vmem>>, vector<1x16x64xbf16>
    %26 = vector.shape_cast %25 : vector<1x16x64xbf16> to vector<16x64xbf16>
    %27 = vector.shape_cast %24 : vector<16x64xbf16> to vector<1x16x64xbf16>
    tpu.vector_store %arg6[%c0_6, %c0_7, %c0_8], %27 {strides = array<i32>} : memref<1x16x64xbf16, #tpu.memory_space<vmem>>, vector<1x16x64xbf16>,
    return
  }
  func.func @transform_0(%arg0: i32, %arg1: i32, %arg2: i32) -> (i32, i32, i32) {
    %c0_i32 = arith.constant 0 : i32
    %c0_i32_0 = arith.constant 0 : i32
    %c0_i32_1 = arith.constant 0 : i32
    return %arg0, %c0_i32, %c0_i32_0 : i32, i32, i32
  }
  func.func @transform_1(%arg0: i32, %arg1: i32, %arg2: i32) -> (i32, i32) {
    %c0_i32 = arith.constant 0 : i32
    %c0_i32_0 = arith.constant 0 : i32
    return %c0_i32, %arg1 : i32, i32
  }
  func.func @transform_2(%arg0: i32, %arg1: i32, %arg2: i32) -> (i32, i32) {
    %c0_i32 = arith.constant 0 : i32
    %c0_i32_0 = arith.constant 0 : i32
    return %c0_i32, %arg1 : i32, i32
  }
  func.func @transform_3(%arg0: i32, %arg1: i32, %arg2: i32) -> (i32, i32, i32) {
    %c0_i32 = arith.constant 0 : i32
    return %arg0, %arg2, %arg1 : i32, i32, i32
  }
}

module attributes {stable_mosaic.version = 11 : i64} {
  func.func @_conv_bn_act_kernel(%arg0: i32, %arg1: i32, %arg2: i32, %arg3: memref<1x42x64xbf16, #tpu.memory_space<vmem>>, %arg4: memref<704x64xbf16, #tpu.memory_space<vmem>>, %arg5: memref<1x64xf32, #tpu.memory_space<vmem>>, %arg6: memref<1x16x64xbf16, #tpu.memory_space<vmem>>) attributes {dimension_semantics = [#tpu.dimension_semantics<parallel>, #tpu.dimension_semantics<parallel>, #tpu.dimension_semantics<parallel>], iteration_bounds = array<i64: 2, 1, 2>, scalar_prefetch = 0 : i64, scratch_operands = 0 : i64, tpu.core_type = #tpu.core_type<tc>, window_params = [{transform_indices = @transform_0, window_bounds = array<i64: 1, 42, 64>}, {transform_indices = @transform_1, window_bounds = array<i64: 704, 64>}, {transform_indices = @transform_2, window_bounds = array<i64: 1, 64>}, {transform_indices = @transform_3, window_bounds = array<i64: 1, 16, 64>}]} {
    %c16_i32 = arith.constant 16 : i32
    %0 = arith.muli %arg2, %c16_i32 : i32
    %1 = tpu.assume_multiple %0, 16 : i32
    %c0 = arith.constant 0 : index
    %2 = arith.index_cast %1 : i32 to index
    %c0_0 = arith.constant 0 : index
    %3 = vector.load %arg3[%c0, %2, %c0_0] : memref<1x42x64xbf16, #tpu.memory_space<vmem>>, vector<1x26x64xbf16>
    %4 = vector.shape_cast %3 : vector<1x26x64xbf16> to vector<26x64xbf16>
    %5 = vector.extract_strided_slice %4 {offsets = [0, 0], sizes = [16, 64], strides = [1, 1]} : vector<26x64xbf16> to vector<16x64xbf16>
    %6 = vector.extract_strided_slice %4 {offsets = [1, 0], sizes = [16, 64], strides = [1, 1]} : vector<26x64xbf16> to vector<16x64xbf16>
    %7 = vector.extract_strided_slice %4 {offsets = [2, 0], sizes = [16, 64], strides = [1, 1]} : vector<26x64xbf16> to vector<16x64xbf16>
    %8 = vector.extract_strided_slice %4 {offsets = [3, 0], sizes = [16, 64], strides = [1, 1]} : vector<26x64xbf16> to vector<16x64xbf16>
    %9 = vector.extract_strided_slice %4 {offsets = [4, 0], sizes = [16, 64], strides = [1, 1]} : vector<26x64xbf16> to vector<16x64xbf16>
    %10 = vector.extract_strided_slice %4 {offsets = [5, 0], sizes = [16, 64], strides = [1, 1]} : vector<26x64xbf16> to vector<16x64xbf16>
    %11 = vector.extract_strided_slice %4 {offsets = [6, 0], sizes = [16, 64], strides = [1, 1]} : vector<26x64xbf16> to vector<16x64xbf16>
    %12 = vector.extract_strided_slice %4 {offsets = [7, 0], sizes = [16, 64], strides = [1, 1]} : vector<26x64xbf16> to vector<16x64xbf16>
    %13 = vector.extract_strided_slice %4 {offsets = [8, 0], sizes = [16, 64], strides = [1, 1]} : vector<26x64xbf16> to vector<16x64xbf16>
    %14 = vector.extract_strided_slice %4 {offsets = [9, 0], sizes = [16, 64], strides = [1, 1]} : vector<26x64xbf16> to vector<16x64xbf16>
    %15 = vector.extract_strided_slice %4 {offsets = [10, 0], sizes = [16, 64], strides = [1, 1]} : vector<26x64xbf16> to vector<16x64xbf16>
    %16 = tpu.concatenate %5, %6, %7, %8, %9, %10, %11, %12, %13, %14, %15 in 1 : vector<16x64xbf16>, vector<16x64xbf16>, vector<16x64xbf16>, vector<16x64xbf16>, vector<16x64xbf16>, vector<16x64xbf16>, vector<16x64xbf16>, vector<16x64xbf16>, vector<16x64xbf16>, vector<16x64xbf16>, vector<16x64xbf16> -> vector<16x704xbf16>
    %c0_1 = arith.constant 0 : index
    %c0_2 = arith.constant 0 : index
    %17 = vector.load %arg4[%c0_1, %c0_2] : memref<704x64xbf16, #tpu.memory_space<vmem>>, vector<704x64xbf16>
    %cst = arith.constant dense<0.000000e+00> : vector<16x64xf32>
    %18 = tpu.matmul %16, %17, %cst {dimension_numbers = #tpu.dot_dimension_numbers<[1], [0], [0], [1], [0, 0, 1, 1], [], []>} : vector<16x704xbf16>, vector<704x64xbf16>, vector<16x64xf32> -> vector<16x64xf32>
    %c0_3 = arith.constant 0 : index
    %c0_4 = arith.constant 0 : index
    %19 = vector.load %arg5[%c0_3, %c0_4] : memref<1x64xf32, #tpu.memory_space<vmem>>, vector<1x64xf32>
    %20 = vector.broadcast %19 : vector<1x64xf32> to vector<16x64xf32>
    %21 = arith.addf %18, %20 : vector<16x64xf32>
    %cst_5 = arith.constant 0.000000e+00 : f32
    %22 = vector.broadcast %cst_5 : f32 to vector<16x64xf32>
    %23 = arith.maximumf %21, %22 : vector<16x64xf32>
    %24 = arith.truncf %23 : vector<16x64xf32> to vector<16x64xbf16>
    %c0_6 = arith.constant 0 : index
    %c0_7 = arith.constant 0 : index
    %c0_8 = arith.constant 0 : index
    %25 = vector.load %arg6[%c0_6, %c0_7, %c0_8] : memref<1x16x64xbf16, #tpu.memory_space<vmem>>, vector<1x16x64xbf16>
    %26 = vector.shape_cast %25 : vector<1x16x64xbf16> to vector<16x64xbf16>
    %27 = vector.shape_cast %24 : vector<16x64xbf16> to vector<1x16x64xbf16>
    tpu.vector_store %arg6[%c0_6, %c0_7, %c0_8], %27 {strides = array<i32>} : memref<1x16x64xbf16, #tpu.memory_space<vmem>>, vector<1x16x64xbf16>,
    return
  }
  func.func @transform_0(%arg0: i32, %arg1: i32, %arg2: i32) -> (i32, i32, i32) {
    %c0_i32 = arith.constant 0 : i32
    %c0_i32_0 = arith.constant 0 : i32
    %c0_i32_1 = arith.constant 0 : i32
    return %arg0, %c0_i32, %c0_i32_0 : i32, i32, i32
  }
  func.func @transform_1(%arg0: i32, %arg1: i32, %arg2: i32) -> (i32, i32) {
    %c0_i32 = arith.constant 0 : i32
    %c0_i32_0 = arith.constant 0 : i32
    return %c0_i32, %arg1 : i32, i32
  }
  func.func @transform_2(%arg0: i32, %arg1: i32, %arg2: i32) -> (i32, i32) {
    %c0_i32 = arith.constant 0 : i32
    %c0_i32_0 = arith.constant 0 : i32
    return %c0_i32, %arg1 : i32, i32
  }
  func.func @transform_3(%arg0: i32, %arg1: i32, %arg2: i32) -> (i32, i32, i32) {
    %c0_i32 = arith.constant 0 : i32
    return %arg0, %arg2, %arg1 : i32, i32, i32
  }
}

module attributes {stable_mosaic.version = 11 : i64} {
  func.func @_conv_bn_sum_kernel(%arg0: i32, %arg1: i32, %arg2: i32, %arg3: memref<1x42x64xbf16, #tpu.memory_space<vmem>>, %arg4: memref<704x64xbf16, #tpu.memory_space<vmem>>, %arg5: memref<1x64xf32, #tpu.memory_space<vmem>>, %arg6: memref<1x16x64xbf16, #tpu.memory_space<vmem>>, %arg7: memref<1x1x64xf32, #tpu.memory_space<vmem>>) attributes {dimension_semantics = [#tpu.dimension_semantics<parallel>, #tpu.dimension_semantics<parallel>, #tpu.dimension_semantics<arbitrary>], iteration_bounds = array<i64: 2, 1, 2>, scalar_prefetch = 0 : i64, scratch_operands = 0 : i64, tpu.core_type = #tpu.core_type<tc>, window_params = [{transform_indices = @transform_0, window_bounds = array<i64: 1, 42, 64>}, {transform_indices = @transform_1, window_bounds = array<i64: 704, 64>}, {transform_indices = @transform_2, window_bounds = array<i64: 1, 64>}, {transform_indices = @transform_3, window_bounds = array<i64: 1, 16, 64>}, {transform_indices = @transform_4, window_bounds = array<i64: 1, 1, 64>}]} {
    %c16_i32 = arith.constant 16 : i32
    %0 = arith.muli %arg2, %c16_i32 : i32
    %1 = tpu.assume_multiple %0, 16 : i32
    %c0 = arith.constant 0 : index
    %2 = arith.index_cast %1 : i32 to index
    %c0_0 = arith.constant 0 : index
    %3 = vector.load %arg3[%c0, %2, %c0_0] : memref<1x42x64xbf16, #tpu.memory_space<vmem>>, vector<1x26x64xbf16>
    %4 = vector.shape_cast %3 : vector<1x26x64xbf16> to vector<26x64xbf16>
    %5 = vector.extract_strided_slice %4 {offsets = [0, 0], sizes = [16, 64], strides = [1, 1]} : vector<26x64xbf16> to vector<16x64xbf16>
    %6 = vector.extract_strided_slice %4 {offsets = [1, 0], sizes = [16, 64], strides = [1, 1]} : vector<26x64xbf16> to vector<16x64xbf16>
    %7 = vector.extract_strided_slice %4 {offsets = [2, 0], sizes = [16, 64], strides = [1, 1]} : vector<26x64xbf16> to vector<16x64xbf16>
    %8 = vector.extract_strided_slice %4 {offsets = [3, 0], sizes = [16, 64], strides = [1, 1]} : vector<26x64xbf16> to vector<16x64xbf16>
    %9 = vector.extract_strided_slice %4 {offsets = [4, 0], sizes = [16, 64], strides = [1, 1]} : vector<26x64xbf16> to vector<16x64xbf16>
    %10 = vector.extract_strided_slice %4 {offsets = [5, 0], sizes = [16, 64], strides = [1, 1]} : vector<26x64xbf16> to vector<16x64xbf16>
    %11 = vector.extract_strided_slice %4 {offsets = [6, 0], sizes = [16, 64], strides = [1, 1]} : vector<26x64xbf16> to vector<16x64xbf16>
    %12 = vector.extract_strided_slice %4 {offsets = [7, 0], sizes = [16, 64], strides = [1, 1]} : vector<26x64xbf16> to vector<16x64xbf16>
    %13 = vector.extract_strided_slice %4 {offsets = [8, 0], sizes = [16, 64], strides = [1, 1]} : vector<26x64xbf16> to vector<16x64xbf16>
    %14 = vector.extract_strided_slice %4 {offsets = [9, 0], sizes = [16, 64], strides = [1, 1]} : vector<26x64xbf16> to vector<16x64xbf16>
    %15 = vector.extract_strided_slice %4 {offsets = [10, 0], sizes = [16, 64], strides = [1, 1]} : vector<26x64xbf16> to vector<16x64xbf16>
    %16 = tpu.concatenate %5, %6, %7, %8, %9, %10, %11, %12, %13, %14, %15 in 1 : vector<16x64xbf16>, vector<16x64xbf16>, vector<16x64xbf16>, vector<16x64xbf16>, vector<16x64xbf16>, vector<16x64xbf16>, vector<16x64xbf16>, vector<16x64xbf16>, vector<16x64xbf16>, vector<16x64xbf16>, vector<16x64xbf16> -> vector<16x704xbf16>
    %c0_1 = arith.constant 0 : index
    %c0_2 = arith.constant 0 : index
    %17 = vector.load %arg4[%c0_1, %c0_2] : memref<704x64xbf16, #tpu.memory_space<vmem>>, vector<704x64xbf16>
    %cst = arith.constant dense<0.000000e+00> : vector<16x64xf32>
    %18 = tpu.matmul %16, %17, %cst {dimension_numbers = #tpu.dot_dimension_numbers<[1], [0], [0], [1], [0, 0, 1, 1], [], []>} : vector<16x704xbf16>, vector<704x64xbf16>, vector<16x64xf32> -> vector<16x64xf32>
    %c0_3 = arith.constant 0 : index
    %c0_4 = arith.constant 0 : index
    %19 = vector.load %arg5[%c0_3, %c0_4] : memref<1x64xf32, #tpu.memory_space<vmem>>, vector<1x64xf32>
    %20 = vector.broadcast %19 : vector<1x64xf32> to vector<16x64xf32>
    %21 = arith.addf %18, %20 : vector<16x64xf32>
    %22 = arith.truncf %21 : vector<16x64xf32> to vector<16x64xbf16>
    %c0_5 = arith.constant 0 : index
    %c0_6 = arith.constant 0 : index
    %c0_7 = arith.constant 0 : index
    %23 = vector.load %arg6[%c0_5, %c0_6, %c0_7] : memref<1x16x64xbf16, #tpu.memory_space<vmem>>, vector<1x16x64xbf16>
    %24 = vector.shape_cast %23 : vector<1x16x64xbf16> to vector<16x64xbf16>
    %25 = vector.shape_cast %22 : vector<16x64xbf16> to vector<1x16x64xbf16>
    tpu.vector_store %arg6[%c0_5, %c0_6, %c0_7], %25 {strides = array<i32>} : memref<1x16x64xbf16, #tpu.memory_space<vmem>>, vector<1x16x64xbf16>,
    %c0_i32 = arith.constant 0 : i32
    %26 = arith.cmpi eq, %arg2, %c0_i32 : i32
    %27 = arith.extui %26 : i1 to i32
    %c0_i32_8 = arith.constant 0 : i32
    %28 = arith.cmpi ne, %27, %c0_i32_8 : i32
    scf.if %28 {
      %cst_16 = arith.constant 0.000000e+00 : f32
      %37 = vector.broadcast %cst_16 : f32 to vector<1x64xf32>
      %c0_17 = arith.constant 0 : index
      %c0_18 = arith.constant 0 : index
      %c0_19 = arith.constant 0 : index
      %38 = vector.load %arg7[%c0_17, %c0_18, %c0_19] : memref<1x1x64xf32, #tpu.memory_space<vmem>>, vector<1x1x64xf32>
      %39 = vector.shape_cast %38 : vector<1x1x64xf32> to vector<1x64xf32>
      %40 = vector.shape_cast %37 : vector<1x64xf32> to vector<1x1x64xf32>
      tpu.vector_store %arg7[%c0_17, %c0_18, %c0_19], %40 {strides = array<i32>} : memref<1x1x64xf32, #tpu.memory_space<vmem>>, vector<1x1x64xf32>,
    } else {
    }
    %c0_9 = arith.constant 0 : index
    %c0_10 = arith.constant 0 : index
    %c0_11 = arith.constant 0 : index
    %29 = vector.load %arg7[%c0_9, %c0_10, %c0_11] : memref<1x1x64xf32, #tpu.memory_space<vmem>>, vector<1x1x64xf32>
    %30 = vector.shape_cast %29 : vector<1x1x64xf32> to vector<1x64xf32>
    %cst_12 = arith.constant dense<0.000000e+00> : vector<64xf32>
    %31 = vector.multi_reduction <add>, %21, %cst_12 [0] : vector<16x64xf32> to vector<64xf32>
    %32 = vector.shape_cast %31 : vector<64xf32> to vector<1x64xf32>
    %33 = arith.addf %30, %32 : vector<1x64xf32>
    %c0_13 = arith.constant 0 : index
    %c0_14 = arith.constant 0 : index
    %c0_15 = arith.constant 0 : index
    %34 = vector.load %arg7[%c0_13, %c0_14, %c0_15] : memref<1x1x64xf32, #tpu.memory_space<vmem>>, vector<1x1x64xf32>
    %35 = vector.shape_cast %34 : vector<1x1x64xf32> to vector<1x64xf32>
    %36 = vector.shape_cast %33 : vector<1x64xf32> to vector<1x1x64xf32>
    tpu.vector_store %arg7[%c0_13, %c0_14, %c0_15], %36 {strides = array<i32>} : memref<1x1x64xf32, #tpu.memory_space<vmem>>, vector<1x1x64xf32>,
    return
  }
  func.func @transform_0(%arg0: i32, %arg1: i32, %arg2: i32) -> (i32, i32, i32) {
    %c0_i32 = arith.constant 0 : i32
    %c0_i32_0 = arith.constant 0 : i32
    %c0_i32_1 = arith.constant 0 : i32
    return %arg0, %c0_i32, %c0_i32_0 : i32, i32, i32
  }
  func.func @transform_1(%arg0: i32, %arg1: i32, %arg2: i32) -> (i32, i32) {
    %c0_i32 = arith.constant 0 : i32
    %c0_i32_0 = arith.constant 0 : i32
    return %c0_i32, %arg1 : i32, i32
  }
  func.func @transform_2(%arg0: i32, %arg1: i32, %arg2: i32) -> (i32, i32) {
    %c0_i32 = arith.constant 0 : i32
    %c0_i32_0 = arith.constant 0 : i32
    return %c0_i32, %arg1 : i32, i32
  }
  func.func @transform_3(%arg0: i32, %arg1: i32, %arg2: i32) -> (i32, i32, i32) {
    %c0_i32 = arith.constant 0 : i32
    return %arg0, %arg2, %arg1 : i32, i32, i32
  }
  func.func @transform_4(%arg0: i32, %arg1: i32, %arg2: i32) -> (i32, i32, i32) {
    %c0_i32 = arith.constant 0 : i32
    %c0_i32_0 = arith.constant 0 : i32
    return %arg0, %c0_i32, %arg1 : i32, i32, i32
  }
}

module attributes {stable_mosaic.version = 11 : i64} {
  func.func @_combine_kernel(%arg0: i32, %arg1: i32, %arg2: i32, %arg3: memref<1x16x64xbf16, #tpu.memory_space<vmem>>, %arg4: memref<1x1x64xf32, #tpu.memory_space<vmem>>, %arg5: memref<1x16x32xbf16, #tpu.memory_space<vmem>>, %arg6: memref<32x64xbf16, #tpu.memory_space<vmem>>, %arg7: memref<1x64xf32, #tpu.memory_space<vmem>>, %arg8: memref<1x16x64xf32, #tpu.memory_space<vmem>>) attributes {dimension_semantics = [#tpu.dimension_semantics<parallel>, #tpu.dimension_semantics<parallel>, #tpu.dimension_semantics<parallel>], iteration_bounds = array<i64: 2, 1, 2>, scalar_prefetch = 0 : i64, scratch_operands = 0 : i64, tpu.core_type = #tpu.core_type<tc>, window_params = [{transform_indices = @transform_0, window_bounds = array<i64: 1, 16, 64>}, {transform_indices = @transform_1, window_bounds = array<i64: 1, 1, 64>}, {transform_indices = @transform_2, window_bounds = array<i64: 1, 16, 32>}, {transform_indices = @transform_3, window_bounds = array<i64: 32, 64>}, {transform_indices = @transform_4, window_bounds = array<i64: 1, 64>}, {transform_indices = @transform_5, window_bounds = array<i64: 1, 16, 64>}]} {
    %c0 = arith.constant 0 : index
    %c0_0 = arith.constant 0 : index
    %c0_1 = arith.constant 0 : index
    %0 = vector.load %arg5[%c0, %c0_0, %c0_1] : memref<1x16x32xbf16, #tpu.memory_space<vmem>>, vector<1x16x32xbf16>
    %1 = vector.shape_cast %0 : vector<1x16x32xbf16> to vector<16x32xbf16>
    %c0_2 = arith.constant 0 : index
    %c0_3 = arith.constant 0 : index
    %2 = vector.load %arg6[%c0_2, %c0_3] : memref<32x64xbf16, #tpu.memory_space<vmem>>, vector<32x64xbf16>
    %cst = arith.constant dense<0.000000e+00> : vector<16x64xf32>
    %3 = tpu.matmul %1, %2, %cst {dimension_numbers = #tpu.dot_dimension_numbers<[1], [0], [0], [1], [0, 0, 1, 1], [], []>} : vector<16x32xbf16>, vector<32x64xbf16>, vector<16x64xf32> -> vector<16x64xf32>
    %c0_4 = arith.constant 0 : index
    %c0_5 = arith.constant 0 : index
    %4 = vector.load %arg7[%c0_4, %c0_5] : memref<1x64xf32, #tpu.memory_space<vmem>>, vector<1x64xf32>
    %5 = vector.broadcast %4 : vector<1x64xf32> to vector<16x64xf32>
    %6 = arith.addf %3, %5 : vector<16x64xf32>
    %c0_6 = arith.constant 0 : index
    %c0_7 = arith.constant 0 : index
    %c0_8 = arith.constant 0 : index
    %7 = vector.load %arg3[%c0_6, %c0_7, %c0_8] : memref<1x16x64xbf16, #tpu.memory_space<vmem>>, vector<1x16x64xbf16>
    %8 = vector.shape_cast %7 : vector<1x16x64xbf16> to vector<16x64xbf16>
    %9 = arith.extf %8 : vector<16x64xbf16> to vector<16x64xf32>
    %c0_9 = arith.constant 0 : index
    %c0_10 = arith.constant 0 : index
    %c0_11 = arith.constant 0 : index
    %10 = vector.load %arg4[%c0_9, %c0_10, %c0_11] : memref<1x1x64xf32, #tpu.memory_space<vmem>>, vector<1x1x64xf32>
    %11 = vector.shape_cast %10 : vector<1x1x64xf32> to vector<1x64xf32>
    %12 = vector.broadcast %11 : vector<1x64xf32> to vector<16x64xf32>
    %13 = arith.mulf %9, %12 : vector<16x64xf32>
    %14 = arith.addf %13, %6 : vector<16x64xf32>
    %cst_12 = arith.constant 0.000000e+00 : f32
    %15 = vector.broadcast %cst_12 : f32 to vector<16x64xf32>
    %16 = arith.maximumf %14, %15 : vector<16x64xf32>
    %c0_13 = arith.constant 0 : index
    %c0_14 = arith.constant 0 : index
    %c0_15 = arith.constant 0 : index
    %17 = vector.load %arg8[%c0_13, %c0_14, %c0_15] : memref<1x16x64xf32, #tpu.memory_space<vmem>>, vector<1x16x64xf32>
    %18 = vector.shape_cast %17 : vector<1x16x64xf32> to vector<16x64xf32>
    %19 = vector.shape_cast %16 : vector<16x64xf32> to vector<1x16x64xf32>
    tpu.vector_store %arg8[%c0_13, %c0_14, %c0_15], %19 {strides = array<i32>} : memref<1x16x64xf32, #tpu.memory_space<vmem>>, vector<1x16x64xf32>,
    return
  }
  func.func @transform_0(%arg0: i32, %arg1: i32, %arg2: i32) -> (i32, i32, i32) {
    %c0_i32 = arith.constant 0 : i32
    return %arg0, %arg2, %arg1 : i32, i32, i32
  }
  func.func @transform_1(%arg0: i32, %arg1: i32, %arg2: i32) -> (i32, i32, i32) {
    %c0_i32 = arith.constant 0 : i32
    %c0_i32_0 = arith.constant 0 : i32
    return %arg0, %c0_i32, %arg1 : i32, i32, i32
  }
  func.func @transform_2(%arg0: i32, %arg1: i32, %arg2: i32) -> (i32, i32, i32) {
    %c0_i32 = arith.constant 0 : i32
    %c0_i32_0 = arith.constant 0 : i32
    return %arg0, %arg2, %c0_i32 : i32, i32, i32
  }
  func.func @transform_3(%arg0: i32, %arg1: i32, %arg2: i32) -> (i32, i32) {
    %c0_i32 = arith.constant 0 : i32
    %c0_i32_0 = arith.constant 0 : i32
    return %c0_i32, %arg1 : i32, i32
  }
  func.func @transform_4(%arg0: i32, %arg1: i32, %arg2: i32) -> (i32, i32) {
    %c0_i32 = arith.constant 0 : i32
    %c0_i32_0 = arith.constant 0 : i32
    return %c0_i32, %arg1 : i32, i32
  }
  func.func @transform_5(%arg0: i32, %arg1: i32, %arg2: i32) -> (i32, i32, i32) {
    %c0_i32 = arith.constant 0 : i32
    return %arg0, %arg2, %arg1 : i32, i32, i32
  }
}

</mosaic_0001>

<llo_original>
// kernel: citrinet_block_forward.6
$region0: #{citrinet_block_forward.6}
  #allocation0 [shape = 'u32[]', space=smem, size = 0x4, offset = 0x4, fixed_abs, tag = 'smem constant byte address 0x4 - core index']
  #allocation1 [shape = 'u32[144,128]{1,0:T(1,128)}', space=vmem, size = 0x12000, scoped, tag = 'internal scratch']
  %s0 = inlined_call_operand.vmem [shape: bf16[2,42,32], index: 0, kind: input, shape index: {}]
  %s1 = inlined_call_operand.vmem [shape: bf16[352,64], index: 1, kind: input, shape index: {}]
  %s2 = inlined_call_operand.hbm [shape: f32[1,64], index: 2, kind: input, shape index: {}]
  %s3 = inlined_call_operand.vmem [shape: bf16[2,32,64], index: 3, kind: output, shape index: {}]
  %s4 = sld [smem:[#allocation0]]
  $region49: #{citrinet_block_forward.6} parent=0
    _
  %s6 = ssub.s32 1, %s4
  %s7 = scalar_select 0, %s6, %s4
  $region1: #{citrinet_block_forward.6} parent=0
    #allocation2 [shape = 'u8[512]{0}', space=vmem, size = 0x400, scoped, tag = 'input window, operand 2, single buffered']
    #allocation3 [shape = 's32[2]{0}', space=sflag, size = 0x8, scoped, tag = 'scoped memory for citrinet_block_forward.6']
    %8 = vsyncpa [#allocation3], 0
    loop: start=0, step=1, limit=6
    $region2: #{citrinet_block_forward.6} parent=1 // loop_pre_header
      _
    $region3: #{citrinet_block_forward.6} parent=1 // loop_header
      %s10 = sphi 0, %s14
      %p11 = scmp.ge.s32.totalorder %s10, 6
      %s17 = sphi 0, %s36
      %s18 = sphi 0, %s32
      %s19 = sphi 0, %s28
      %s20 = sphi 0, %s17
      %s21 = sphi 0, %s18
      %s22 = sphi 0, %s19
      %s23 = sphi 0, %s20
      %s24 = sphi 0, %s21
      %s25 = sphi 0, %s22
      %s39 = sphi 0, %s41
      %s42 = sphi 0, %s39
      %s43 = sphi 0, %s42
      %s59 = sphi 0, %s43
      %s65 = sphi 0, %s67
      %s68 = sphi 0, %s65
      %s69 = sphi 0, %s68
      %s85 = sphi 0, %s69
      %s91 = sphi 0, %s93
      %s94 = sphi 0, %s91
      %s95 = sphi 0, %s94
      %s111 = sphi 0, %s95
      %s121 = sphi 0, %s123
      %s124 = sphi 0, %s121
      %s125 = sphi 0, %s124
      %s141 = sphi 0, %s125
    $region4: #{citrinet_block_forward.6} parent=1 // loop_header_branch
      %13 = sbr.rel (%p11) target = $region8
    $region5: #{citrinet_block_forward.6} parent=1 // loop_body
      %s15 = ssub.s32 %s10, 1
      %s16 = ssub.s32 %s10, 2
      %s26 = sadd.s32 1, %s19
      %p27 = scmp.ge.s32.totalorder %s26, 2
      %s28 = scalar_select %p27, 0, %s26
      %s29 = sadd.s32 1, %s18
      %s30 = scalar_select %p27, %s29, %s18
      %p31 = scmp.ge.s32.totalorder %s30, 1
      %s32 = scalar_select %p31, 0, %s30
      %s33 = sadd.s32 1, %s17
      %s34 = scalar_select %p31, %s33, %s17
      %p35 = scmp.ge.s32.totalorder %s34, 2
      %s36 = scalar_select %p35, 0, %s34
      %s37 = ssub.s32 %s17, %s36
      %p38 = scmp.eq.s32.totalorder %s37, 0
      %s40 = sadd.s32 %s39, 1
      %s41 = scalar_select %p38, %s39, %s40
      %p44 = pneg %p38
      %p45 = scmp.eq.s32.totalorder %s10, 3
      %p46 = por %p44, %p45
      %p47 = scmp.ne.s32.totalorder %s39, %s42
      %p48 = scmp.eq.s32.totalorder %s10, 0
      %p49 = por %p47, %p48
      %p50 = scmp.ne.s32.totalorder %s39, %s42
      %p51 = scmp.eq.s32.totalorder %s15, 3
      %p52 = por %p50, %p51
      %p53 = scmp.ne.s32.totalorder %s42, %s43
      %p54 = scmp.eq.s32.totalorder %s15, 0
      %p55 = por %p53, %p54
      %p56 = scmp.ne.s32.totalorder %s42, %s43
      %p57 = scmp.eq.s32.totalorder %s16, 3
      %p58 = por %p56, %p57
      %p60 = scmp.ne.s32.totalorder %s43, %s59
      %p61 = scmp.eq.s32.totalorder %s16, 0
      %p62 = por %p60, %p61
      %s63 = ssub.s32 %s18, %s32
      %p64 = scmp.eq.s32.totalorder %s63, 0
      %s66 = sadd.s32 %s65, 1
      %s67 = scalar_select %p64, %s65, %s66
      %p70 = pneg %p64
      %p71 = scmp.eq.s32.totalorder %s10, 3
      %p72 = por %p70, %p71
      %p73 = scmp.ne.s32.totalorder %s65, %s68
      %p74 = scmp.eq.s32.totalorder %s10, 0
      %p75 = por %p73, %p74
      %p76 = scmp.ne.s32.totalorder %s65, %s68
      %p77 = scmp.eq.s32.totalorder %s15, 3
      %p78 = por %p76, %p77
      %p79 = scmp.ne.s32.totalorder %s68, %s69
      %p80 = scmp.eq.s32.totalorder %s15, 0
      %p81 = por %p79, %p80
      %p82 = scmp.ne.s32.totalorder %s68, %s69
      %p83 = scmp.eq.s32.totalorder %s16, 3
      %p84 = por %p82, %p83
      %p86 = scmp.ne.s32.totalorder %s69, %s85
      %p87 = scmp.eq.s32.totalorder %s16, 0
      %p88 = por %p86, %p87
      %s89 = ssub.s32 %s18, %s32
      %p90 = scmp.eq.s32.totalorder %s89, 0
      %s92 = sadd.s32 %s91, 1
      %s93 = scalar_select %p90, %s91, %s92
      %p96 = pneg %p90
      %p97 = scmp.eq.s32.totalorder %s10, 3
      %p98 = por %p96, %p97
      %p99 = scmp.ne.s32.totalorder %s91, %s94
      %p100 = scmp.eq.s32.totalorder %s10, 0
      %p101 = por %p99, %p100
      %p102 = scmp.ne.s32.totalorder %s91, %s94
      %p103 = scmp.eq.s32.totalorder %s15, 3
      %p104 = por %p102, %p103
      %p105 = scmp.ne.s32.totalorder %s94, %s95
      %p106 = scmp.eq.s32.totalorder %s15, 0
      %p107 = por %p105, %p106
      %p108 = scmp.ne.s32.totalorder %s94, %s95
      %p109 = scmp.eq.s32.totalorder %s16, 3
      %p110 = por %p108, %p109
      %p112 = scmp.ne.s32.totalorder %s95, %s111
      %p113 = scmp.eq.s32.totalorder %s16, 0
      %p114 = por %p112, %p113
      %s115 = ssub.s32 %s17, %s36
      %s116 = ssub.s32 %s19, %s28
      %s117 = sor.u32 %s115, %s116
      %s118 = ssub.s32 %s18, %s32
      %s119 = sor.u32 %s117, %s118
      %p120 = scmp.eq.s32.totalorder %s119, 0
      %s122 = sadd.s32 %s121, 1
      %s123 = scalar_select %p120, %s121, %s122
      %p126 = pneg %p120
      %p127 = scmp.eq.s32.totalorder %s10, 3
      %p128 = por %p126, %p127
      %p129 = scmp.ne.s32.totalorder %s121, %s124
      %p130 = scmp.eq.s32.totalorder %s10, 0
      %p131 = por %p129, %p130
      %p132 = scmp.ne.s32.totalorder %s121, %s124
      %p133 = scmp.eq.s32.totalorder %s15, 3
      %p134 = por %p132, %p133
      %p135 = scmp.ne.s32.totalorder %s124, %s125
      %p136 = scmp.eq.s32.totalorder %s15, 0
      %p137 = por %p135, %p136
      %p138 = scmp.ne.s32.totalorder %s124, %s125
      %p139 = scmp.eq.s32.totalorder %s16, 3
      %p140 = por %p138, %p139
      %p142 = scmp.ne.s32.totalorder %s125, %s141
      %p143 = scmp.eq.s32.totalorder %s16, 0
      %p144 = por %p142, %p143
      %p145 = scmp.le.s32.totalorder 1, %s10
      %p146 = scmp.lt.s32.totalorder %s10, 5
      %p147 = pnand %p145, %p146
      %p148 = pneg %p147
      // Predicated region
      $region9: #{citrinet_block_forward.6} parent=5 // pred_check
        _
      $region10: #{citrinet_block_forward.6} parent=5 // pred_check_branch
        %150 = sbr.rel (%p147) target = $region12
      $region11: #{citrinet_block_forward.6} parent=5 // pred_region
        %s151 = ssub.s32 %s10, 1
        // Predicated region
        $region13: #{citrinet_block_forward.6} parent=11 // pred_check
          %p152 = pneg %p81
        $region14: #{citrinet_block_forward.6} parent=11 // pred_check_branch
          %154 = sbr.rel (%p152) target = $region16
        $region15: #{citrinet_block_forward.6} parent=11 // pred_region
          %p155 = scmp.lt.s32.totalorder %s21, 0
          %s156 = scalar_select %p155, %s21, 0
          %s157 = smul.addr %s156, 4
          %s158 = scalar_lea.vmem %s1, %s157
        $region16: #{citrinet_block_forward.6} parent=11 // pred_fallthru
          _
        // Predicated region
        $region17: #{citrinet_block_forward.6} parent=11 // pred_check
          %p159 = pneg %p107
        $region18: #{citrinet_block_forward.6} parent=11 // pred_check_branch
          %161 = sbr.rel (%p159) target = $region20
        $region19: #{citrinet_block_forward.6} parent=11 // pred_region
          %s163 = ssub.s32 16, 16
          %164 = vsyncadd [#allocation3], %s163
          %s165 = smul.addr %s21, 16
          %s166 = scalar_lea.hbm %s2, %s165
          %s168 = sshll.u32 [#allocation2], 4
          %s169 = int_to_ptr.vmem [resolvable:$true] %s168
          %171 = dma.hbm_to_vmem [thread:$0]  %s166, 16, %s169, [#allocation3]
        $region20: #{citrinet_block_forward.6} parent=11 // pred_fallthru
          _
      $region12: #{citrinet_block_forward.6} parent=5 // pred_fallthru
        _
      %p172 = scmp.lt.s32.totalorder %s10, 4
      // Predicated region
      $region21: #{citrinet_block_forward.6} parent=5 // pred_check
        %p173 = pneg %p172
      $region22: #{citrinet_block_forward.6} parent=5 // pred_check_branch
        %175 = sbr.rel (%p173) target = $region24
      $region23: #{citrinet_block_forward.6} parent=5 // pred_region
        // Predicated region
        $region25: #{citrinet_block_forward.6} parent=23 // pred_check
          %p176 = pneg %p49
        $region26: #{citrinet_block_forward.6} parent=23 // pred_check_branch
          %178 = sbr.rel (%p176) target = $region28
        $region27: #{citrinet_block_forward.6} parent=23 // pred_region
          %p179 = scmp.lt.s32.totalorder %s17, 1
          %s180 = scalar_select %p179, %s17, 1
          %s181 = smul.addr %s180, 6
          %s182 = smul.addr %s181, 4
          %s183 = scalar_lea.vmem %s0, %s182
        $region28: #{citrinet_block_forward.6} parent=23 // pred_fallthru
          _
      $region24: #{citrinet_block_forward.6} parent=5 // pred_fallthru
        _
      %p184 = scmp.le.s32.totalorder 1, %s10
      %p185 = scmp.lt.s32.totalorder %s10, 5
      %p186 = pnand %p184, %p185
      %p187 = pneg %p186
      // Predicated region
      $region29: #{citrinet_block_forward.6} parent=5 // pred_check
        _
      $region30: #{citrinet_block_forward.6} parent=5 // pred_check_branch
        %189 = sbr.rel (%p186) target = $region32
      $region31: #{citrinet_block_forward.6} parent=5 // pred_region
        %s190 = ssub.s32 %s10, 1
        // Predicated region
        $region33: #{citrinet_block_forward.6} parent=31 // pred_check
          %p191 = pneg %p107
        $region34: #{citrinet_block_forward.6} parent=31 // pred_check_branch
          %193 = sbr.rel (%p191) target = $region36
        $region35: #{citrinet_block_forward.6} parent=31 // pred_region
          %194 = dma.done [#allocation3], 16
        $region36: #{citrinet_block_forward.6} parent=31 // pred_fallthru
          _
        %p195 = scmp.lt.s32.totalorder %s20, 1
        %s196 = scalar_select %p195, %s20, 1
        %s197 = smul.addr %s196, 6
        %s198 = smul.addr %s197, 4
        %s199 = scalar_lea.vmem %s0, %s198
        %p200 = pneg %p55
        %p201 = pneg %p52
        %p202 = scmp.lt.s32.totalorder %s21, 0
        %s203 = scalar_select %p202, %s21, 0
        %s204 = smul.addr %s203, 4
        %s205 = scalar_lea.vmem %s1, %s204
        %p206 = pneg %p81
        %p207 = pneg %p78
        %p208 = pneg %p107
        %p209 = pneg %p104
        %p210 = pneg %p137
        %p211 = pneg %p134
        %s212 = smul.u32 2, %s22
        %p213 = scmp.lt.s32.totalorder %s20, 1
        %s214 = scalar_select %p213, %s20, 1
        %p215 = scmp.lt.s32.totalorder %s212, 3
        %s216 = scalar_select %p215, %s212, 3
        %p217 = scmp.lt.s32.totalorder %s21, 0
        %s218 = scalar_select %p217, %s21, 0
        %s219 = sadd.s32 %s218, %s216
        %s220 = smul.addr %s214, 4
        %s221 = sadd.s32 %s219, %s220
        %s222 = smul.addr %s221, 4
        %s223 = scalar_lea.vmem %s3, %s222
        %p224 = scmp.lt.s32.totalorder %s20, 1
        %s225 = scalar_select %p224, %s20, 1
        %s226 = smul.addr %s225, 6
        %s227 = smul.addr %s226, 4
        %s228 = scalar_lea.vmem %s0, %s227
        %p229 = scmp.lt.s32.totalorder %s21, 0
        %s230 = scalar_select %p229, %s21, 0
        %s231 = smul.addr %s230, 4
        %s232 = scalar_lea.vmem %s1, %s231
        %s233 = smul.u32 2, %s22
        %p234 = scmp.lt.s32.totalorder %s20, 1
        %s235 = scalar_select %p234, %s20, 1
        %p236 = scmp.lt.s32.totalorder %s233, 3
        %s237 = scalar_select %p236, %s233, 3
        %p238 = scmp.lt.s32.totalorder %s21, 0
        %s239 = scalar_select %p238, %s21, 0
        %s240 = sadd.s32 %s239, %s237
        %s241 = smul.addr %s235, 4
        %s242 = sadd.s32 %s240, %s241
        %s243 = smul.addr %s242, 4
        %s244 = scalar_lea.vmem %s3, %s243
        %s245 = smul.u32 2, %s22
        %s247 = smul.u32 %s22, 16
        %s248 = sshra.s32 %s247, 3
        %s249 = sand.u32 %s247, 7
        %s250 = smul.addr %s248, 4
        %s251 = scalar_lea.vmem %s228, %s250
        %v252 = vld [vmem:[%s251] sm:$0xf]
        %v253 = vld [vmem:[%s251 + $0x4] sm:$0xf]
        %v254 = vld [vmem:[%s251 + $0x8] sm:$0xf]
        %v255 = vld [vmem:[%s251 + $0xc] sm:$0x1]
        %v258 = vunpack.c.l.b16 %v252
        %v259 = vunpack.c.l.b16 %v253
        %v260 = vpack.c.b16 %v259, %v258
        %v262 = vunpack.c.l.b16 %v254
        %v263 = vpack.c.b16 %v262, %v262
        %vm264 = vsmask.f32 7424
        %v266 = vshrl.u32 %v260, 16
        %v268 = vshll.u32 %v260, 16
        %v270 = vrot.slane %v268, 1
        %v271 = vor.u32 %v266, %v270
        %v273 = vshll.u32 %v263, 16
        %v275 = vrot.slane %v273, 1
        %v276 = vsel %vm264, %v271, %v275
        %277 = vrot.lane.b32.xlu0 %v276, 32
        %v278 = vpop.permute.xlu0 %277
        %vm279 = vcmask 1046528
        %v280 = vrot.slane %v260, 1
        %v281 = vrot.slane %v263, 1
        %v282 = vsel %vm279, %v280, %v281
        %283 = vrot.lane.b32.xlu0 %v282, 64
        %v284 = vpop.permute.xlu0 %283
        %vm285 = vsmask.f32 6400
        %v286 = vrot.slane %v266, 1
        %v287 = vrot.slane %v268, 2
        %v288 = vor.u32 %v286, %v287
        %v289 = vshrl.u32 %v263, 16
        %v291 = vrot.slane %v289, 1
        %v292 = vrot.slane %v273, 2
        %v293 = vor.u32 %v291, %v292
        %v294 = vsel %vm285, %v288, %v293
        %295 = vrot.lane.b32.xlu0 %v294, 96
        %v296 = vpop.permute.xlu0 %295
        %vm297 = vcmask 1045504
        %v298 = vrot.slane %v260, 2
        %v299 = vrot.slane %v263, 2
        %v300 = vsel %vm297, %v298, %v299
        %vm301 = vsmask.f32 5376
        %v302 = vrot.slane %v266, 2
        %v303 = vrot.slane %v268, 3
        %v304 = vor.u32 %v302, %v303
        %v305 = vrot.slane %v289, 2
        %v306 = vrot.slane %v273, 3
        %v307 = vor.u32 %v305, %v306
        %v308 = vsel %vm301, %v304, %v307
        %309 = vrot.lane.b32.xlu0 %v308, 32
        %v310 = vpop.permute.xlu0 %309
        %vm311 = vcmask 1044480
        %v312 = vrot.slane %v260, 3
        %v313 = vrot.slane %v263, 3
        %v314 = vsel %vm311, %v312, %v313
        %315 = vrot.lane.b32.xlu0 %v314, 64
        %v316 = vpop.permute.xlu0 %315
        %vm317 = vsmask.f32 4352
        %v318 = vrot.slane %v266, 3
        %v319 = vrot.slane %v268, 4
        %v320 = vor.u32 %v318, %v319
        %v321 = vrot.slane %v289, 3
        %v322 = vrot.slane %v273, 4
        %v323 = vor.u32 %v321, %v322
        %v324 = vsel %vm317, %v320, %v323
        %325 = vrot.lane.b32.xlu0 %v324, 96
        %v326 = vpop.permute.xlu0 %325
        %v327 = vpack.c.b16 %v262, %v259
        %v329 = vunpack.c.l.b16 %v255
        %v330 = vpack.c.b16 %v329, %v329
        %v332 = vshrl.u32 %v327, 16
        %v334 = vshll.u32 %v327, 16
        %v336 = vrot.slane %v334, 1
        %v337 = vor.u32 %v332, %v336
        %v339 = vshll.u32 %v330, 16
        %v341 = vrot.slane %v339, 1
        %v342 = vsel %vm264, %v337, %v341
        %343 = vrot.lane.b32.xlu0 %v342, 32
        %v344 = vpop.permute.xlu0 %343
        %v345 = vrot.slane %v327, 1
        %v346 = vrot.slane %v330, 1
        %v347 = vsel %vm279, %v345, %v346
        %348 = vrot.lane.b32.xlu0 %v347, 64
        %v349 = vpop.permute.xlu0 %348
        %vm350 = vcmask 261120
        %v352 = vsel %vm350, %v260, %v278
        %vm353 = vcmask 523264
        %v355 = vsel %vm353, %v352, %v284
        %vm356 = vcmask 785408
        %v358 = vsel %vm356, %v355, %v296
        %v362 = vsel %vm350, %v300, %v310
        %v364 = vsel %vm353, %v362, %v316
        %v366 = vsel %vm356, %v364, %v326
        %v369 = vsel %vm350, %v327, %v344
        %v371 = vsel %vm353, %v369, %v349
        %v372 = vld [vmem:[%s232] sm:$0xf]
        %v373 = vld [vmem:[%s232 + $0x4] sm:$0xf]
        %v374 = vld [vmem:[%s232 + $0x8] sm:$0xf]
        %v375 = vld [vmem:[%s232 + $0xc] sm:$0xf]
        %v376 = vld [vmem:[%s232 + $0x10] sm:$0xf]
        %v377 = vld [vmem:[%s232 + $0x14] sm:$0xf]
        %v378 = vld [vmem:[%s232 + $0x18] sm:$0xf]
        %v379 = vld [vmem:[%s232 + $0x1c] sm:$0xf]
        %v380 = vld [vmem:[%s232 + $0x20] sm:$0xf]
        %v381 = vld [vmem:[%s232 + $0x24] sm:$0xf]
        %v382 = vld [vmem:[%s232 + $0x28] sm:$0xf]
        %v383 = vld [vmem:[%s232 + $0x2c] sm:$0xf]
        %v384 = vld [vmem:[%s232 + $0x30] sm:$0xf]
        %v385 = vld [vmem:[%s232 + $0x34] sm:$0xf]
        %v386 = vld [vmem:[%s232 + $0x38] sm:$0xf]
        %v387 = vld [vmem:[%s232 + $0x3c] sm:$0xf]
        %v388 = vld [vmem:[%s232 + $0x40] sm:$0xf]
        %v389 = vld [vmem:[%s232 + $0x44] sm:$0xf]
        %v390 = vld [vmem:[%s232 + $0x48] sm:$0xf]
        %v391 = vld [vmem:[%s232 + $0x4c] sm:$0xf]
        %v392 = vld [vmem:[%s232 + $0x50] sm:$0xf]
        %v393 = vld [vmem:[%s232 + $0x54] sm:$0xf]
        %v394 = vld [vmem:[%s232 + $0x58] sm:$0xf]
        %v395 = vld [vmem:[%s232 + $0x5c] sm:$0xf]
        %v396 = vld [vmem:[%s232 + $0x60] sm:$0xf]
        %v397 = vld [vmem:[%s232 + $0x64] sm:$0xf]
        %v398 = vld [vmem:[%s232 + $0x68] sm:$0xf]
        %v399 = vld [vmem:[%s232 + $0x6c] sm:$0xf]
        %v400 = vld [vmem:[%s232 + $0x70] sm:$0xf]
        %v401 = vld [vmem:[%s232 + $0x74] sm:$0xf]
        %v402 = vld [vmem:[%s232 + $0x78] sm:$0xf]
        %v403 = vld [vmem:[%s232 + $0x7c] sm:$0xf]
        %v404 = vld [vmem:[%s232 + $0x80] sm:$0xf]
        %v405 = vld [vmem:[%s232 + $0x84] sm:$0xf]
        %v406 = vld [vmem:[%s232 + $0x88] sm:$0xf]
        %v407 = vld [vmem:[%s232 + $0x8c] sm:$0xf]
        %v408 = vld [vmem:[%s232 + $0x90] sm:$0xf]
        %v409 = vld [vmem:[%s232 + $0x94] sm:$0xf]
        %v410 = vld [vmem:[%s232 + $0x98] sm:$0xf]
        %v411 = vld [vmem:[%s232 + $0x9c] sm:$0xf]
        %v412 = vld [vmem:[%s232 + $0xa0] sm:$0xf]
        %v413 = vld [vmem:[%s232 + $0xa4] sm:$0xf]
        %v414 = vld [vmem:[%s232 + $0xa8] sm:$0xf]
        %v415 = vld [vmem:[%s232 + $0xac] sm:$0xf]
        %v416 = vld [vmem:[#allocation2] sm:$0x1]
        %v418 = vlaneseq
        %v419 = vshrl.u32 %v418, 7
        %v420 = vsub.s32 0, %v419
        %v421 = vrot.slane %v416, %v420
        %v467 = vunpack.c.l.b16 %v372
        %v468 = vunpack.c.l.b16 %v373
        %v469 = vunpack.c.l.b16 %v374
        %v470 = vunpack.c.l.b16 %v375
        %v471 = vunpack.c.l.b16 %v376
        %v472 = vunpack.c.l.b16 %v377
        %v473 = vunpack.c.l.b16 %v378
        %v474 = vunpack.c.l.b16 %v379
        %v475 = vunpack.c.l.b16 %v380
        %v476 = vunpack.c.l.b16 %v381
        %v477 = vunpack.c.l.b16 %v382
        %v478 = vunpack.c.l.b16 %v383
        %v479 = vunpack.c.l.b16 %v384
        %v480 = vunpack.c.l.b16 %v385
        %v481 = vunpack.c.l.b16 %v386
        %v482 = vunpack.c.l.b16 %v387
        %v483 = vunpack.c.l.b16 %v388
        %v484 = vunpack.c.l.b16 %v389
        %v485 = vunpack.c.l.b16 %v390
        %v486 = vunpack.c.l.b16 %v391
        %v487 = vunpack.c.l.b16 %v392
        %v488 = vunpack.c.l.b16 %v393
        %v489 = vunpack.c.l.b16 %v394
        %v490 = vunpack.c.l.b16 %v395
        %v491 = vunpack.c.l.b16 %v396
        %v492 = vunpack.c.l.b16 %v397
        %v493 = vunpack.c.l.b16 %v398
        %v494 = vunpack.c.l.b16 %v399
        %v495 = vunpack.c.l.b16 %v400
        %v496 = vunpack.c.l.b16 %v401
        %v497 = vunpack.c.l.b16 %v402
        %v498 = vunpack.c.l.b16 %v403
        %v499 = vunpack.c.l.b16 %v404
        %v500 = vunpack.c.l.b16 %v405
        %v501 = vunpack.c.l.b16 %v406
        %v502 = vunpack.c.l.b16 %v407
        %v503 = vunpack.c.l.b16 %v408
        %v504 = vunpack.c.l.b16 %v409
        %v505 = vunpack.c.l.b16 %v410
        %v506 = vunpack.c.l.b16 %v411
        %v507 = vunpack.c.l.b16 %v412
        %v508 = vunpack.c.l.b16 %v413
        %v509 = vunpack.c.l.b16 %v414
        %v510 = vunpack.c.l.b16 %v415
        %v511 = vpack.c.b16 %v468, %v467
        %v512 = vpack.c.b16 %v470, %v469
        %v513 = vpack.c.b16 %v472, %v471
        %v514 = vpack.c.b16 %v474, %v473
        %v515 = vpack.c.b16 %v476, %v475
        %v516 = vpack.c.b16 %v478, %v477
        %v517 = vpack.c.b16 %v480, %v479
        %v518 = vpack.c.b16 %v482, %v481
        %v519 = vpack.c.b16 %v484, %v483
        %v520 = vpack.c.b16 %v486, %v485
        %v521 = vpack.c.b16 %v488, %v487
        %v522 = vpack.c.b16 %v490, %v489
        %v523 = vpack.c.b16 %v492, %v491
        %v524 = vpack.c.b16 %v494, %v493
        %v525 = vpack.c.b16 %v496, %v495
        %v526 = vpack.c.b16 %v498, %v497
        %v527 = vpack.c.b16 %v500, %v499
        %v528 = vpack.c.b16 %v502, %v501
        %v529 = vpack.c.b16 %v504, %v503
        %v530 = vpack.c.b16 %v506, %v505
        %v531 = vpack.c.b16 %v508, %v507
        %v532 = vpack.c.b16 %v510, %v509
        %v555 = vsel %vm356, %v371, 0
        %557 = vmatprep.subr.bf16.mxu0 0
        %558 = vmatpush1.bf16.msra.mxu0 %v518
        %559 = vmatprep.subr.bf16.mxu0 0
        %560 = vmatpush1.bf16.msra.mxu0 %v517
        %561 = vmatprep.subr.bf16.mxu0 0
        %562 = vmatpush1.bf16.msra.mxu0 %v516
        %563 = vmatprep.subr.bf16.mxu0 0
        %564 = vmatpush1.bf16.msra.mxu0 %v515
        %565 = vmatprep.subr.bf16.mxu0 0
        %566 = vmatpush1.bf16.msra.mxu0 %v514
        %567 = vmatprep.subr.bf16.mxu0 0
        %568 = vmatpush1.bf16.msra.mxu0 %v513
        %569 = vmatprep.subr.bf16.mxu0 0
        %570 = vmatpush1.bf16.msra.mxu0 %v512
        %571 = vmatprep.subr.bf16.mxu0 0
        %572 = vmatpush1.bf16.msra.mxu0 %v511
        %573 = vmatprep.subr.bf16.mxu0 0
        %574 = vmatpush2.bf16.msra.mxu0 %v526
        %575 = vmatprep.subr.bf16.mxu0 0
        %576 = vmatpush2.bf16.msra.mxu0 %v525
        %577 = vmatprep.subr.bf16.mxu0 0
        %578 = vmatpush2.bf16.msra.mxu0 %v524
        %579 = vmatprep.subr.bf16.mxu0 0
        %580 = vmatpush2.bf16.msra.mxu0 %v523
        %581 = vmatprep.subr.bf16.mxu0 0
        %582 = vmatpush2.bf16.msra.mxu0 %v522
        %583 = vmatprep.subr.bf16.mxu0 0
        %584 = vmatpush2.bf16.msra.mxu0 %v521
        %585 = vmatprep.subr.bf16.mxu0 0
        %586 = vmatpush2.bf16.msra.mxu0 %v520
        %587 = vmatprep.subr.bf16.mxu0 0
        %588 = vmatpush2.bf16.msra.mxu0 %v519
        %589 = vmatprep.mubr.bf16.mxu0 %v366
        %590 = vmatmul.mubr.bf16.gmra.mxu0 %v358
        %v591 = vpop.f32.mrf.mxu0
        %v592 = vadd.f32 %v421, %v591
        %v593 = vpop.f32.mrf.mxu0
        %v594 = vpop.f32.mrf.mxu0
        %v595 = vadd.f32 %v421, %v594
        %v596 = vpop.f32.mrf.mxu0
        %597 = vdwg.mxu0
        %598 = vmatprep.subr.bf16.mxu0 0
        %599 = vmatpush1.bf16.msra.mxu0 0
        %600 = vmatprep.subr.bf16.mxu0 0
        %601 = vmatpush1.bf16.msra.mxu0 0
        %602 = vmatprep.subr.bf16.mxu0 0
        %603 = vmatpush1.bf16.msra.mxu0 %v532
        %604 = vmatprep.subr.bf16.mxu0 0
        %605 = vmatpush1.bf16.msra.mxu0 %v531
        %606 = vmatprep.subr.bf16.mxu0 0
        %607 = vmatpush1.bf16.msra.mxu0 %v530
        %608 = vmatprep.subr.bf16.mxu0 0
        %609 = vmatpush1.bf16.msra.mxu0 %v529
        %610 = vmatprep.subr.bf16.mxu0 0
        %611 = vmatpush1.bf16.msra.mxu0 %v528
        %612 = vmatprep.subr.bf16.mxu0 0
        %613 = vmatpush1.bf16.msra.mxu0 %v527
        %614 = vmatprep.subr.bf16.mxu0 0
        %615 = vmatpush2.bf16.msra.mxu0 0
        %616 = vmatprep.subr.bf16.mxu0 0
        %617 = vmatpush2.bf16.msra.mxu0 0
        %618 = vmatprep.subr.bf16.mxu0 0
        %619 = vmatpush2.bf16.msra.mxu0 0
        %620 = vmatprep.subr.bf16.mxu0 0
        %621 = vmatpush2.bf16.msra.mxu0 0
        %622 = vmatprep.subr.bf16.mxu0 0
        %623 = vmatpush2.bf16.msra.mxu0 0
        %624 = vmatprep.subr.bf16.mxu0 0
        %625 = vmatpush2.bf16.msra.mxu0 0
        %626 = vmatprep.subr.bf16.mxu0 0
        %627 = vmatpush2.bf16.msra.mxu0 0
        %628 = vmatprep.subr.bf16.mxu0 0
        %629 = vmatpush2.bf16.msra.mxu0 0
        %630 = vmatprep.mubr.bf16.mxu0 0
        %631 = vmatmul.mubr.bf16.gmra.mxu0 %v555
        %v632 = vpop.f32.mrf.mxu0
        %v633 = vadd.f32 %v592, %v632
        %v634 = vpop.f32.mrf.mxu0
        %v635 = vpop.f32.mrf.mxu0
        %v636 = vadd.f32 %v595, %v635
        %v637 = vpop.f32.mrf.mxu0
        %638 = vdwg.mxu0
        %v639 = vmax.f32 %v633, 0.0
        %v640 = vmax.f32 %v636, 0.0
        %v641 = vpack.c.bf16 %v640, %v639
        %v643 = vunpack.c.l.b16 %v641
        %v644 = vunpack.c.h.b16 %v641
        %v645 = vpack.c.b16 %v643, %v643
        %v646 = vpack.c.b16 %v644, %v644
        %vm649 = vcmask 519168
        %650 = vst.msk [vmem:[%s244] sm:$0xf] %vm649, %v645
        %651 = vst.msk [vmem:[%s244 + $0x4] sm:$0xf] %vm649, %v646
        %s652 = smul.u32 2, %s22
        %p653 = scmp.lt.s32.totalorder %s20, 1
        %s654 = scalar_select %p653, %s20, 1
        %p655 = scmp.lt.s32.totalorder %s652, 3
        %s656 = scalar_select %p655, %s652, 3
        %p657 = scmp.lt.s32.totalorder %s21, 0
        %s658 = scalar_select %p657, %s21, 0
        %s659 = sadd.s32 %s658, %s656
        %s660 = smul.addr %s654, 4
        %s661 = sadd.s32 %s659, %s660
        %s662 = smul.addr %s661, 4
        %s663 = scalar_lea.vmem %s3, %s662
        // Predicated region
        $region37: #{citrinet_block_forward.6} parent=31 // pred_check
          %p664 = pneg %p134
        $region38: #{citrinet_block_forward.6} parent=31 // pred_check_branch
          %666 = sbr.rel (%p664) target = $region40
        $region39: #{citrinet_block_forward.6} parent=31 // pred_region
          %s667 = smul.u32 2, %s22
        $region40: #{citrinet_block_forward.6} parent=31 // pred_fallthru
          _
      $region32: #{citrinet_block_forward.6} parent=5 // pred_fallthru
        _
      %p668 = scmp.le.s32.totalorder 2, %s10
      // Predicated region
      $region41: #{citrinet_block_forward.6} parent=5 // pred_check
        %p669 = pneg %p668
      $region42: #{citrinet_block_forward.6} parent=5 // pred_check_branch
        %671 = sbr.rel (%p669) target = $region44
      $region43: #{citrinet_block_forward.6} parent=5 // pred_region
        %s672 = ssub.s32 %s10, 2
        // Predicated region
        $region45: #{citrinet_block_forward.6} parent=43 // pred_check
          %p673 = pneg %p140
        $region46: #{citrinet_block_forward.6} parent=43 // pred_check_branch
          %675 = sbr.rel (%p673) target = $region48
        $region47: #{citrinet_block_forward.6} parent=43 // pred_region
          %s676 = smul.u32 2, %s25
          %p677 = scmp.lt.s32.totalorder %s23, 1
          %s678 = scalar_select %p677, %s23, 1
          %p679 = scmp.lt.s32.totalorder %s676, 3
          %s680 = scalar_select %p679, %s676, 3
          %p681 = scmp.lt.s32.totalorder %s24, 0
          %s682 = scalar_select %p681, %s24, 0
          %s683 = sadd.s32 %s682, %s680
          %s684 = smul.addr %s678, 4
          %s685 = sadd.s32 %s683, %s684
          %s686 = smul.addr %s685, 4
          %s687 = scalar_lea.vmem %s3, %s686
        $region48: #{citrinet_block_forward.6} parent=43 // pred_fallthru
          _
      $region44: #{citrinet_block_forward.6} parent=5 // pred_fallthru
        _
    $region6: #{citrinet_block_forward.6} parent=1 // loop_footer
      %s14 = sadd.s32 1, %s10
    $region7: #{citrinet_block_forward.6} parent=1 // loop_footer_branch
      %9 = sbr.rel target = $region3
    $region8: #{citrinet_block_forward.6} parent=1 // loop_exit
      _
    %688 = vsyncpa [#allocation3], 1
    %s689 = scalar_lea.sflag [#allocation3], 1
    %690 = vsyncpa %s689, 1

// kernel: citrinet_block_forward.11
$region0: #{citrinet_block_forward.11}
  #allocation0 [shape = 'u32[]', space=smem, size = 0x4, offset = 0x4, fixed_abs, tag = 'smem constant byte address 0x4 - core index']
  #allocation1 [shape = 'u32[144,128]{1,0:T(1,128)}', space=vmem, size = 0x12000, scoped, tag = 'internal scratch']
  %s0 = inlined_call_operand.vmem [shape: bf16[2,32,64], index: 0, kind: input, shape index: {}]
  %s1 = inlined_call_operand.vmem [shape: f32[2,1,64], index: 1, kind: input, shape index: {}]
  %s2 = inlined_call_operand.vmem [shape: bf16[2,32,32], index: 2, kind: input, shape index: {}]
  %s3 = inlined_call_operand.vmem [shape: bf16[32,64], index: 3, kind: input, shape index: {}]
  %s4 = inlined_call_operand.vmem [shape: f32[1,64], index: 4, kind: input, shape index: {}]
  %s5 = inlined_call_operand.hbm [shape: f32[2,32,64], index: 5, kind: output, shape index: {}]
  %s6 = sld [smem:[#allocation0]]
  $region53: #{citrinet_block_forward.11} parent=0
    _
  %s8 = ssub.s32 1, %s6
  %s9 = scalar_select 0, %s8, %s6
  $region1: #{citrinet_block_forward.11} parent=0
    #allocation2 [shape = 'u8[16384]{0}', space=vmem, size = 0x4000, scoped, tag = 'output window, operand 0']
    #allocation3 [shape = 's32[2]{0}', space=sflag, size = 0x8, scoped, tag = 'scoped memory for citrinet_block_forward.11']
    %10 = vsyncpa [#allocation3], 0
    %s11 = scalar_lea.sflag [#allocation3], 1
    %12 = vsyncpa %s11, 0
    loop: start=0, step=1, limit=6
    $region2: #{citrinet_block_forward.11} parent=1 // loop_pre_header
      _
    $region3: #{citrinet_block_forward.11} parent=1 // loop_header
      %s14 = sphi 0, %s18
      %p15 = scmp.ge.s32.totalorder %s14, 6
      %s21 = sphi 0, %s40
      %s22 = sphi 0, %s36
      %s23 = sphi 0, %s32
      %s24 = sphi 0, %s21
      %s25 = sphi 0, %s22
      %s26 = sphi 0, %s23
      %s27 = sphi 0, %s24
      %s28 = sphi 0, %s25
      %s29 = sphi 0, %s26
      %s47 = sphi 0, %s49
      %s50 = sphi 0, %s47
      %s51 = sphi 0, %s50
      %s67 = sphi 0, %s51
      %s75 = sphi 0, %s77
      %s78 = sphi 0, %s75
      %s79 = sphi 0, %s78
      %s95 = sphi 0, %s79
      %s103 = sphi 0, %s105
      %s106 = sphi 0, %s103
      %s107 = sphi 0, %s106
      %s123 = sphi 0, %s107
      %s129 = sphi 0, %s131
      %s132 = sphi 0, %s129
      %s133 = sphi 0, %s132
      %s149 = sphi 0, %s133
      %s155 = sphi 0, %s157
      %s158 = sphi 0, %s155
      %s159 = sphi 0, %s158
      %s175 = sphi 0, %s159
      %s185 = sphi 0, %s187
      %s188 = sphi 0, %s185
      %s189 = sphi 0, %s188
      %s205 = sphi 0, %s189
    $region4: #{citrinet_block_forward.11} parent=1 // loop_header_branch
      %17 = sbr.rel (%p15) target = $region8
    $region5: #{citrinet_block_forward.11} parent=1 // loop_body
      %s19 = ssub.s32 %s14, 1
      %s20 = ssub.s32 %s14, 2
      %s30 = sadd.s32 1, %s23
      %p31 = scmp.ge.s32.totalorder %s30, 2
      %s32 = scalar_select %p31, 0, %s30
      %s33 = sadd.s32 1, %s22
      %s34 = scalar_select %p31, %s33, %s22
      %p35 = scmp.ge.s32.totalorder %s34, 1
      %s36 = scalar_select %p35, 0, %s34
      %s37 = sadd.s32 1, %s21
      %s38 = scalar_select %p35, %s37, %s21
      %p39 = scmp.ge.s32.totalorder %s38, 2
      %s40 = scalar_select %p39, 0, %s38
      %s41 = ssub.s32 %s21, %s40
      %s42 = ssub.s32 %s23, %s32
      %s43 = sor.u32 %s41, %s42
      %s44 = ssub.s32 %s22, %s36
      %s45 = sor.u32 %s43, %s44
      %p46 = scmp.eq.s32.totalorder %s45, 0
      %s48 = sadd.s32 %s47, 1
      %s49 = scalar_select %p46, %s47, %s48
      %p52 = pneg %p46
      %p53 = scmp.eq.s32.totalorder %s14, 3
      %p54 = por %p52, %p53
      %p55 = scmp.ne.s32.totalorder %s47, %s50
      %p56 = scmp.eq.s32.totalorder %s14, 0
      %p57 = por %p55, %p56
      %p58 = scmp.ne.s32.totalorder %s47, %s50
      %p59 = scmp.eq.s32.totalorder %s19, 3
      %p60 = por %p58, %p59
      %p61 = scmp.ne.s32.totalorder %s50, %s51
      %p62 = scmp.eq.s32.totalorder %s19, 0
      %p63 = por %p61, %p62
      %p64 = scmp.ne.s32.totalorder %s50, %s51
      %p65 = scmp.eq.s32.totalorder %s20, 3
      %p66 = por %p64, %p65
      %p68 = scmp.ne.s32.totalorder %s51, %s67
      %p69 = scmp.eq.s32.totalorder %s20, 0
      %p70 = por %p68, %p69
      %s71 = ssub.s32 %s21, %s40
      %s72 = ssub.s32 %s22, %s36
      %s73 = sor.u32 %s71, %s72
      %p74 = scmp.eq.s32.totalorder %s73, 0
      %s76 = sadd.s32 %s75, 1
      %s77 = scalar_select %p74, %s75, %s76
      %p80 = pneg %p74
      %p81 = scmp.eq.s32.totalorder %s14, 3
      %p82 = por %p80, %p81
      %p83 = scmp.ne.s32.totalorder %s75, %s78
      %p84 = scmp.eq.s32.totalorder %s14, 0
      %p85 = por %p83, %p84
      %p86 = scmp.ne.s32.totalorder %s75, %s78
      %p87 = scmp.eq.s32.totalorder %s19, 3
      %p88 = por %p86, %p87
      %p89 = scmp.ne.s32.totalorder %s78, %s79
      %p90 = scmp.eq.s32.totalorder %s19, 0
      %p91 = por %p89, %p90
      %p92 = scmp.ne.s32.totalorder %s78, %s79
      %p93 = scmp.eq.s32.totalorder %s20, 3
      %p94 = por %p92, %p93
      %p96 = scmp.ne.s32.totalorder %s79, %s95
      %p97 = scmp.eq.s32.totalorder %s20, 0
      %p98 = por %p96, %p97
      %s99 = ssub.s32 %s21, %s40
      %s100 = ssub.s32 %s23, %s32
      %s101 = sor.u32 %s99, %s100
      %p102 = scmp.eq.s32.totalorder %s101, 0
      %s104 = sadd.s32 %s103, 1
      %s105 = scalar_select %p102, %s103, %s104
      %p108 = pneg %p102
      %p109 = scmp.eq.s32.totalorder %s14, 3
      %p110 = por %p108, %p109
      %p111 = scmp.ne.s32.totalorder %s103, %s106
      %p112 = scmp.eq.s32.totalorder %s14, 0
      %p113 = por %p111, %p112
      %p114 = scmp.ne.s32.totalorder %s103, %s106
      %p115 = scmp.eq.s32.totalorder %s19, 3
      %p116 = por %p114, %p115
      %p117 = scmp.ne.s32.totalorder %s106, %s107
      %p118 = scmp.eq.s32.totalorder %s19, 0
      %p119 = por %p117, %p118
      %p120 = scmp.ne.s32.totalorder %s106, %s107
      %p121 = scmp.eq.s32.totalorder %s20, 3
      %p122 = por %p120, %p121
      %p124 = scmp.ne.s32.totalorder %s107, %s123
      %p125 = scmp.eq.s32.totalorder %s20, 0
      %p126 = por %p124, %p125
      %s127 = ssub.s32 %s22, %s36
      %p128 = scmp.eq.s32.totalorder %s127, 0
      %s130 = sadd.s32 %s129, 1
      %s131 = scalar_select %p128, %s129, %s130
      %p134 = pneg %p128
      %p135 = scmp.eq.s32.totalorder %s14, 3
      %p136 = por %p134, %p135
      %p137 = scmp.ne.s32.totalorder %s129, %s132
      %p138 = scmp.eq.s32.totalorder %s14, 0
      %p139 = por %p137, %p138
      %p140 = scmp.ne.s32.totalorder %s129, %s132
      %p141 = scmp.eq.s32.totalorder %s19, 3
      %p142 = por %p140, %p141
      %p143 = scmp.ne.s32.totalorder %s132, %s133
      %p144 = scmp.eq.s32.totalorder %s19, 0
      %p145 = por %p143, %p144
      %p146 = scmp.ne.s32.totalorder %s132, %s133
      %p147 = scmp.eq.s32.totalorder %s20, 3
      %p148 = por %p146, %p147
      %p150 = scmp.ne.s32.totalorder %s133, %s149
      %p151 = scmp.eq.s32.totalorder %s20, 0
      %p152 = por %p150, %p151
      %s153 = ssub.s32 %s22, %s36
      %p154 = scmp.eq.s32.totalorder %s153, 0
      %s156 = sadd.s32 %s155, 1
      %s157 = scalar_select %p154, %s155, %s156
      %p160 = pneg %p154
      %p161 = scmp.eq.s32.totalorder %s14, 3
      %p162 = por %p160, %p161
      %p163 = scmp.ne.s32.totalorder %s155, %s158
      %p164 = scmp.eq.s32.totalorder %s14, 0
      %p165 = por %p163, %p164
      %p166 = scmp.ne.s32.totalorder %s155, %s158
      %p167 = scmp.eq.s32.totalorder %s19, 3
      %p168 = por %p166, %p167
      %p169 = scmp.ne.s32.totalorder %s158, %s159
      %p170 = scmp.eq.s32.totalorder %s19, 0
      %p171 = por %p169, %p170
      %p172 = scmp.ne.s32.totalorder %s158, %s159
      %p173 = scmp.eq.s32.totalorder %s20, 3
      %p174 = por %p172, %p173
      %p176 = scmp.ne.s32.totalorder %s159, %s175
      %p177 = scmp.eq.s32.totalorder %s20, 0
      %p178 = por %p176, %p177
      %s179 = ssub.s32 %s21, %s40
      %s180 = ssub.s32 %s23, %s32
      %s181 = sor.u32 %s179, %s180
      %s182 = ssub.s32 %s22, %s36
      %s183 = sor.u32 %s181, %s182
      %p184 = scmp.eq.s32.totalorder %s183, 0
      %s186 = sadd.s32 %s185, 1
      %s187 = scalar_select %p184, %s185, %s186
      %p190 = pneg %p184
      %p191 = scmp.eq.s32.totalorder %s14, 3
      %p192 = por %p190, %p191
      %p193 = scmp.ne.s32.totalorder %s185, %s188
      %p194 = scmp.eq.s32.totalorder %s14, 0
      %p195 = por %p193, %p194
      %p196 = scmp.ne.s32.totalorder %s185, %s188
      %p197 = scmp.eq.s32.totalorder %s19, 3
      %p198 = por %p196, %p197
      %p199 = scmp.ne.s32.totalorder %s188, %s189
      %p200 = scmp.eq.s32.totalorder %s19, 0
      %p201 = por %p199, %p200
      %p202 = scmp.ne.s32.totalorder %s188, %s189
      %p203 = scmp.eq.s32.totalorder %s20, 3
      %p204 = por %p202, %p203
      %p206 = scmp.ne.s32.totalorder %s189, %s205
      %p207 = scmp.eq.s32.totalorder %s20, 0
      %p208 = por %p206, %p207
      %p209 = scmp.le.s32.totalorder 1, %s14
      %p210 = scmp.lt.s32.totalorder %s14, 5
      %p211 = pnand %p209, %p210
      %p212 = pneg %p211
      // Predicated region
      $region9: #{citrinet_block_forward.11} parent=5 // pred_check
        _
      $region10: #{citrinet_block_forward.11} parent=5 // pred_check_branch
        %214 = sbr.rel (%p211) target = $region12
      $region11: #{citrinet_block_forward.11} parent=5 // pred_region
        %s215 = ssub.s32 %s14, 1
        // Predicated region
        $region13: #{citrinet_block_forward.11} parent=11 // pred_check
          %p216 = pneg %p145
        $region14: #{citrinet_block_forward.11} parent=11 // pred_check_branch
          %218 = sbr.rel (%p216) target = $region16
        $region15: #{citrinet_block_forward.11} parent=11 // pred_region
          %p219 = scmp.lt.s32.totalorder %s25, 0
          %s220 = scalar_select %p219, %s25, 0
          %s221 = smul.addr %s220, 4
          %s222 = scalar_lea.vmem %s3, %s221
        $region16: #{citrinet_block_forward.11} parent=11 // pred_fallthru
          _
        // Predicated region
        $region17: #{citrinet_block_forward.11} parent=11 // pred_check
          %p223 = pneg %p171
        $region18: #{citrinet_block_forward.11} parent=11 // pred_check_branch
          %225 = sbr.rel (%p223) target = $region20
        $region19: #{citrinet_block_forward.11} parent=11 // pred_region
          %p226 = scmp.lt.s32.totalorder %s25, 0
          %s227 = scalar_select %p226, %s25, 0
          %s228 = scalar_lea.vmem %s4, %s227
        $region20: #{citrinet_block_forward.11} parent=11 // pred_fallthru
          _
      $region12: #{citrinet_block_forward.11} parent=5 // pred_fallthru
        _
      %p229 = scmp.lt.s32.totalorder %s14, 4
      // Predicated region
      $region21: #{citrinet_block_forward.11} parent=5 // pred_check
        %p230 = pneg %p229
      $region22: #{citrinet_block_forward.11} parent=5 // pred_check_branch
        %232 = sbr.rel (%p230) target = $region24
      $region23: #{citrinet_block_forward.11} parent=5 // pred_region
        // Predicated region
        $region25: #{citrinet_block_forward.11} parent=23 // pred_check
          %p233 = pneg %p57
        $region26: #{citrinet_block_forward.11} parent=23 // pred_check_branch
          %235 = sbr.rel (%p233) target = $region28
        $region27: #{citrinet_block_forward.11} parent=23 // pred_region
          %s236 = smul.u32 2, %s23
          %p237 = scmp.lt.s32.totalorder %s21, 1
          %s238 = scalar_select %p237, %s21, 1
          %p239 = scmp.lt.s32.totalorder %s236, 3
          %s240 = scalar_select %p239, %s236, 3
          %p241 = scmp.lt.s32.totalorder %s22, 0
          %s242 = scalar_select %p241, %s22, 0
          %s243 = sadd.s32 %s242, %s240
          %s244 = smul.addr %s238, 4
          %s245 = sadd.s32 %s243, %s244
          %s246 = smul.addr %s245, 4
          %s247 = scalar_lea.vmem %s0, %s246
          %s248 = smul.u32 2, %s23
        $region28: #{citrinet_block_forward.11} parent=23 // pred_fallthru
          _
        // Predicated region
        $region29: #{citrinet_block_forward.11} parent=23 // pred_check
          %p249 = pneg %p85
        $region30: #{citrinet_block_forward.11} parent=23 // pred_check_branch
          %251 = sbr.rel (%p249) target = $region32
        $region31: #{citrinet_block_forward.11} parent=23 // pred_region
          %p252 = scmp.lt.s32.totalorder %s21, 1
          %s253 = scalar_select %p252, %s21, 1
          %p254 = scmp.lt.s32.totalorder %s22, 0
          %s255 = scalar_select %p254, %s22, 0
          %s256 = sadd.s32 %s255, %s253
          %s257 = scalar_lea.vmem %s1, %s256
        $region32: #{citrinet_block_forward.11} parent=23 // pred_fallthru
          _
        // Predicated region
        $region33: #{citrinet_block_forward.11} parent=23 // pred_check
          %p258 = pneg %p113
        $region34: #{citrinet_block_forward.11} parent=23 // pred_check_branch
          %260 = sbr.rel (%p258) target = $region36
        $region35: #{citrinet_block_forward.11} parent=23 // pred_region
          %s261 = smul.u32 2, %s23
          %p262 = scmp.lt.s32.totalorder %s21, 1
          %s263 = scalar_select %p262, %s21, 1
          %p264 = scmp.lt.s32.totalorder %s261, 3
          %s265 = scalar_select %p264, %s261, 3
          %s266 = smul.addr %s263, 4
          %s267 = sadd.s32 %s265, %s266
          %s268 = smul.addr %s267, 4
          %s269 = scalar_lea.vmem %s2, %s268
          %s270 = smul.u32 2, %s23
        $region36: #{citrinet_block_forward.11} parent=23 // pred_fallthru
          _
      $region24: #{citrinet_block_forward.11} parent=5 // pred_fallthru
        _
      %p271 = scmp.le.s32.totalorder 1, %s14
      %p272 = scmp.lt.s32.totalorder %s14, 5
      %p273 = pnand %p271, %p272
      %p274 = pneg %p273
      // Predicated region
      $region37: #{citrinet_block_forward.11} parent=5 // pred_check
        _
      $region38: #{citrinet_block_forward.11} parent=5 // pred_check_branch
        %276 = sbr.rel (%p273) target = $region40
      $region39: #{citrinet_block_forward.11} parent=5 // pred_region
        %s277 = ssub.s32 %s14, 1
        %s278 = smul.u32 2, %s26
        %p279 = scmp.lt.s32.totalorder %s24, 1
        %s280 = scalar_select %p279, %s24, 1
        %p281 = scmp.lt.s32.totalorder %s278, 3
        %s282 = scalar_select %p281, %s278, 3
        %p283 = scmp.lt.s32.totalorder %s25, 0
        %s284 = scalar_select %p283, %s25, 0
        %s285 = sadd.s32 %s284, %s282
        %s286 = smul.addr %s280, 4
        %s287 = sadd.s32 %s285, %s286
        %s288 = smul.addr %s287, 4
        %s289 = scalar_lea.vmem %s0, %s288
        %p290 = pneg %p63
        %p291 = pneg %p60
        %p292 = scmp.lt.s32.totalorder %s24, 1
        %s293 = scalar_select %p292, %s24, 1
        %p294 = scmp.lt.s32.totalorder %s25, 0
        %s295 = scalar_select %p294, %s25, 0
        %s296 = sadd.s32 %s295, %s293
        %s297 = scalar_lea.vmem %s1, %s296
        %p298 = pneg %p91
        %p299 = pneg %p88
        %s300 = smul.u32 2, %s26
        %p301 = scmp.lt.s32.totalorder %s24, 1
        %s302 = scalar_select %p301, %s24, 1
        %p303 = scmp.lt.s32.totalorder %s300, 3
        %s304 = scalar_select %p303, %s300, 3
        %s305 = smul.addr %s302, 4
        %s306 = sadd.s32 %s304, %s305
        %s307 = smul.addr %s306, 4
        %s308 = scalar_lea.vmem %s2, %s307
        %p309 = pneg %p119
        %p310 = pneg %p116
        %p311 = scmp.lt.s32.totalorder %s25, 0
        %s312 = scalar_select %p311, %s25, 0
        %s313 = smul.addr %s312, 4
        %s314 = scalar_lea.vmem %s3, %s313
        %p315 = pneg %p145
        %p316 = pneg %p142
        %p317 = scmp.lt.s32.totalorder %s25, 0
        %s318 = scalar_select %p317, %s25, 0
        %s319 = scalar_lea.vmem %s4, %s318
        %p320 = pneg %p171
        %p321 = pneg %p168
        %p322 = pneg %p201
        %p323 = pneg %p198
        %s324 = sand.u32 %s188, 1
        %s325 = scalar_lea.sflag [#allocation3], %s324
        %s326 = sand.u32 %s188, 1
        %s327 = smul.addr %s326, 16
        %s328 = scalar_lea.vmem [#allocation2], %s327
        %s329 = smul.u32 2, %s26
        %p330 = scmp.lt.s32.totalorder %s24, 1
        %s331 = scalar_select %p330, %s24, 1
        %p332 = scmp.lt.s32.totalorder %s329, 3
        %s333 = scalar_select %p332, %s329, 3
        %p334 = scmp.lt.s32.totalorder %s25, 0
        %s335 = scalar_select %p334, %s25, 0
        %s336 = sadd.s32 %s335, %s333
        %s337 = smul.addr %s331, 4
        %s338 = sadd.s32 %s336, %s337
        %s339 = smul.addr %s338, 4
        %s340 = scalar_lea.vmem %s0, %s339
        %s341 = smul.u32 2, %s26
        %p342 = scmp.lt.s32.totalorder %s24, 1
        %s343 = scalar_select %p342, %s24, 1
        %p344 = scmp.lt.s32.totalorder %s25, 0
        %s345 = scalar_select %p344, %s25, 0
        %s346 = sadd.s32 %s345, %s343
        %s347 = scalar_lea.vmem %s1, %s346
        %s348 = smul.u32 2, %s26
        %p349 = scmp.lt.s32.totalorder %s24, 1
        %s350 = scalar_select %p349, %s24, 1
        %p351 = scmp.lt.s32.totalorder %s348, 3
        %s352 = scalar_select %p351, %s348, 3
        %s353 = smul.addr %s350, 4
        %s354 = sadd.s32 %s352, %s353
        %s355 = smul.addr %s354, 4
        %s356 = scalar_lea.vmem %s2, %s355
        %s357 = smul.u32 2, %s26
        %p358 = scmp.lt.s32.totalorder %s25, 0
        %s359 = scalar_select %p358, %s25, 0
        %s360 = smul.addr %s359, 4
        %s361 = scalar_lea.vmem %s3, %s360
        %p362 = scmp.lt.s32.totalorder %s25, 0
        %s363 = scalar_select %p362, %s25, 0
        %s364 = scalar_lea.vmem %s4, %s363
        %s365 = smul.u32 2, %s26
        %v367 = vld [vmem:[%s356] sm:$0xf]
        %v368 = vld [vmem:[%s356 + $0x4] sm:$0xf]
        %v369 = vld [vmem:[%s361] sm:$0xf]
        %v370 = vld [vmem:[%s361 + $0x4] sm:$0xf]
        %v371 = vld [vmem:[%s361 + $0x8] sm:$0xf]
        %v372 = vld [vmem:[%s361 + $0xc] sm:$0xf]
        %v373 = vld [vmem:[%s364] sm:$0x1]
        %v375 = vlaneseq
        %v376 = vshrl.u32 %v375, 7
        %v377 = vsub.s32 0, %v376
        %v378 = vrot.slane %v373, %v377
        %v382 = vunpack.c.l.b16 %v367
        %v383 = vunpack.c.l.b16 %v368
        %v384 = vpack.c.b16 %v383, %v382
        %v389 = vunpack.c.l.b16 %v369
        %v390 = vunpack.c.l.b16 %v370
        %v391 = vunpack.c.l.b16 %v371
        %v392 = vunpack.c.l.b16 %v372
        %v393 = vpack.c.b16 %v390, %v389
        %v394 = vpack.c.b16 %v392, %v391
        %vm397 = vcmask 261120
        %v399 = vsel %vm397, %v384, 0
        %401 = vmatprep.subr.bf16.mxu0 0
        %402 = vmatpush1.bf16.msra.mxu0 0
        %403 = vmatprep.subr.bf16.mxu0 0
        %404 = vmatpush1.bf16.msra.mxu0 0
        %405 = vmatprep.subr.bf16.mxu0 0
        %406 = vmatpush1.bf16.msra.mxu0 0
        %407 = vmatprep.subr.bf16.mxu0 0
        %408 = vmatpush1.bf16.msra.mxu0 0
        %409 = vmatprep.subr.bf16.mxu0 0
        %410 = vmatpush1.bf16.msra.mxu0 0
        %411 = vmatprep.subr.bf16.mxu0 0
        %412 = vmatpush1.bf16.msra.mxu0 0
        %413 = vmatprep.subr.bf16.mxu0 0
        %414 = vmatpush1.bf16.msra.mxu0 %v394
        %415 = vmatprep.subr.bf16.mxu0 0
        %416 = vmatpush1.bf16.msra.mxu0 %v393
        %417 = vmatprep.subr.bf16.mxu0 0
        %418 = vmatpush2.bf16.msra.mxu0 0
        %419 = vmatprep.subr.bf16.mxu0 0
        %420 = vmatpush2.bf16.msra.mxu0 0
        %421 = vmatprep.subr.bf16.mxu0 0
        %422 = vmatpush2.bf16.msra.mxu0 0
        %423 = vmatprep.subr.bf16.mxu0 0
        %424 = vmatpush2.bf16.msra.mxu0 0
        %425 = vmatprep.subr.bf16.mxu0 0
        %426 = vmatpush2.bf16.msra.mxu0 0
        %427 = vmatprep.subr.bf16.mxu0 0
        %428 = vmatpush2.bf16.msra.mxu0 0
        %429 = vmatprep.subr.bf16.mxu0 0
        %430 = vmatpush2.bf16.msra.mxu0 0
        %431 = vmatprep.subr.bf16.mxu0 0
        %432 = vmatpush2.bf16.msra.mxu0 0
        %433 = vmatprep.mubr.bf16.mxu0 0
        %434 = vmatmul.mubr.bf16.gmra.mxu0 %v399
        %v435 = vpop.f32.mrf.mxu0
        %v436 = vadd.f32 %v378, %v435
        %v437 = vpop.f32.mrf.mxu0
        %v438 = vpop.f32.mrf.mxu0
        %v439 = vadd.f32 %v378, %v438
        %v440 = vpop.f32.mrf.mxu0
        %441 = vdwg.mxu0
        %v442 = vld [vmem:[%s340] sm:$0xf]
        %v443 = vld [vmem:[%s340 + $0x4] sm:$0xf]
        %v444 = vunpack.c.l.bf16 %v442
        %v445 = vunpack.c.l.bf16 %v443
        %v446 = vld [vmem:[%s347] sm:$0x1]
        %v448 = vlaneseq
        %v449 = vshrl.u32 %v448, 7
        %v450 = vsub.s32 0, %v449
        %v451 = vrot.slane %v446, %v450
        %v453 = vmul.f32 %v444, %v451
        %v454 = vmul.f32 %v445, %v451
        %v455 = vadd.f32 %v453, %v436
        %v456 = vadd.f32 %v454, %v439
        %v457 = vmax.f32 %v455, 0.0
        %v458 = vmax.f32 %v456, 0.0
        %vm459 = vcmask 523264
        %460 = vst.msk [vmem:[%s328] sm:$0xff] %vm459, %v457
        %461 = vst.msk [vmem:[%s328 + $0x8] sm:$0xff] %vm459, %v458
        %s462 = sand.u32 %s188, 1
        %s463 = scalar_lea.sflag [#allocation3], %s462
        %s464 = sand.u32 %s188, 1
        %s465 = smul.addr %s464, 16
        %s466 = scalar_lea.vmem [#allocation2], %s465
        // Predicated region
        $region41: #{citrinet_block_forward.11} parent=39 // pred_check
          %p467 = pneg %p198
        $region42: #{citrinet_block_forward.11} parent=39 // pred_check_branch
          %469 = sbr.rel (%p467) target = $region44
        $region43: #{citrinet_block_forward.11} parent=39 // pred_region
          %s470 = smul.u32 2, %s26
          %s472 = ssub.s32 256, 256
          %473 = vsyncadd %s463, %s472
          %s474 = sadd.s32 %s25, %s470
          %s475 = smul.addr %s24, 4
          %s476 = sadd.s32 %s474, %s475
          %s477 = smul.addr %s476, 128
          %s478 = scalar_lea.hbm %s5, %s477
          %s479 = sshll.u32 %s466, 4
          %s480 = int_to_ptr.vmem [resolvable:$true] %s479
          %485 = dma.vmem_to_hbm [thread:$0]  %s480, 256, %s478, %s463, 128, 128, 8
        $region44: #{citrinet_block_forward.11} parent=39 // pred_fallthru
          _
      $region40: #{citrinet_block_forward.11} parent=5 // pred_fallthru
        _
      %p486 = scmp.le.s32.totalorder 2, %s14
      // Predicated region
      $region45: #{citrinet_block_forward.11} parent=5 // pred_check
        %p487 = pneg %p486
      $region46: #{citrinet_block_forward.11} parent=5 // pred_check_branch
        %489 = sbr.rel (%p487) target = $region48
      $region47: #{citrinet_block_forward.11} parent=5 // pred_region
        %s490 = ssub.s32 %s14, 2
        // Predicated region
        $region49: #{citrinet_block_forward.11} parent=47 // pred_check
          %p491 = pneg %p204
        $region50: #{citrinet_block_forward.11} parent=47 // pred_check_branch
          %493 = sbr.rel (%p491) target = $region52
        $region51: #{citrinet_block_forward.11} parent=47 // pred_region
          %s494 = sand.u32 %s189, 1
          %s495 = scalar_lea.sflag [#allocation3], %s494
          %s496 = sand.u32 %s189, 1
          %s497 = smul.addr %s496, 16
          %s498 = scalar_lea.vmem [#allocation2], %s497
          %499 = dma.done %s495, 256
        $region52: #{citrinet_block_forward.11} parent=47 // pred_fallthru
          _
      $region48: #{citrinet_block_forward.11} parent=5 // pred_fallthru
        _
    $region6: #{citrinet_block_forward.11} parent=1 // loop_footer
      %s18 = sadd.s32 1, %s14
    $region7: #{citrinet_block_forward.11} parent=1 // loop_footer_branch
      %13 = sbr.rel target = $region3
    $region8: #{citrinet_block_forward.11} parent=1 // loop_exit
      _
    %500 = vsyncpa [#allocation3], 1
    %s501 = scalar_lea.sflag [#allocation3], 1
    %502 = vsyncpa %s501, 1

// kernel: citrinet_block_forward.7
$region0: #{citrinet_block_forward.7}
  #allocation0 [shape = 'u32[]', space=smem, size = 0x4, offset = 0x4, fixed_abs, tag = 'smem constant byte address 0x4 - core index']
  #allocation1 [shape = 'u32[144,128]{1,0:T(1,128)}', space=vmem, size = 0x12000, scoped, tag = 'internal scratch']
  %s0 = inlined_call_operand.vmem [shape: bf16[2,42,64], index: 0, kind: input, shape index: {}]
  %s1 = inlined_call_operand.vmem [shape: bf16[704,64], index: 1, kind: input, shape index: {}]
  %s2 = inlined_call_operand.vmem [shape: f32[1,64], index: 2, kind: input, shape index: {}]
  %s3 = inlined_call_operand.vmem [shape: bf16[2,32,64], index: 3, kind: output, shape index: {}]
  %s4 = sld [smem:[#allocation0]]
  $region45: #{citrinet_block_forward.7} parent=0
    _
  %s6 = ssub.s32 1, %s4
  %s7 = scalar_select 0, %s6, %s4
  loop: start=0, step=1, limit=6
  $region2: #{citrinet_block_forward.7} parent=0 // loop_pre_header
    _
  $region3: #{citrinet_block_forward.7} parent=0 // loop_header
    %s9 = sphi 0, %s13
    %p10 = scmp.ge.s32.totalorder %s9, 6
    %s16 = sphi 0, %s35
    %s17 = sphi 0, %s31
    %s18 = sphi 0, %s27
    %s19 = sphi 0, %s16
    %s20 = sphi 0, %s17
    %s21 = sphi 0, %s18
    %s22 = sphi 0, %s19
    %s23 = sphi 0, %s20
    %s24 = sphi 0, %s21
    %s38 = sphi 0, %s40
    %s41 = sphi 0, %s38
    %s42 = sphi 0, %s41
    %s58 = sphi 0, %s42
    %s64 = sphi 0, %s66
    %s67 = sphi 0, %s64
    %s68 = sphi 0, %s67
    %s84 = sphi 0, %s68
    %s90 = sphi 0, %s92
    %s93 = sphi 0, %s90
    %s94 = sphi 0, %s93
    %s110 = sphi 0, %s94
    %s120 = sphi 0, %s122
    %s123 = sphi 0, %s120
    %s124 = sphi 0, %s123
    %s140 = sphi 0, %s124
  $region4: #{citrinet_block_forward.7} parent=0 // loop_header_branch
    %12 = sbr.rel (%p10) target = $region8
  $region5: #{citrinet_block_forward.7} parent=0 // loop_body
    %s14 = ssub.s32 %s9, 1
    %s15 = ssub.s32 %s9, 2
    %s25 = sadd.s32 1, %s18
    %p26 = scmp.ge.s32.totalorder %s25, 2
    %s27 = scalar_select %p26, 0, %s25
    %s28 = sadd.s32 1, %s17
    %s29 = scalar_select %p26, %s28, %s17
    %p30 = scmp.ge.s32.totalorder %s29, 1
    %s31 = scalar_select %p30, 0, %s29
    %s32 = sadd.s32 1, %s16
    %s33 = scalar_select %p30, %s32, %s16
    %p34 = scmp.ge.s32.totalorder %s33, 2
    %s35 = scalar_select %p34, 0, %s33
    %s36 = ssub.s32 %s16, %s35
    %p37 = scmp.eq.s32.totalorder %s36, 0
    %s39 = sadd.s32 %s38, 1
    %s40 = scalar_select %p37, %s38, %s39
    %p43 = pneg %p37
    %p44 = scmp.eq.s32.totalorder %s9, 3
    %p45 = por %p43, %p44
    %p46 = scmp.ne.s32.totalorder %s38, %s41
    %p47 = scmp.eq.s32.totalorder %s9, 0
    %p48 = por %p46, %p47
    %p49 = scmp.ne.s32.totalorder %s38, %s41
    %p50 = scmp.eq.s32.totalorder %s14, 3
    %p51 = por %p49, %p50
    %p52 = scmp.ne.s32.totalorder %s41, %s42
    %p53 = scmp.eq.s32.totalorder %s14, 0
    %p54 = por %p52, %p53
    %p55 = scmp.ne.s32.totalorder %s41, %s42
    %p56 = scmp.eq.s32.totalorder %s15, 3
    %p57 = por %p55, %p56
    %p59 = scmp.ne.s32.totalorder %s42, %s58
    %p60 = scmp.eq.s32.totalorder %s15, 0
    %p61 = por %p59, %p60
    %s62 = ssub.s32 %s17, %s31
    %p63 = scmp.eq.s32.totalorder %s62, 0
    %s65 = sadd.s32 %s64, 1
    %s66 = scalar_select %p63, %s64, %s65
    %p69 = pneg %p63
    %p70 = scmp.eq.s32.totalorder %s9, 3
    %p71 = por %p69, %p70
    %p72 = scmp.ne.s32.totalorder %s64, %s67
    %p73 = scmp.eq.s32.totalorder %s9, 0
    %p74 = por %p72, %p73
    %p75 = scmp.ne.s32.totalorder %s64, %s67
    %p76 = scmp.eq.s32.totalorder %s14, 3
    %p77 = por %p75, %p76
    %p78 = scmp.ne.s32.totalorder %s67, %s68
    %p79 = scmp.eq.s32.totalorder %s14, 0
    %p80 = por %p78, %p79
    %p81 = scmp.ne.s32.totalorder %s67, %s68
    %p82 = scmp.eq.s32.totalorder %s15, 3
    %p83 = por %p81, %p82
    %p85 = scmp.ne.s32.totalorder %s68, %s84
    %p86 = scmp.eq.s32.totalorder %s15, 0
    %p87 = por %p85, %p86
    %s88 = ssub.s32 %s17, %s31
    %p89 = scmp.eq.s32.totalorder %s88, 0
    %s91 = sadd.s32 %s90, 1
    %s92 = scalar_select %p89, %s90, %s91
    %p95 = pneg %p89
    %p96 = scmp.eq.s32.totalorder %s9, 3
    %p97 = por %p95, %p96
    %p98 = scmp.ne.s32.totalorder %s90, %s93
    %p99 = scmp.eq.s32.totalorder %s9, 0
    %p100 = por %p98, %p99
    %p101 = scmp.ne.s32.totalorder %s90, %s93
    %p102 = scmp.eq.s32.totalorder %s14, 3
    %p103 = por %p101, %p102
    %p104 = scmp.ne.s32.totalorder %s93, %s94
    %p105 = scmp.eq.s32.totalorder %s14, 0
    %p106 = por %p104, %p105
    %p107 = scmp.ne.s32.totalorder %s93, %s94
    %p108 = scmp.eq.s32.totalorder %s15, 3
    %p109 = por %p107, %p108
    %p111 = scmp.ne.s32.totalorder %s94, %s110
    %p112 = scmp.eq.s32.totalorder %s15, 0
    %p113 = por %p111, %p112
    %s114 = ssub.s32 %s16, %s35
    %s115 = ssub.s32 %s18, %s27
    %s116 = sor.u32 %s114, %s115
    %s117 = ssub.s32 %s17, %s31
    %s118 = sor.u32 %s116, %s117
    %p119 = scmp.eq.s32.totalorder %s118, 0
    %s121 = sadd.s32 %s120, 1
    %s122 = scalar_select %p119, %s120, %s121
    %p125 = pneg %p119
    %p126 = scmp.eq.s32.totalorder %s9, 3
    %p127 = por %p125, %p126
    %p128 = scmp.ne.s32.totalorder %s120, %s123
    %p129 = scmp.eq.s32.totalorder %s9, 0
    %p130 = por %p128, %p129
    %p131 = scmp.ne.s32.totalorder %s120, %s123
    %p132 = scmp.eq.s32.totalorder %s14, 3
    %p133 = por %p131, %p132
    %p134 = scmp.ne.s32.totalorder %s123, %s124
    %p135 = scmp.eq.s32.totalorder %s14, 0
    %p136 = por %p134, %p135
    %p137 = scmp.ne.s32.totalorder %s123, %s124
    %p138 = scmp.eq.s32.totalorder %s15, 3
    %p139 = por %p137, %p138
    %p141 = scmp.ne.s32.totalorder %s124, %s140
    %p142 = scmp.eq.s32.totalorder %s15, 0
    %p143 = por %p141, %p142
    %p144 = scmp.le.s32.totalorder 1, %s9
    %p145 = scmp.lt.s32.totalorder %s9, 5
    %p146 = pnand %p144, %p145
    %p147 = pneg %p146
    // Predicated region
    $region9: #{citrinet_block_forward.7} parent=5 // pred_check
      _
    $region10: #{citrinet_block_forward.7} parent=5 // pred_check_branch
      %149 = sbr.rel (%p146) target = $region12
    $region11: #{citrinet_block_forward.7} parent=5 // pred_region
      %s150 = ssub.s32 %s9, 1
      // Predicated region
      $region13: #{citrinet_block_forward.7} parent=11 // pred_check
        %p151 = pneg %p80
      $region14: #{citrinet_block_forward.7} parent=11 // pred_check_branch
        %153 = sbr.rel (%p151) target = $region16
      $region15: #{citrinet_block_forward.7} parent=11 // pred_region
        %p154 = scmp.lt.s32.totalorder %s20, 0
        %s155 = scalar_select %p154, %s20, 0
        %s156 = smul.addr %s155, 4
        %s157 = scalar_lea.vmem %s1, %s156
      $region16: #{citrinet_block_forward.7} parent=11 // pred_fallthru
        _
      // Predicated region
      $region17: #{citrinet_block_forward.7} parent=11 // pred_check
        %p158 = pneg %p106
      $region18: #{citrinet_block_forward.7} parent=11 // pred_check_branch
        %160 = sbr.rel (%p158) target = $region20
      $region19: #{citrinet_block_forward.7} parent=11 // pred_region
        %p161 = scmp.lt.s32.totalorder %s20, 0
        %s162 = scalar_select %p161, %s20, 0
        %s163 = scalar_lea.vmem %s2, %s162
      $region20: #{citrinet_block_forward.7} parent=11 // pred_fallthru
        _
    $region12: #{citrinet_block_forward.7} parent=5 // pred_fallthru
      _
    %p164 = scmp.lt.s32.totalorder %s9, 4
    // Predicated region
    $region21: #{citrinet_block_forward.7} parent=5 // pred_check
      %p165 = pneg %p164
    $region22: #{citrinet_block_forward.7} parent=5 // pred_check_branch
      %167 = sbr.rel (%p165) target = $region24
    $region23: #{citrinet_block_forward.7} parent=5 // pred_region
      // Predicated region
      $region25: #{citrinet_block_forward.7} parent=23 // pred_check
        %p168 = pneg %p48
      $region26: #{citrinet_block_forward.7} parent=23 // pred_check_branch
        %170 = sbr.rel (%p168) target = $region28
      $region27: #{citrinet_block_forward.7} parent=23 // pred_region
        %p171 = scmp.lt.s32.totalorder %s16, 1
        %s172 = scalar_select %p171, %s16, 1
        %s173 = smul.addr %s172, 6
        %s174 = smul.addr %s173, 4
        %s175 = scalar_lea.vmem %s0, %s174
      $region28: #{citrinet_block_forward.7} parent=23 // pred_fallthru
        _
    $region24: #{citrinet_block_forward.7} parent=5 // pred_fallthru
      _
    %p176 = scmp.le.s32.totalorder 1, %s9
    %p177 = scmp.lt.s32.totalorder %s9, 5
    %p178 = pnand %p176, %p177
    %p179 = pneg %p178
    // Predicated region
    $region29: #{citrinet_block_forward.7} parent=5 // pred_check
      _
    $region30: #{citrinet_block_forward.7} parent=5 // pred_check_branch
      %181 = sbr.rel (%p178) target = $region32
    $region31: #{citrinet_block_forward.7} parent=5 // pred_region
      %s182 = ssub.s32 %s9, 1
      %p183 = scmp.lt.s32.totalorder %s19, 1
      %s184 = scalar_select %p183, %s19, 1
      %s185 = smul.addr %s184, 6
      %s186 = smul.addr %s185, 4
      %s187 = scalar_lea.vmem %s0, %s186
      %p188 = pneg %p54
      %p189 = pneg %p51
      %p190 = scmp.lt.s32.totalorder %s20, 0
      %s191 = scalar_select %p190, %s20, 0
      %s192 = smul.addr %s191, 4
      %s193 = scalar_lea.vmem %s1, %s192
      %p194 = pneg %p80
      %p195 = pneg %p77
      %p196 = scmp.lt.s32.totalorder %s20, 0
      %s197 = scalar_select %p196, %s20, 0
      %s198 = scalar_lea.vmem %s2, %s197
      %p199 = pneg %p106
      %p200 = pneg %p103
      %p201 = pneg %p136
      %p202 = pneg %p133
      %s203 = smul.u32 2, %s21
      %p204 = scmp.lt.s32.totalorder %s19, 1
      %s205 = scalar_select %p204, %s19, 1
      %p206 = scmp.lt.s32.totalorder %s203, 3
      %s207 = scalar_select %p206, %s203, 3
      %p208 = scmp.lt.s32.totalorder %s20, 0
      %s209 = scalar_select %p208, %s20, 0
      %s210 = sadd.s32 %s209, %s207
      %s211 = smul.addr %s205, 4
      %s212 = sadd.s32 %s210, %s211
      %s213 = smul.addr %s212, 4
      %s214 = scalar_lea.vmem %s3, %s213
      %p215 = scmp.lt.s32.totalorder %s19, 1
      %s216 = scalar_select %p215, %s19, 1
      %s217 = smul.addr %s216, 6
      %s218 = smul.addr %s217, 4
      %s219 = scalar_lea.vmem %s0, %s218
      %p220 = scmp.lt.s32.totalorder %s20, 0
      %s221 = scalar_select %p220, %s20, 0
      %s222 = smul.addr %s221, 4
      %s223 = scalar_lea.vmem %s1, %s222
      %p224 = scmp.lt.s32.totalorder %s20, 0
      %s225 = scalar_select %p224, %s20, 0
      %s226 = scalar_lea.vmem %s2, %s225
      %s227 = smul.u32 2, %s21
      %p228 = scmp.lt.s32.totalorder %s19, 1
      %s229 = scalar_select %p228, %s19, 1
      %p230 = scmp.lt.s32.totalorder %s227, 3
      %s231 = scalar_select %p230, %s227, 3
      %p232 = scmp.lt.s32.totalorder %s20, 0
      %s233 = scalar_select %p232, %s20, 0
      %s234 = sadd.s32 %s233, %s231
      %s235 = smul.addr %s229, 4
      %s236 = sadd.s32 %s234, %s235
      %s237 = smul.addr %s236, 4
      %s238 = scalar_lea.vmem %s3, %s237
      %s239 = smul.u32 2, %s21
      %s241 = smul.u32 %s21, 16
      %s242 = sshra.s32 %s241, 3
      %s243 = sand.u32 %s241, 7
      %s244 = smul.addr %s242, 4
      %s245 = scalar_lea.vmem %s219, %s244
      %v246 = vld [vmem:[%s245] sm:$0xf]
      %v247 = vld [vmem:[%s245 + $0x4] sm:$0xf]
      %v248 = vld [vmem:[%s245 + $0x8] sm:$0xf]
      %v249 = vld [vmem:[%s245 + $0xc] sm:$0x1]
      %v252 = vunpack.c.l.b16 %v246
      %v253 = vunpack.c.l.b16 %v247
      %v254 = vpack.c.b16 %v253, %v252
      %v256 = vunpack.c.l.b16 %v248
      %v257 = vpack.c.b16 %v256, %v256
      %vm258 = vsmask.f32 7424
      %v260 = vshrl.u32 %v254, 16
      %v262 = vshll.u32 %v254, 16
      %v264 = vrot.slane %v262, 1
      %v265 = vor.u32 %v260, %v264
      %v267 = vshll.u32 %v257, 16
      %v269 = vrot.slane %v267, 1
      %v270 = vsel %vm258, %v265, %v269
      %271 = vrot.lane.b32.xlu0 %v270, 64
      %v272 = vpop.permute.xlu0 %271
      %vm273 = vcmask 1046528
      %v274 = vrot.slane %v254, 1
      %v275 = vrot.slane %v257, 1
      %v276 = vsel %vm273, %v274, %v275
      %vm277 = vsmask.f32 6400
      %v278 = vrot.slane %v260, 1
      %v279 = vrot.slane %v262, 2
      %v280 = vor.u32 %v278, %v279
      %v281 = vshrl.u32 %v257, 16
      %v283 = vrot.slane %v281, 1
      %v284 = vrot.slane %v267, 2
      %v285 = vor.u32 %v283, %v284
      %v286 = vsel %vm277, %v280, %v285
      %287 = vrot.lane.b32.xlu0 %v286, 64
      %v288 = vpop.permute.xlu0 %287
      %vm289 = vcmask 1045504
      %v290 = vrot.slane %v254, 2
      %v291 = vrot.slane %v257, 2
      %v292 = vsel %vm289, %v290, %v291
      %vm293 = vsmask.f32 5376
      %v294 = vrot.slane %v260, 2
      %v295 = vrot.slane %v262, 3
      %v296 = vor.u32 %v294, %v295
      %v297 = vrot.slane %v281, 2
      %v298 = vrot.slane %v267, 3
      %v299 = vor.u32 %v297, %v298
      %v300 = vsel %vm293, %v296, %v299
      %301 = vrot.lane.b32.xlu0 %v300, 64
      %v302 = vpop.permute.xlu0 %301
      %vm303 = vcmask 1044480
      %v304 = vrot.slane %v254, 3
      %v305 = vrot.slane %v257, 3
      %v306 = vsel %vm303, %v304, %v305
      %vm307 = vsmask.f32 4352
      %v308 = vrot.slane %v260, 3
      %v309 = vrot.slane %v262, 4
      %v310 = vor.u32 %v308, %v309
      %v311 = vrot.slane %v281, 3
      %v312 = vrot.slane %v267, 4
      %v313 = vor.u32 %v311, %v312
      %v314 = vsel %vm307, %v310, %v313
      %315 = vrot.lane.b32.xlu0 %v314, 64
      %v316 = vpop.permute.xlu0 %315
      %v317 = vpack.c.b16 %v256, %v253
      %v319 = vunpack.c.l.b16 %v249
      %v320 = vpack.c.b16 %v319, %v319
      %v322 = vshrl.u32 %v317, 16
      %v324 = vshll.u32 %v317, 16
      %v326 = vrot.slane %v324, 1
      %v327 = vor.u32 %v322, %v326
      %v329 = vshll.u32 %v320, 16
      %v331 = vrot.slane %v329, 1
      %v332 = vsel %vm258, %v327, %v331
      %333 = vrot.lane.b32.xlu0 %v332, 64
      %v334 = vpop.permute.xlu0 %333
      %v335 = vrot.slane %v317, 1
      %v336 = vrot.slane %v320, 1
      %v337 = vsel %vm273, %v335, %v336
      %vm338 = vcmask 523264
      %v340 = vsel %vm338, %v254, %v272
      %v344 = vsel %vm338, %v276, %v288
      %v348 = vsel %vm338, %v292, %v302
      %v352 = vsel %vm338, %v306, %v316
      %v355 = vsel %vm338, %v317, %v334
      %v357 = vld [vmem:[%s223] sm:$0xf]
      %v358 = vld [vmem:[%s223 + $0x4] sm:$0xf]
      %v359 = vld [vmem:[%s223 + $0x8] sm:$0xf]
      %v360 = vld [vmem:[%s223 + $0xc] sm:$0xf]
      %v361 = vld [vmem:[%s223 + $0x10] sm:$0xf]
      %v362 = vld [vmem:[%s223 + $0x14] sm:$0xf]
      %v363 = vld [vmem:[%s223 + $0x18] sm:$0xf]
      %v364 = vld [vmem:[%s223 + $0x1c] sm:$0xf]
      %v365 = vld [vmem:[%s223 + $0x20] sm:$0xf]
      %v366 = vld [vmem:[%s223 + $0x24] sm:$0xf]
      %v367 = vld [vmem:[%s223 + $0x28] sm:$0xf]
      %v368 = vld [vmem:[%s223 + $0x2c] sm:$0xf]
      %v369 = vld [vmem:[%s223 + $0x30] sm:$0xf]
      %v370 = vld [vmem:[%s223 + $0x34] sm:$0xf]
      %v371 = vld [vmem:[%s223 + $0x38] sm:$0xf]
      %v372 = vld [vmem:[%s223 + $0x3c] sm:$0xf]
      %v373 = vld [vmem:[%s223 + $0x40] sm:$0xf]
      %v374 = vld [vmem:[%s223 + $0x44] sm:$0xf]
      %v375 = vld [vmem:[%s223 + $0x48] sm:$0xf]
      %v376 = vld [vmem:[%s223 + $0x4c] sm:$0xf]
      %v377 = vld [vmem:[%s223 + $0x50] sm:$0xf]
      %v378 = vld [vmem:[%s223 + $0x54] sm:$0xf]
      %v379 = vld [vmem:[%s223 + $0x58] sm:$0xf]
      %v380 = vld [vmem:[%s223 + $0x5c] sm:$0xf]
      %v381 = vld [vmem:[%s223 + $0x60] sm:$0xf]
      %v382 = vld [vmem:[%s223 + $0x64] sm:$0xf]
      %v383 = vld [vmem:[%s223 + $0x68] sm:$0xf]
      %v384 = vld [vmem:[%s223 + $0x6c] sm:$0xf]
      %v385 = vld [vmem:[%s223 + $0x70] sm:$0xf]
      %v386 = vld [vmem:[%s223 + $0x74] sm:$0xf]
      %v387 = vld [vmem:[%s223 + $0x78] sm:$0xf]
      %v388 = vld [vmem:[%s223 + $0x7c] sm:$0xf]
      %v389 = vld [vmem:[%s223 + $0x80] sm:$0xf]
      %v390 = vld [vmem:[%s223 + $0x84] sm:$0xf]
      %v391 = vld [vmem:[%s223 + $0x88] sm:$0xf]
      %v392 = vld [vmem:[%s223 + $0x8c] sm:$0xf]
      %v393 = vld [vmem:[%s223 + $0x90] sm:$0xf]
      %v394 = vld [vmem:[%s223 + $0x94] sm:$0xf]
      %v395 = vld [vmem:[%s223 + $0x98] sm:$0xf]
      %v396 = vld [vmem:[%s223 + $0x9c] sm:$0xf]
      %v397 = vld [vmem:[%s223 + $0xa0] sm:$0xf]
      %v398 = vld [vmem:[%s223 + $0xa4] sm:$0xf]
      %v399 = vld [vmem:[%s223 + $0xa8] sm:$0xf]
      %v400 = vld [vmem:[%s223 + $0xac] sm:$0xf]
      %v401 = vld [vmem:[%s223 + $0xb0] sm:$0xf]
      %v402 = vld [vmem:[%s223 + $0xb4] sm:$0xf]
      %v403 = vld [vmem:[%s223 + $0xb8] sm:$0xf]
      %v404 = vld [vmem:[%s223 + $0xbc] sm:$0xf]
      %v405 = vld [vmem:[%s223 + $0xc0] sm:$0xf]
      %v406 = vld [vmem:[%s223 + $0xc4] sm:$0xf]
      %v407 = vld [vmem:[%s223 + $0xc8] sm:$0xf]
      %v408 = vld [vmem:[%s223 + $0xcc] sm:$0xf]
      %v409 = vld [vmem:[%s223 + $0xd0] sm:$0xf]
      %v410 = vld [vmem:[%s223 + $0xd4] sm:$0xf]
      %v411 = vld [vmem:[%s223 + $0xd8] sm:$0xf]
      %v412 = vld [vmem:[%s223 + $0xdc] sm:$0xf]
      %v413 = vld [vmem:[%s223 + $0xe0] sm:$0xf]
      %v414 = vld [vmem:[%s223 + $0xe4] sm:$0xf]
      %v415 = vld [vmem:[%s223 + $0xe8] sm:$0xf]
      %v416 = vld [vmem:[%s223 + $0xec] sm:$0xf]
      %v417 = vld [vmem:[%s223 + $0xf0] sm:$0xf]
      %v418 = vld [vmem:[%s223 + $0xf4] sm:$0xf]
      %v419 = vld [vmem:[%s223 + $0xf8] sm:$0xf]
      %v420 = vld [vmem:[%s223 + $0xfc] sm:$0xf]
      %v421 = vld [vmem:[%s223 + $0x100] sm:$0xf]
      %v422 = vld [vmem:[%s223 + $0x104] sm:$0xf]
      %v423 = vld [vmem:[%s223 + $0x108] sm:$0xf]
      %v424 = vld [vmem:[%s223 + $0x10c] sm:$0xf]
      %v425 = vld [vmem:[%s223 + $0x110] sm:$0xf]
      %v426 = vld [vmem:[%s223 + $0x114] sm:$0xf]
      %v427 = vld [vmem:[%s223 + $0x118] sm:$0xf]
      %v428 = vld [vmem:[%s223 + $0x11c] sm:$0xf]
      %v429 = vld [vmem:[%s223 + $0x120] sm:$0xf]
      %v430 = vld [vmem:[%s223 + $0x124] sm:$0xf]
      %v431 = vld [vmem:[%s223 + $0x128] sm:$0xf]
      %v432 = vld [vmem:[%s223 + $0x12c] sm:$0xf]
      %v433 = vld [vmem:[%s223 + $0x130] sm:$0xf]
      %v434 = vld [vmem:[%s223 + $0x134] sm:$0xf]
      %v435 = vld [vmem:[%s223 + $0x138] sm:$0xf]
      %v436 = vld [vmem:[%s223 + $0x13c] sm:$0xf]
      %v437 = vld [vmem:[%s223 + $0x140] sm:$0xf]
      %v438 = vld [vmem:[%s223 + $0x144] sm:$0xf]
      %v439 = vld [vmem:[%s223 + $0x148] sm:$0xf]
      %v440 = vld [vmem:[%s223 + $0x14c] sm:$0xf]
      %v441 = vld [vmem:[%s223 + $0x150] sm:$0xf]
      %v442 = vld [vmem:[%s223 + $0x154] sm:$0xf]
      %v443 = vld [vmem:[%s223 + $0x158] sm:$0xf]
      %v444 = vld [vmem:[%s223 + $0x15c] sm:$0xf]
      %v445 = vld [vmem:[%s226] sm:$0x1]
      %v447 = vlaneseq
      %v448 = vshrl.u32 %v447, 7
      %v449 = vsub.s32 0, %v448
      %v450 = vrot.slane %v445, %v449
      %v540 = vunpack.c.l.b16 %v357
      %v541 = vunpack.c.l.b16 %v358
      %v542 = vunpack.c.l.b16 %v359
      %v543 = vunpack.c.l.b16 %v360
      %v544 = vunpack.c.l.b16 %v361
      %v545 = vunpack.c.l.b16 %v362
      %v546 = vunpack.c.l.b16 %v363
      %v547 = vunpack.c.l.b16 %v364
      %v548 = vunpack.c.l.b16 %v365
      %v549 = vunpack.c.l.b16 %v366
      %v550 = vunpack.c.l.b16 %v367
      %v551 = vunpack.c.l.b16 %v368
      %v552 = vunpack.c.l.b16 %v369
      %v553 = vunpack.c.l.b16 %v370
      %v554 = vunpack.c.l.b16 %v371
      %v555 = vunpack.c.l.b16 %v372
      %v556 = vunpack.c.l.b16 %v373
      %v557 = vunpack.c.l.b16 %v374
      %v558 = vunpack.c.l.b16 %v375
      %v559 = vunpack.c.l.b16 %v376
      %v560 = vunpack.c.l.b16 %v377
      %v561 = vunpack.c.l.b16 %v378
      %v562 = vunpack.c.l.b16 %v379
      %v563 = vunpack.c.l.b16 %v380
      %v564 = vunpack.c.l.b16 %v381
      %v565 = vunpack.c.l.b16 %v382
      %v566 = vunpack.c.l.b16 %v383
      %v567 = vunpack.c.l.b16 %v384
      %v568 = vunpack.c.l.b16 %v385
      %v569 = vunpack.c.l.b16 %v386
      %v570 = vunpack.c.l.b16 %v387
      %v571 = vunpack.c.l.b16 %v388
      %v572 = vunpack.c.l.b16 %v389
      %v573 = vunpack.c.l.b16 %v390
      %v574 = vunpack.c.l.b16 %v391
      %v575 = vunpack.c.l.b16 %v392
      %v576 = vunpack.c.l.b16 %v393
      %v577 = vunpack.c.l.b16 %v394
      %v578 = vunpack.c.l.b16 %v395
      %v579 = vunpack.c.l.b16 %v396
      %v580 = vunpack.c.l.b16 %v397
      %v581 = vunpack.c.l.b16 %v398
      %v582 = vunpack.c.l.b16 %v399
      %v583 = vunpack.c.l.b16 %v400
      %v584 = vunpack.c.l.b16 %v401
      %v585 = vunpack.c.l.b16 %v402
      %v586 = vunpack.c.l.b16 %v403
      %v587 = vunpack.c.l.b16 %v404
      %v588 = vunpack.c.l.b16 %v405
      %v589 = vunpack.c.l.b16 %v406
      %v590 = vunpack.c.l.b16 %v407
      %v591 = vunpack.c.l.b16 %v408
      %v592 = vunpack.c.l.b16 %v409
      %v593 = vunpack.c.l.b16 %v410
      %v594 = vunpack.c.l.b16 %v411
      %v595 = vunpack.c.l.b16 %v412
      %v596 = vunpack.c.l.b16 %v413
      %v597 = vunpack.c.l.b16 %v414
      %v598 = vunpack.c.l.b16 %v415
      %v599 = vunpack.c.l.b16 %v416
      %v600 = vunpack.c.l.b16 %v417
      %v601 = vunpack.c.l.b16 %v418
      %v602 = vunpack.c.l.b16 %v419
      %v603 = vunpack.c.l.b16 %v420
      %v604 = vunpack.c.l.b16 %v421
      %v605 = vunpack.c.l.b16 %v422
      %v606 = vunpack.c.l.b16 %v423
      %v607 = vunpack.c.l.b16 %v424
      %v608 = vunpack.c.l.b16 %v425
      %v609 = vunpack.c.l.b16 %v426
      %v610 = vunpack.c.l.b16 %v427
      %v611 = vunpack.c.l.b16 %v428
      %v612 = vunpack.c.l.b16 %v429
      %v613 = vunpack.c.l.b16 %v430
      %v614 = vunpack.c.l.b16 %v431
      %v615 = vunpack.c.l.b16 %v432
      %v616 = vunpack.c.l.b16 %v433
      %v617 = vunpack.c.l.b16 %v434
      %v618 = vunpack.c.l.b16 %v435
      %v619 = vunpack.c.l.b16 %v436
      %v620 = vunpack.c.l.b16 %v437
      %v621 = vunpack.c.l.b16 %v438
      %v622 = vunpack.c.l.b16 %v439
      %v623 = vunpack.c.l.b16 %v440
      %v624 = vunpack.c.l.b16 %v441
      %v625 = vunpack.c.l.b16 %v442
      %v626 = vunpack.c.l.b16 %v443
      %v627 = vunpack.c.l.b16 %v444
      %v628 = vpack.c.b16 %v541, %v540
      %v629 = vpack.c.b16 %v543, %v542
      %v630 = vpack.c.b16 %v545, %v544
      %v631 = vpack.c.b16 %v547, %v546
      %v632 = vpack.c.b16 %v549, %v548
      %v633 = vpack.c.b16 %v551, %v550
      %v634 = vpack.c.b16 %v553, %v552
      %v635 = vpack.c.b16 %v555, %v554
      %v636 = vpack.c.b16 %v557, %v556
      %v637 = vpack.c.b16 %v559, %v558
      %v638 = vpack.c.b16 %v561, %v560
      %v639 = vpack.c.b16 %v563, %v562
      %v640 = vpack.c.b16 %v565, %v564
      %v641 = vpack.c.b16 %v567, %v566
      %v642 = vpack.c.b16 %v569, %v568
      %v643 = vpack.c.b16 %v571, %v570
      %v644 = vpack.c.b16 %v573, %v572
      %v645 = vpack.c.b16 %v575, %v574
      %v646 = vpack.c.b16 %v577, %v576
      %v647 = vpack.c.b16 %v579, %v578
      %v648 = vpack.c.b16 %v581, %v580
      %v649 = vpack.c.b16 %v583, %v582
      %v650 = vpack.c.b16 %v585, %v584
      %v651 = vpack.c.b16 %v587, %v586
      %v652 = vpack.c.b16 %v589, %v588
      %v653 = vpack.c.b16 %v591, %v590
      %v654 = vpack.c.b16 %v593, %v592
      %v655 = vpack.c.b16 %v595, %v594
      %v656 = vpack.c.b16 %v597, %v596
      %v657 = vpack.c.b16 %v599, %v598
      %v658 = vpack.c.b16 %v601, %v600
      %v659 = vpack.c.b16 %v603, %v602
      %v660 = vpack.c.b16 %v605, %v604
      %v661 = vpack.c.b16 %v607, %v606
      %v662 = vpack.c.b16 %v609, %v608
      %v663 = vpack.c.b16 %v611, %v610
      %v664 = vpack.c.b16 %v613, %v612
      %v665 = vpack.c.b16 %v615, %v614
      %v666 = vpack.c.b16 %v617, %v616
      %v667 = vpack.c.b16 %v619, %v618
      %v668 = vpack.c.b16 %v621, %v620
      %v669 = vpack.c.b16 %v623, %v622
      %v670 = vpack.c.b16 %v625, %v624
      %v671 = vpack.c.b16 %v627, %v626
      %v717 = vsel %vm338, %v337, 0
      %719 = vmatprep.subr.bf16.mxu0 0
      %720 = vmatpush1.bf16.msra.mxu0 %v635
      %721 = vmatprep.subr.bf16.mxu0 0
      %722 = vmatpush1.bf16.msra.mxu0 %v634
      %723 = vmatprep.subr.bf16.mxu0 0
      %724 = vmatpush1.bf16.msra.mxu0 %v633
      %725 = vmatprep.subr.bf16.mxu0 0
      %726 = vmatpush1.bf16.msra.mxu0 %v632
      %727 = vmatprep.subr.bf16.mxu0 0
      %728 = vmatpush1.bf16.msra.mxu0 %v631
      %729 = vmatprep.subr.bf16.mxu0 0
      %730 = vmatpush1.bf16.msra.mxu0 %v630
      %731 = vmatprep.subr.bf16.mxu0 0
      %732 = vmatpush1.bf16.msra.mxu0 %v629
      %733 = vmatprep.subr.bf16.mxu0 0
      %734 = vmatpush1.bf16.msra.mxu0 %v628
      %735 = vmatprep.subr.bf16.mxu0 0
      %736 = vmatpush2.bf16.msra.mxu0 %v643
      %737 = vmatprep.subr.bf16.mxu0 0
      %738 = vmatpush2.bf16.msra.mxu0 %v642
      %739 = vmatprep.subr.bf16.mxu0 0
      %740 = vmatpush2.bf16.msra.mxu0 %v641
      %741 = vmatprep.subr.bf16.mxu0 0
      %742 = vmatpush2.bf16.msra.mxu0 %v640
      %743 = vmatprep.subr.bf16.mxu0 0
      %744 = vmatpush2.bf16.msra.mxu0 %v639
      %745 = vmatprep.subr.bf16.mxu0 0
      %746 = vmatpush2.bf16.msra.mxu0 %v638
      %747 = vmatprep.subr.bf16.mxu0 0
      %748 = vmatpush2.bf16.msra.mxu0 %v637
      %749 = vmatprep.subr.bf16.mxu0 0
      %750 = vmatpush2.bf16.msra.mxu0 %v636
      %751 = vmatprep.mubr.bf16.mxu0 %v344
      %752 = vmatmul.mubr.bf16.gmra.mxu0 %v340
      %v753 = vpop.f32.mrf.mxu0
      %v754 = vadd.f32 %v450, %v753
      %v755 = vpop.f32.mrf.mxu0
      %v756 = vpop.f32.mrf.mxu0
      %v757 = vadd.f32 %v450, %v756
      %v758 = vpop.f32.mrf.mxu0
      %759 = vdwg.mxu0
      %760 = vmatprep.subr.bf16.mxu0 0
      %761 = vmatpush1.bf16.msra.mxu0 %v651
      %762 = vmatprep.subr.bf16.mxu0 0
      %763 = vmatpush1.bf16.msra.mxu0 %v650
      %764 = vmatprep.subr.bf16.mxu0 0
      %765 = vmatpush1.bf16.msra.mxu0 %v649
      %766 = vmatprep.subr.bf16.mxu0 0
      %767 = vmatpush1.bf16.msra.mxu0 %v648
      %768 = vmatprep.subr.bf16.mxu0 0
      %769 = vmatpush1.bf16.msra.mxu0 %v647
      %770 = vmatprep.subr.bf16.mxu0 0
      %771 = vmatpush1.bf16.msra.mxu0 %v646
      %772 = vmatprep.subr.bf16.mxu0 0
      %773 = vmatpush1.bf16.msra.mxu0 %v645
      %774 = vmatprep.subr.bf16.mxu0 0
      %775 = vmatpush1.bf16.msra.mxu0 %v644
      %776 = vmatprep.subr.bf16.mxu0 0
      %777 = vmatpush2.bf16.msra.mxu0 %v659
      %778 = vmatprep.subr.bf16.mxu0 0
      %779 = vmatpush2.bf16.msra.mxu0 %v658
      %780 = vmatprep.subr.bf16.mxu0 0
      %781 = vmatpush2.bf16.msra.mxu0 %v657
      %782 = vmatprep.subr.bf16.mxu0 0
      %783 = vmatpush2.bf16.msra.mxu0 %v656
      %784 = vmatprep.subr.bf16.mxu0 0
      %785 = vmatpush2.bf16.msra.mxu0 %v655
      %786 = vmatprep.subr.bf16.mxu0 0
      %787 = vmatpush2.bf16.msra.mxu0 %v654
      %788 = vmatprep.subr.bf16.mxu0 0
      %789 = vmatpush2.bf16.msra.mxu0 %v653
      %790 = vmatprep.subr.bf16.mxu0 0
      %791 = vmatpush2.bf16.msra.mxu0 %v652
      %792 = vmatprep.mubr.bf16.mxu0 %v352
      %793 = vmatmul.mubr.bf16.gmra.mxu0 %v348
      %v794 = vpop.f32.mrf.mxu0
      %v795 = vadd.f32 %v754, %v794
      %v796 = vpop.f32.mrf.mxu0
      %v797 = vpop.f32.mrf.mxu0
      %v798 = vadd.f32 %v757, %v797
      %v799 = vpop.f32.mrf.mxu0
      %800 = vdwg.mxu0
      %801 = vmatprep.subr.bf16.mxu0 0
      %802 = vmatpush1.bf16.msra.mxu0 %v667
      %803 = vmatprep.subr.bf16.mxu0 0
      %804 = vmatpush1.bf16.msra.mxu0 %v666
      %805 = vmatprep.subr.bf16.mxu0 0
      %806 = vmatpush1.bf16.msra.mxu0 %v665
      %807 = vmatprep.subr.bf16.mxu0 0
      %808 = vmatpush1.bf16.msra.mxu0 %v664
      %809 = vmatprep.subr.bf16.mxu0 0
      %810 = vmatpush1.bf16.msra.mxu0 %v663
      %811 = vmatprep.subr.bf16.mxu0 0
      %812 = vmatpush1.bf16.msra.mxu0 %v662
      %813 = vmatprep.subr.bf16.mxu0 0
      %814 = vmatpush1.bf16.msra.mxu0 %v661
      %815 = vmatprep.subr.bf16.mxu0 0
      %816 = vmatpush1.bf16.msra.mxu0 %v660
      %817 = vmatprep.subr.bf16.mxu0 0
      %818 = vmatpush2.bf16.msra.mxu0 0
      %819 = vmatprep.subr.bf16.mxu0 0
      %820 = vmatpush2.bf16.msra.mxu0 0
      %821 = vmatprep.subr.bf16.mxu0 0
      %822 = vmatpush2.bf16.msra.mxu0 0
      %823 = vmatprep.subr.bf16.mxu0 0
      %824 = vmatpush2.bf16.msra.mxu0 0
      %825 = vmatprep.subr.bf16.mxu0 0
      %826 = vmatpush2.bf16.msra.mxu0 %v671
      %827 = vmatprep.subr.bf16.mxu0 0
      %828 = vmatpush2.bf16.msra.mxu0 %v670
      %829 = vmatprep.subr.bf16.mxu0 0
      %830 = vmatpush2.bf16.msra.mxu0 %v669
      %831 = vmatprep.subr.bf16.mxu0 0
      %832 = vmatpush2.bf16.msra.mxu0 %v668
      %833 = vmatprep.mubr.bf16.mxu0 %v717
      %834 = vmatmul.mubr.bf16.gmra.mxu0 %v355
      %v835 = vpop.f32.mrf.mxu0
      %v836 = vadd.f32 %v795, %v835
      %v837 = vpop.f32.mrf.mxu0
      %v838 = vpop.f32.mrf.mxu0
      %v839 = vadd.f32 %v798, %v838
      %v840 = vpop.f32.mrf.mxu0
      %841 = vdwg.mxu0
      %v842 = vmax.f32 %v836, 0.0
      %v843 = vmax.f32 %v839, 0.0
      %v844 = vpack.c.bf16 %v843, %v842
      %v846 = vunpack.c.l.b16 %v844
      %v847 = vunpack.c.h.b16 %v844
      %v848 = vpack.c.b16 %v846, %v846
      %v849 = vpack.c.b16 %v847, %v847
      %vm852 = vcmask 519168
      %853 = vst.msk [vmem:[%s238] sm:$0xf] %vm852, %v848
      %854 = vst.msk [vmem:[%s238 + $0x4] sm:$0xf] %vm852, %v849
      %s855 = smul.u32 2, %s21
      %p856 = scmp.lt.s32.totalorder %s19, 1
      %s857 = scalar_select %p856, %s19, 1
      %p858 = scmp.lt.s32.totalorder %s855, 3
      %s859 = scalar_select %p858, %s855, 3
      %p860 = scmp.lt.s32.totalorder %s20, 0
      %s861 = scalar_select %p860, %s20, 0
      %s862 = sadd.s32 %s861, %s859
      %s863 = smul.addr %s857, 4
      %s864 = sadd.s32 %s862, %s863
      %s865 = smul.addr %s864, 4
      %s866 = scalar_lea.vmem %s3, %s865
      // Predicated region
      $region33: #{citrinet_block_forward.7} parent=31 // pred_check
        %p867 = pneg %p133
      $region34: #{citrinet_block_forward.7} parent=31 // pred_check_branch
        %869 = sbr.rel (%p867) target = $region36
      $region35: #{citrinet_block_forward.7} parent=31 // pred_region
        %s870 = smul.u32 2, %s21
      $region36: #{citrinet_block_forward.7} parent=31 // pred_fallthru
        _
    $region32: #{citrinet_block_forward.7} parent=5 // pred_fallthru
      _
    %p871 = scmp.le.s32.totalorder 2, %s9
    // Predicated region
    $region37: #{citrinet_block_forward.7} parent=5 // pred_check
      %p872 = pneg %p871
    $region38: #{citrinet_block_forward.7} parent=5 // pred_check_branch
      %874 = sbr.rel (%p872) target = $region40
    $region39: #{citrinet_block_forward.7} parent=5 // pred_region
      %s875 = ssub.s32 %s9, 2
      // Predicated region
      $region41: #{citrinet_block_forward.7} parent=39 // pred_check
        %p876 = pneg %p139
      $region42: #{citrinet_block_forward.7} parent=39 // pred_check_branch
        %878 = sbr.rel (%p876) target = $region44
      $region43: #{citrinet_block_forward.7} parent=39 // pred_region
        %s879 = smul.u32 2, %s24
        %p880 = scmp.lt.s32.totalorder %s22, 1
        %s881 = scalar_select %p880, %s22, 1
        %p882 = scmp.lt.s32.totalorder %s879, 3
        %s883 = scalar_select %p882, %s879, 3
        %p884 = scmp.lt.s32.totalorder %s23, 0
        %s885 = scalar_select %p884, %s23, 0
        %s886 = sadd.s32 %s885, %s883
        %s887 = smul.addr %s881, 4
        %s888 = sadd.s32 %s886, %s887
        %s889 = smul.addr %s888, 4
        %s890 = scalar_lea.vmem %s3, %s889
      $region44: #{citrinet_block_forward.7} parent=39 // pred_fallthru
        _
    $region40: #{citrinet_block_forward.7} parent=5 // pred_fallthru
      _
  $region6: #{citrinet_block_forward.7} parent=0 // loop_footer
    %s13 = sadd.s32 1, %s9
  $region7: #{citrinet_block_forward.7} parent=0 // loop_footer_branch
    %8 = sbr.rel target = $region3
  $region8: #{citrinet_block_forward.7} parent=0 // loop_exit
    _

// kernel: citrinet_block_forward.10
$region0: #{citrinet_block_forward.10}
  #allocation0 [shape = 'u32[]', space=smem, size = 0x4, offset = 0x4, fixed_abs, tag = 'smem constant byte address 0x4 - core index']
  #allocation1 [shape = 'u32[144,128]{1,0:T(1,128)}', space=vmem, size = 0x12000, scoped, tag = 'internal scratch']
  %s0 = inlined_call_operand.vmem [shape: bf16[2,42,64], index: 0, kind: input, shape index: {}]
  %s1 = inlined_call_operand.vmem [shape: bf16[704,64], index: 1, kind: input, shape index: {}]
  %s2 = inlined_call_operand.vmem [shape: f32[1,64], index: 2, kind: input, shape index: {}]
  %s3 = inlined_call_operand.vmem [shape: bf16[2,32,64], index: 3, kind: output, shape index: {0}]
  %s4 = inlined_call_operand.vmem [shape: f32[2,1,64], index: 4, kind: output, shape index: {1}]
  %5 = xla_tuple %s3, %s4
  %s6 = sld [smem:[#allocation0]]
  $region57: #{citrinet_block_forward.10} parent=0
    _
  %s8 = ssub.s32 1, %s6
  %s9 = scalar_select 0, %s8, %s6
  loop: start=0, step=1, limit=6
  $region2: #{citrinet_block_forward.10} parent=0 // loop_pre_header
    _
  $region3: #{citrinet_block_forward.10} parent=0 // loop_header
    %s11 = sphi 0, %s15
    %p12 = scmp.ge.s32.totalorder %s11, 6
    %s18 = sphi 0, %s37
    %s19 = sphi 0, %s33
    %s20 = sphi 0, %s29
    %s21 = sphi 0, %s18
    %s22 = sphi 0, %s19
    %s23 = sphi 0, %s20
    %s24 = sphi 0, %s21
    %s25 = sphi 0, %s22
    %s26 = sphi 0, %s23
    %s40 = sphi 0, %s42
    %s43 = sphi 0, %s40
    %s44 = sphi 0, %s43
    %s60 = sphi 0, %s44
    %s66 = sphi 0, %s68
    %s69 = sphi 0, %s66
    %s70 = sphi 0, %s69
    %s86 = sphi 0, %s70
    %s92 = sphi 0, %s94
    %s95 = sphi 0, %s92
    %s96 = sphi 0, %s95
    %s112 = sphi 0, %s96
    %s122 = sphi 0, %s124
    %s125 = sphi 0, %s122
    %s126 = sphi 0, %s125
    %s142 = sphi 0, %s126
    %s150 = sphi 0, %s152
    %s153 = sphi 0, %s150
    %s154 = sphi 0, %s153
    %s170 = sphi 0, %s154
  $region4: #{citrinet_block_forward.10} parent=0 // loop_header_branch
    %14 = sbr.rel (%p12) target = $region8
  $region5: #{citrinet_block_forward.10} parent=0 // loop_body
    %s16 = ssub.s32 %s11, 1
    %s17 = ssub.s32 %s11, 2
    %s27 = sadd.s32 1, %s20
    %p28 = scmp.ge.s32.totalorder %s27, 2
    %s29 = scalar_select %p28, 0, %s27
    %s30 = sadd.s32 1, %s19
    %s31 = scalar_select %p28, %s30, %s19
    %p32 = scmp.ge.s32.totalorder %s31, 1
    %s33 = scalar_select %p32, 0, %s31
    %s34 = sadd.s32 1, %s18
    %s35 = scalar_select %p32, %s34, %s18
    %p36 = scmp.ge.s32.totalorder %s35, 2
    %s37 = scalar_select %p36, 0, %s35
    %s38 = ssub.s32 %s18, %s37
    %p39 = scmp.eq.s32.totalorder %s38, 0
    %s41 = sadd.s32 %s40, 1
    %s42 = scalar_select %p39, %s40, %s41
    %p45 = pneg %p39
    %p46 = scmp.eq.s32.totalorder %s11, 3
    %p47 = por %p45, %p46
    %p48 = scmp.ne.s32.totalorder %s40, %s43
    %p49 = scmp.eq.s32.totalorder %s11, 0
    %p50 = por %p48, %p49
    %p51 = scmp.ne.s32.totalorder %s40, %s43
    %p52 = scmp.eq.s32.totalorder %s16, 3
    %p53 = por %p51, %p52
    %p54 = scmp.ne.s32.totalorder %s43, %s44
    %p55 = scmp.eq.s32.totalorder %s16, 0
    %p56 = por %p54, %p55
    %p57 = scmp.ne.s32.totalorder %s43, %s44
    %p58 = scmp.eq.s32.totalorder %s17, 3
    %p59 = por %p57, %p58
    %p61 = scmp.ne.s32.totalorder %s44, %s60
    %p62 = scmp.eq.s32.totalorder %s17, 0
    %p63 = por %p61, %p62
    %s64 = ssub.s32 %s19, %s33
    %p65 = scmp.eq.s32.totalorder %s64, 0
    %s67 = sadd.s32 %s66, 1
    %s68 = scalar_select %p65, %s66, %s67
    %p71 = pneg %p65
    %p72 = scmp.eq.s32.totalorder %s11, 3
    %p73 = por %p71, %p72
    %p74 = scmp.ne.s32.totalorder %s66, %s69
    %p75 = scmp.eq.s32.totalorder %s11, 0
    %p76 = por %p74, %p75
    %p77 = scmp.ne.s32.totalorder %s66, %s69
    %p78 = scmp.eq.s32.totalorder %s16, 3
    %p79 = por %p77, %p78
    %p80 = scmp.ne.s32.totalorder %s69, %s70
    %p81 = scmp.eq.s32.totalorder %s16, 0
    %p82 = por %p80, %p81
    %p83 = scmp.ne.s32.totalorder %s69, %s70
    %p84 = scmp.eq.s32.totalorder %s17, 3
    %p85 = por %p83, %p84
    %p87 = scmp.ne.s32.totalorder %s70, %s86
    %p88 = scmp.eq.s32.totalorder %s17, 0
    %p89 = por %p87, %p88
    %s90 = ssub.s32 %s19, %s33
    %p91 = scmp.eq.s32.totalorder %s90, 0
    %s93 = sadd.s32 %s92, 1
    %s94 = scalar_select %p91, %s92, %s93
    %p97 = pneg %p91
    %p98 = scmp.eq.s32.totalorder %s11, 3
    %p99 = por %p97, %p98
    %p100 = scmp.ne.s32.totalorder %s92, %s95
    %p101 = scmp.eq.s32.totalorder %s11, 0
    %p102 = por %p100, %p101
    %p103 = scmp.ne.s32.totalorder %s92, %s95
    %p104 = scmp.eq.s32.totalorder %s16, 3
    %p105 = por %p103, %p104
    %p106 = scmp.ne.s32.totalorder %s95, %s96
    %p107 = scmp.eq.s32.totalorder %s16, 0
    %p108 = por %p106, %p107
    %p109 = scmp.ne.s32.totalorder %s95, %s96
    %p110 = scmp.eq.s32.totalorder %s17, 3
    %p111 = por %p109, %p110
    %p113 = scmp.ne.s32.totalorder %s96, %s112
    %p114 = scmp.eq.s32.totalorder %s17, 0
    %p115 = por %p113, %p114
    %s116 = ssub.s32 %s18, %s37
    %s117 = ssub.s32 %s20, %s29
    %s118 = sor.u32 %s116, %s117
    %s119 = ssub.s32 %s19, %s33
    %s120 = sor.u32 %s118, %s119
    %p121 = scmp.eq.s32.totalorder %s120, 0
    %s123 = sadd.s32 %s122, 1
    %s124 = scalar_select %p121, %s122, %s123
    %p127 = pneg %p121
    %p128 = scmp.eq.s32.totalorder %s11, 3
    %p129 = por %p127, %p128
    %p130 = scmp.ne.s32.totalorder %s122, %s125
    %p131 = scmp.eq.s32.totalorder %s11, 0
    %p132 = por %p130, %p131
    %p133 = scmp.ne.s32.totalorder %s122, %s125
    %p134 = scmp.eq.s32.totalorder %s16, 3
    %p135 = por %p133, %p134
    %p136 = scmp.ne.s32.totalorder %s125, %s126
    %p137 = scmp.eq.s32.totalorder %s16, 0
    %p138 = por %p136, %p137
    %p139 = scmp.ne.s32.totalorder %s125, %s126
    %p140 = scmp.eq.s32.totalorder %s17, 3
    %p141 = por %p139, %p140
    %p143 = scmp.ne.s32.totalorder %s126, %s142
    %p144 = scmp.eq.s32.totalorder %s17, 0
    %p145 = por %p143, %p144
    %s146 = ssub.s32 %s18, %s37
    %s147 = ssub.s32 %s19, %s33
    %s148 = sor.u32 %s146, %s147
    %p149 = scmp.eq.s32.totalorder %s148, 0
    %s151 = sadd.s32 %s150, 1
    %s152 = scalar_select %p149, %s150, %s151
    %p155 = pneg %p149
    %p156 = scmp.eq.s32.totalorder %s11, 3
    %p157 = por %p155, %p156
    %p158 = scmp.ne.s32.totalorder %s150, %s153
    %p159 = scmp.eq.s32.totalorder %s11, 0
    %p160 = por %p158, %p159
    %p161 = scmp.ne.s32.totalorder %s150, %s153
    %p162 = scmp.eq.s32.totalorder %s16, 3
    %p163 = por %p161, %p162
    %p164 = scmp.ne.s32.totalorder %s153, %s154
    %p165 = scmp.eq.s32.totalorder %s16, 0
    %p166 = por %p164, %p165
    %p167 = scmp.ne.s32.totalorder %s153, %s154
    %p168 = scmp.eq.s32.totalorder %s17, 3
    %p169 = por %p167, %p168
    %p171 = scmp.ne.s32.totalorder %s154, %s170
    %p172 = scmp.eq.s32.totalorder %s17, 0
    %p173 = por %p171, %p172
    %p174 = scmp.le.s32.totalorder 1, %s11
    %p175 = scmp.lt.s32.totalorder %s11, 5
    %p176 = pnand %p174, %p175
    %p177 = pneg %p176
    // Predicated region
    $region9: #{citrinet_block_forward.10} parent=5 // pred_check
      _
    $region10: #{citrinet_block_forward.10} parent=5 // pred_check_branch
      %179 = sbr.rel (%p176) target = $region12
    $region11: #{citrinet_block_forward.10} parent=5 // pred_region
      %s180 = ssub.s32 %s11, 1
      // Predicated region
      $region13: #{citrinet_block_forward.10} parent=11 // pred_check
        %p181 = pneg %p82
      $region14: #{citrinet_block_forward.10} parent=11 // pred_check_branch
        %183 = sbr.rel (%p181) target = $region16
      $region15: #{citrinet_block_forward.10} parent=11 // pred_region
        %p184 = scmp.lt.s32.totalorder %s22, 0
        %s185 = scalar_select %p184, %s22, 0
        %s186 = smul.addr %s185, 4
        %s187 = scalar_lea.vmem %s1, %s186
      $region16: #{citrinet_block_forward.10} parent=11 // pred_fallthru
        _
      // Predicated region
      $region17: #{citrinet_block_forward.10} parent=11 // pred_check
        %p188 = pneg %p108
      $region18: #{citrinet_block_forward.10} parent=11 // pred_check_branch
        %190 = sbr.rel (%p188) target = $region20
      $region19: #{citrinet_block_forward.10} parent=11 // pred_region
        %p191 = scmp.lt.s32.totalorder %s22, 0
        %s192 = scalar_select %p191, %s22, 0
        %s193 = scalar_lea.vmem %s2, %s192
      $region20: #{citrinet_block_forward.10} parent=11 // pred_fallthru
        _
    $region12: #{citrinet_block_forward.10} parent=5 // pred_fallthru
      _
    %p194 = scmp.lt.s32.totalorder %s11, 4
    // Predicated region
    $region21: #{citrinet_block_forward.10} parent=5 // pred_check
      %p195 = pneg %p194
    $region22: #{citrinet_block_forward.10} parent=5 // pred_check_branch
      %197 = sbr.rel (%p195) target = $region24
    $region23: #{citrinet_block_forward.10} parent=5 // pred_region
      // Predicated region
      $region25: #{citrinet_block_forward.10} parent=23 // pred_check
        %p198 = pneg %p50
      $region26: #{citrinet_block_forward.10} parent=23 // pred_check_branch
        %200 = sbr.rel (%p198) target = $region28
      $region27: #{citrinet_block_forward.10} parent=23 // pred_region
        %p201 = scmp.lt.s32.totalorder %s18, 1
        %s202 = scalar_select %p201, %s18, 1
        %s203 = smul.addr %s202, 6
        %s204 = smul.addr %s203, 4
        %s205 = scalar_lea.vmem %s0, %s204
      $region28: #{citrinet_block_forward.10} parent=23 // pred_fallthru
        _
    $region24: #{citrinet_block_forward.10} parent=5 // pred_fallthru
      _
    %p206 = scmp.le.s32.totalorder 1, %s11
    %p207 = scmp.lt.s32.totalorder %s11, 5
    %p208 = pnand %p206, %p207
    %p209 = pneg %p208
    // Predicated region
    $region29: #{citrinet_block_forward.10} parent=5 // pred_check
      _
    $region30: #{citrinet_block_forward.10} parent=5 // pred_check_branch
      %211 = sbr.rel (%p208) target = $region32
    $region31: #{citrinet_block_forward.10} parent=5 // pred_region
      %s212 = ssub.s32 %s11, 1
      %p213 = scmp.lt.s32.totalorder %s21, 1
      %s214 = scalar_select %p213, %s21, 1
      %s215 = smul.addr %s214, 6
      %s216 = smul.addr %s215, 4
      %s217 = scalar_lea.vmem %s0, %s216
      %p218 = pneg %p56
      %p219 = pneg %p53
      %p220 = scmp.lt.s32.totalorder %s22, 0
      %s221 = scalar_select %p220, %s22, 0
      %s222 = smul.addr %s221, 4
      %s223 = scalar_lea.vmem %s1, %s222
      %p224 = pneg %p82
      %p225 = pneg %p79
      %p226 = scmp.lt.s32.totalorder %s22, 0
      %s227 = scalar_select %p226, %s22, 0
      %s228 = scalar_lea.vmem %s2, %s227
      %p229 = pneg %p108
      %p230 = pneg %p105
      %p231 = pneg %p138
      %p232 = pneg %p135
      %s233 = smul.u32 2, %s23
      %p234 = scmp.lt.s32.totalorder %s21, 1
      %s235 = scalar_select %p234, %s21, 1
      %p236 = scmp.lt.s32.totalorder %s233, 3
      %s237 = scalar_select %p236, %s233, 3
      %p238 = scmp.lt.s32.totalorder %s22, 0
      %s239 = scalar_select %p238, %s22, 0
      %s240 = sadd.s32 %s239, %s237
      %s241 = smul.addr %s235, 4
      %s242 = sadd.s32 %s240, %s241
      %s243 = smul.addr %s242, 4
      %s244 = scalar_lea.vmem %s3, %s243
      %p245 = pneg %p166
      %p246 = pneg %p163
      %p247 = scmp.lt.s32.totalorder %s21, 1
      %s248 = scalar_select %p247, %s21, 1
      %p249 = scmp.lt.s32.totalorder %s22, 0
      %s250 = scalar_select %p249, %s22, 0
      %s251 = sadd.s32 %s250, %s248
      %s252 = scalar_lea.vmem %s4, %s251
      %p253 = scmp.lt.s32.totalorder %s21, 1
      %s254 = scalar_select %p253, %s21, 1
      %s255 = smul.addr %s254, 6
      %s256 = smul.addr %s255, 4
      %s257 = scalar_lea.vmem %s0, %s256
      %p258 = scmp.lt.s32.totalorder %s22, 0
      %s259 = scalar_select %p258, %s22, 0
      %s260 = smul.addr %s259, 4
      %s261 = scalar_lea.vmem %s1, %s260
      %p262 = scmp.lt.s32.totalorder %s22, 0
      %s263 = scalar_select %p262, %s22, 0
      %s264 = scalar_lea.vmem %s2, %s263
      %s265 = smul.u32 2, %s23
      %p266 = scmp.lt.s32.totalorder %s21, 1
      %s267 = scalar_select %p266, %s21, 1
      %p268 = scmp.lt.s32.totalorder %s265, 3
      %s269 = scalar_select %p268, %s265, 3
      %p270 = scmp.lt.s32.totalorder %s22, 0
      %s271 = scalar_select %p270, %s22, 0
      %s272 = sadd.s32 %s271, %s269
      %s273 = smul.addr %s267, 4
      %s274 = sadd.s32 %s272, %s273
      %s275 = smul.addr %s274, 4
      %s276 = scalar_lea.vmem %s3, %s275
      %s277 = smul.u32 2, %s23
      %p278 = scmp.lt.s32.totalorder %s21, 1
      %s279 = scalar_select %p278, %s21, 1
      %p280 = scmp.lt.s32.totalorder %s22, 0
      %s281 = scalar_select %p280, %s22, 0
      %s282 = sadd.s32 %s281, %s279
      %s283 = scalar_lea.vmem %s4, %s282
      %s285 = smul.u32 %s23, 16
      %s286 = sshra.s32 %s285, 3
      %s287 = sand.u32 %s285, 7
      %s288 = smul.addr %s286, 4
      %s289 = scalar_lea.vmem %s257, %s288
      %v290 = vld [vmem:[%s289] sm:$0xf]
      %v291 = vld [vmem:[%s289 + $0x4] sm:$0xf]
      %v292 = vld [vmem:[%s289 + $0x8] sm:$0xf]
      %v293 = vld [vmem:[%s289 + $0xc] sm:$0x1]
      %v296 = vunpack.c.l.b16 %v290
      %v297 = vunpack.c.l.b16 %v291
      %v298 = vpack.c.b16 %v297, %v296
      %v300 = vunpack.c.l.b16 %v292
      %v301 = vpack.c.b16 %v300, %v300
      %vm302 = vsmask.f32 7424
      %v304 = vshrl.u32 %v298, 16
      %v306 = vshll.u32 %v298, 16
      %v308 = vrot.slane %v306, 1
      %v309 = vor.u32 %v304, %v308
      %v311 = vshll.u32 %v301, 16
      %v313 = vrot.slane %v311, 1
      %v314 = vsel %vm302, %v309, %v313
      %315 = vrot.lane.b32.xlu0 %v314, 64
      %v316 = vpop.permute.xlu0 %315
      %vm317 = vcmask 1046528
      %v318 = vrot.slane %v298, 1
      %v319 = vrot.slane %v301, 1
      %v320 = vsel %vm317, %v318, %v319
      %vm321 = vsmask.f32 6400
      %v322 = vrot.slane %v304, 1
      %v323 = vrot.slane %v306, 2
      %v324 = vor.u32 %v322, %v323
      %v325 = vshrl.u32 %v301, 16
      %v327 = vrot.slane %v325, 1
      %v328 = vrot.slane %v311, 2
      %v329 = vor.u32 %v327, %v328
      %v330 = vsel %vm321, %v324, %v329
      %331 = vrot.lane.b32.xlu0 %v330, 64
      %v332 = vpop.permute.xlu0 %331
      %vm333 = vcmask 1045504
      %v334 = vrot.slane %v298, 2
      %v335 = vrot.slane %v301, 2
      %v336 = vsel %vm333, %v334, %v335
      %vm337 = vsmask.f32 5376
      %v338 = vrot.slane %v304, 2
      %v339 = vrot.slane %v306, 3
      %v340 = vor.u32 %v338, %v339
      %v341 = vrot.slane %v325, 2
      %v342 = vrot.slane %v311, 3
      %v343 = vor.u32 %v341, %v342
      %v344 = vsel %vm337, %v340, %v343
      %345 = vrot.lane.b32.xlu0 %v344, 64
      %v346 = vpop.permute.xlu0 %345
      %vm347 = vcmask 1044480
      %v348 = vrot.slane %v298, 3
      %v349 = vrot.slane %v301, 3
      %v350 = vsel %vm347, %v348, %v349
      %vm351 = vsmask.f32 4352
      %v352 = vrot.slane %v304, 3
      %v353 = vrot.slane %v306, 4
      %v354 = vor.u32 %v352, %v353
      %v355 = vrot.slane %v325, 3
      %v356 = vrot.slane %v311, 4
      %v357 = vor.u32 %v355, %v356
      %v358 = vsel %vm351, %v354, %v357
      %359 = vrot.lane.b32.xlu0 %v358, 64
      %v360 = vpop.permute.xlu0 %359
      %v361 = vpack.c.b16 %v300, %v297
      %v363 = vunpack.c.l.b16 %v293
      %v364 = vpack.c.b16 %v363, %v363
      %v366 = vshrl.u32 %v361, 16
      %v368 = vshll.u32 %v361, 16
      %v370 = vrot.slane %v368, 1
      %v371 = vor.u32 %v366, %v370
      %v373 = vshll.u32 %v364, 16
      %v375 = vrot.slane %v373, 1
      %v376 = vsel %vm302, %v371, %v375
      %377 = vrot.lane.b32.xlu0 %v376, 64
      %v378 = vpop.permute.xlu0 %377
      %v379 = vrot.slane %v361, 1
      %v380 = vrot.slane %v364, 1
      %v381 = vsel %vm317, %v379, %v380
      %vm382 = vcmask 523264
      %v384 = vsel %vm382, %v298, %v316
      %v388 = vsel %vm382, %v320, %v332
      %v392 = vsel %vm382, %v336, %v346
      %v396 = vsel %vm382, %v350, %v360
      %v399 = vsel %vm382, %v361, %v378
      %v401 = vld [vmem:[%s261] sm:$0xf]
      %v402 = vld [vmem:[%s261 + $0x4] sm:$0xf]
      %v403 = vld [vmem:[%s261 + $0x8] sm:$0xf]
      %v404 = vld [vmem:[%s261 + $0xc] sm:$0xf]
      %v405 = vld [vmem:[%s261 + $0x10] sm:$0xf]
      %v406 = vld [vmem:[%s261 + $0x14] sm:$0xf]
      %v407 = vld [vmem:[%s261 + $0x18] sm:$0xf]
      %v408 = vld [vmem:[%s261 + $0x1c] sm:$0xf]
      %v409 = vld [vmem:[%s261 + $0x20] sm:$0xf]
      %v410 = vld [vmem:[%s261 + $0x24] sm:$0xf]
      %v411 = vld [vmem:[%s261 + $0x28] sm:$0xf]
      %v412 = vld [vmem:[%s261 + $0x2c] sm:$0xf]
      %v413 = vld [vmem:[%s261 + $0x30] sm:$0xf]
      %v414 = vld [vmem:[%s261 + $0x34] sm:$0xf]
      %v415 = vld [vmem:[%s261 + $0x38] sm:$0xf]
      %v416 = vld [vmem:[%s261 + $0x3c] sm:$0xf]
      %v417 = vld [vmem:[%s261 + $0x40] sm:$0xf]
      %v418 = vld [vmem:[%s261 + $0x44] sm:$0xf]
      %v419 = vld [vmem:[%s261 + $0x48] sm:$0xf]
      %v420 = vld [vmem:[%s261 + $0x4c] sm:$0xf]
      %v421 = vld [vmem:[%s261 + $0x50] sm:$0xf]
      %v422 = vld [vmem:[%s261 + $0x54] sm:$0xf]
      %v423 = vld [vmem:[%s261 + $0x58] sm:$0xf]
      %v424 = vld [vmem:[%s261 + $0x5c] sm:$0xf]
      %v425 = vld [vmem:[%s261 + $0x60] sm:$0xf]
      %v426 = vld [vmem:[%s261 + $0x64] sm:$0xf]
      %v427 = vld [vmem:[%s261 + $0x68] sm:$0xf]
      %v428 = vld [vmem:[%s261 + $0x6c] sm:$0xf]
      %v429 = vld [vmem:[%s261 + $0x70] sm:$0xf]
      %v430 = vld [vmem:[%s261 + $0x74] sm:$0xf]
      %v431 = vld [vmem:[%s261 + $0x78] sm:$0xf]
      %v432 = vld [vmem:[%s261 + $0x7c] sm:$0xf]
      %v433 = vld [vmem:[%s261 + $0x80] sm:$0xf]
      %v434 = vld [vmem:[%s261 + $0x84] sm:$0xf]
      %v435 = vld [vmem:[%s261 + $0x88] sm:$0xf]
      %v436 = vld [vmem:[%s261 + $0x8c] sm:$0xf]
      %v437 = vld [vmem:[%s261 + $0x90] sm:$0xf]
      %v438 = vld [vmem:[%s261 + $0x94] sm:$0xf]
      %v439 = vld [vmem:[%s261 + $0x98] sm:$0xf]
      %v440 = vld [vmem:[%s261 + $0x9c] sm:$0xf]
      %v441 = vld [vmem:[%s261 + $0xa0] sm:$0xf]
      %v442 = vld [vmem:[%s261 + $0xa4] sm:$0xf]
      %v443 = vld [vmem:[%s261 + $0xa8] sm:$0xf]
      %v444 = vld [vmem:[%s261 + $0xac] sm:$0xf]
      %v445 = vld [vmem:[%s261 + $0xb0] sm:$0xf]
      %v446 = vld [vmem:[%s261 + $0xb4] sm:$0xf]
      %v447 = vld [vmem:[%s261 + $0xb8] sm:$0xf]
      %v448 = vld [vmem:[%s261 + $0xbc] sm:$0xf]
      %v449 = vld [vmem:[%s261 + $0xc0] sm:$0xf]
      %v450 = vld [vmem:[%s261 + $0xc4] sm:$0xf]
      %v451 = vld [vmem:[%s261 + $0xc8] sm:$0xf]
      %v452 = vld [vmem:[%s261 + $0xcc] sm:$0xf]
      %v453 = vld [vmem:[%s261 + $0xd0] sm:$0xf]
      %v454 = vld [vmem:[%s261 + $0xd4] sm:$0xf]
      %v455 = vld [vmem:[%s261 + $0xd8] sm:$0xf]
      %v456 = vld [vmem:[%s261 + $0xdc] sm:$0xf]
      %v457 = vld [vmem:[%s261 + $0xe0] sm:$0xf]
      %v458 = vld [vmem:[%s261 + $0xe4] sm:$0xf]
      %v459 = vld [vmem:[%s261 + $0xe8] sm:$0xf]
      %v460 = vld [vmem:[%s261 + $0xec] sm:$0xf]
      %v461 = vld [vmem:[%s261 + $0xf0] sm:$0xf]
      %v462 = vld [vmem:[%s261 + $0xf4] sm:$0xf]
      %v463 = vld [vmem:[%s261 + $0xf8] sm:$0xf]
      %v464 = vld [vmem:[%s261 + $0xfc] sm:$0xf]
      %v465 = vld [vmem:[%s261 + $0x100] sm:$0xf]
      %v466 = vld [vmem:[%s261 + $0x104] sm:$0xf]
      %v467 = vld [vmem:[%s261 + $0x108] sm:$0xf]
      %v468 = vld [vmem:[%s261 + $0x10c] sm:$0xf]
      %v469 = vld [vmem:[%s261 + $0x110] sm:$0xf]
      %v470 = vld [vmem:[%s261 + $0x114] sm:$0xf]
      %v471 = vld [vmem:[%s261 + $0x118] sm:$0xf]
      %v472 = vld [vmem:[%s261 + $0x11c] sm:$0xf]
      %v473 = vld [vmem:[%s261 + $0x120] sm:$0xf]
      %v474 = vld [vmem:[%s261 + $0x124] sm:$0xf]
      %v475 = vld [vmem:[%s261 + $0x128] sm:$0xf]
      %v476 = vld [vmem:[%s261 + $0x12c] sm:$0xf]
      %v477 = vld [vmem:[%s261 + $0x130] sm:$0xf]
      %v478 = vld [vmem:[%s261 + $0x134] sm:$0xf]
      %v479 = vld [vmem:[%s261 + $0x138] sm:$0xf]
      %v480 = vld [vmem:[%s261 + $0x13c] sm:$0xf]
      %v481 = vld [vmem:[%s261 + $0x140] sm:$0xf]
      %v482 = vld [vmem:[%s261 + $0x144] sm:$0xf]
      %v483 = vld [vmem:[%s261 + $0x148] sm:$0xf]
      %v484 = vld [vmem:[%s261 + $0x14c] sm:$0xf]
      %v485 = vld [vmem:[%s261 + $0x150] sm:$0xf]
      %v486 = vld [vmem:[%s261 + $0x154] sm:$0xf]
      %v487 = vld [vmem:[%s261 + $0x158] sm:$0xf]
      %v488 = vld [vmem:[%s261 + $0x15c] sm:$0xf]
      %v489 = vld [vmem:[%s264] sm:$0x1]
      %v491 = vlaneseq
      %v492 = vshrl.u32 %v491, 7
      %v493 = vsub.s32 0, %v492
      %v494 = vrot.slane %v489, %v493
      %v584 = vunpack.c.l.b16 %v401
      %v585 = vunpack.c.l.b16 %v402
      %v586 = vunpack.c.l.b16 %v403
      %v587 = vunpack.c.l.b16 %v404
      %v588 = vunpack.c.l.b16 %v405
      %v589 = vunpack.c.l.b16 %v406
      %v590 = vunpack.c.l.b16 %v407
      %v591 = vunpack.c.l.b16 %v408
      %v592 = vunpack.c.l.b16 %v409
      %v593 = vunpack.c.l.b16 %v410
      %v594 = vunpack.c.l.b16 %v411
      %v595 = vunpack.c.l.b16 %v412
      %v596 = vunpack.c.l.b16 %v413
      %v597 = vunpack.c.l.b16 %v414
      %v598 = vunpack.c.l.b16 %v415
      %v599 = vunpack.c.l.b16 %v416
      %v600 = vunpack.c.l.b16 %v417
      %v601 = vunpack.c.l.b16 %v418
      %v602 = vunpack.c.l.b16 %v419
      %v603 = vunpack.c.l.b16 %v420
      %v604 = vunpack.c.l.b16 %v421
      %v605 = vunpack.c.l.b16 %v422
      %v606 = vunpack.c.l.b16 %v423
      %v607 = vunpack.c.l.b16 %v424
      %v608 = vunpack.c.l.b16 %v425
      %v609 = vunpack.c.l.b16 %v426
      %v610 = vunpack.c.l.b16 %v427
      %v611 = vunpack.c.l.b16 %v428
      %v612 = vunpack.c.l.b16 %v429
      %v613 = vunpack.c.l.b16 %v430
      %v614 = vunpack.c.l.b16 %v431
      %v615 = vunpack.c.l.b16 %v432
      %v616 = vunpack.c.l.b16 %v433
      %v617 = vunpack.c.l.b16 %v434
      %v618 = vunpack.c.l.b16 %v435
      %v619 = vunpack.c.l.b16 %v436
      %v620 = vunpack.c.l.b16 %v437
      %v621 = vunpack.c.l.b16 %v438
      %v622 = vunpack.c.l.b16 %v439
      %v623 = vunpack.c.l.b16 %v440
      %v624 = vunpack.c.l.b16 %v441
      %v625 = vunpack.c.l.b16 %v442
      %v626 = vunpack.c.l.b16 %v443
      %v627 = vunpack.c.l.b16 %v444
      %v628 = vunpack.c.l.b16 %v445
      %v629 = vunpack.c.l.b16 %v446
      %v630 = vunpack.c.l.b16 %v447
      %v631 = vunpack.c.l.b16 %v448
      %v632 = vunpack.c.l.b16 %v449
      %v633 = vunpack.c.l.b16 %v450
      %v634 = vunpack.c.l.b16 %v451
      %v635 = vunpack.c.l.b16 %v452
      %v636 = vunpack.c.l.b16 %v453
      %v637 = vunpack.c.l.b16 %v454
      %v638 = vunpack.c.l.b16 %v455
      %v639 = vunpack.c.l.b16 %v456
      %v640 = vunpack.c.l.b16 %v457
      %v641 = vunpack.c.l.b16 %v458
      %v642 = vunpack.c.l.b16 %v459
      %v643 = vunpack.c.l.b16 %v460
      %v644 = vunpack.c.l.b16 %v461
      %v645 = vunpack.c.l.b16 %v462
      %v646 = vunpack.c.l.b16 %v463
      %v647 = vunpack.c.l.b16 %v464
      %v648 = vunpack.c.l.b16 %v465
      %v649 = vunpack.c.l.b16 %v466
      %v650 = vunpack.c.l.b16 %v467
      %v651 = vunpack.c.l.b16 %v468
      %v652 = vunpack.c.l.b16 %v469
      %v653 = vunpack.c.l.b16 %v470
      %v654 = vunpack.c.l.b16 %v471
      %v655 = vunpack.c.l.b16 %v472
      %v656 = vunpack.c.l.b16 %v473
      %v657 = vunpack.c.l.b16 %v474
      %v658 = vunpack.c.l.b16 %v475
      %v659 = vunpack.c.l.b16 %v476
      %v660 = vunpack.c.l.b16 %v477
      %v661 = vunpack.c.l.b16 %v478
      %v662 = vunpack.c.l.b16 %v479
      %v663 = vunpack.c.l.b16 %v480
      %v664 = vunpack.c.l.b16 %v481
      %v665 = vunpack.c.l.b16 %v482
      %v666 = vunpack.c.l.b16 %v483
      %v667 = vunpack.c.l.b16 %v484
      %v668 = vunpack.c.l.b16 %v485
      %v669 = vunpack.c.l.b16 %v486
      %v670 = vunpack.c.l.b16 %v487
      %v671 = vunpack.c.l.b16 %v488
      %v672 = vpack.c.b16 %v585, %v584
      %v673 = vpack.c.b16 %v587, %v586
      %v674 = vpack.c.b16 %v589, %v588
      %v675 = vpack.c.b16 %v591, %v590
      %v676 = vpack.c.b16 %v593, %v592
      %v677 = vpack.c.b16 %v595, %v594
      %v678 = vpack.c.b16 %v597, %v596
      %v679 = vpack.c.b16 %v599, %v598
      %v680 = vpack.c.b16 %v601, %v600
      %v681 = vpack.c.b16 %v603, %v602
      %v682 = vpack.c.b16 %v605, %v604
      %v683 = vpack.c.b16 %v607, %v606
      %v684 = vpack.c.b16 %v609, %v608
      %v685 = vpack.c.b16 %v611, %v610
      %v686 = vpack.c.b16 %v613, %v612
      %v687 = vpack.c.b16 %v615, %v614
      %v688 = vpack.c.b16 %v617, %v616
      %v689 = vpack.c.b16 %v619, %v618
      %v690 = vpack.c.b16 %v621, %v620
      %v691 = vpack.c.b16 %v623, %v622
      %v692 = vpack.c.b16 %v625, %v624
      %v693 = vpack.c.b16 %v627, %v626
      %v694 = vpack.c.b16 %v629, %v628
      %v695 = vpack.c.b16 %v631, %v630
      %v696 = vpack.c.b16 %v633, %v632
      %v697 = vpack.c.b16 %v635, %v634
      %v698 = vpack.c.b16 %v637, %v636
      %v699 = vpack.c.b16 %v639, %v638
      %v700 = vpack.c.b16 %v641, %v640
      %v701 = vpack.c.b16 %v643, %v642
      %v702 = vpack.c.b16 %v645, %v644
      %v703 = vpack.c.b16 %v647, %v646
      %v704 = vpack.c.b16 %v649, %v648
      %v705 = vpack.c.b16 %v651, %v650
      %v706 = vpack.c.b16 %v653, %v652
      %v707 = vpack.c.b16 %v655, %v654
      %v708 = vpack.c.b16 %v657, %v656
      %v709 = vpack.c.b16 %v659, %v658
      %v710 = vpack.c.b16 %v661, %v660
      %v711 = vpack.c.b16 %v663, %v662
      %v712 = vpack.c.b16 %v665, %v664
      %v713 = vpack.c.b16 %v667, %v666
      %v714 = vpack.c.b16 %v669, %v668
      %v715 = vpack.c.b16 %v671, %v670
      %v761 = vsel %vm382, %v381, 0
      %763 = vmatprep.subr.bf16.mxu0 0
      %764 = vmatpush1.bf16.msra.mxu0 %v679
      %765 = vmatprep.subr.bf16.mxu0 0
      %766 = vmatpush1.bf16.msra.mxu0 %v678
      %767 = vmatprep.subr.bf16.mxu0 0
      %768 = vmatpush1.bf16.msra.mxu0 %v677
      %769 = vmatprep.subr.bf16.mxu0 0
      %770 = vmatpush1.bf16.msra.mxu0 %v676
      %771 = vmatprep.subr.bf16.mxu0 0
      %772 = vmatpush1.bf16.msra.mxu0 %v675
      %773 = vmatprep.subr.bf16.mxu0 0
      %774 = vmatpush1.bf16.msra.mxu0 %v674
      %775 = vmatprep.subr.bf16.mxu0 0
      %776 = vmatpush1.bf16.msra.mxu0 %v673
      %777 = vmatprep.subr.bf16.mxu0 0
      %778 = vmatpush1.bf16.msra.mxu0 %v672
      %779 = vmatprep.subr.bf16.mxu0 0
      %780 = vmatpush2.bf16.msra.mxu0 %v687
      %781 = vmatprep.subr.bf16.mxu0 0
      %782 = vmatpush2.bf16.msra.mxu0 %v686
      %783 = vmatprep.subr.bf16.mxu0 0
      %784 = vmatpush2.bf16.msra.mxu0 %v685
      %785 = vmatprep.subr.bf16.mxu0 0
      %786 = vmatpush2.bf16.msra.mxu0 %v684
      %787 = vmatprep.subr.bf16.mxu0 0
      %788 = vmatpush2.bf16.msra.mxu0 %v683
      %789 = vmatprep.subr.bf16.mxu0 0
      %790 = vmatpush2.bf16.msra.mxu0 %v682
      %791 = vmatprep.subr.bf16.mxu0 0
      %792 = vmatpush2.bf16.msra.mxu0 %v681
      %793 = vmatprep.subr.bf16.mxu0 0
      %794 = vmatpush2.bf16.msra.mxu0 %v680
      %795 = vmatprep.mubr.bf16.mxu0 %v388
      %796 = vmatmul.mubr.bf16.gmra.mxu0 %v384
      %v797 = vpop.f32.mrf.mxu0
      %v798 = vadd.f32 %v494, %v797
      %v799 = vpop.f32.mrf.mxu0
      %v800 = vpop.f32.mrf.mxu0
      %v801 = vadd.f32 %v494, %v800
      %v802 = vpop.f32.mrf.mxu0
      %803 = vdwg.mxu0
      %804 = vmatprep.subr.bf16.mxu0 0
      %805 = vmatpush1.bf16.msra.mxu0 %v695
      %806 = vmatprep.subr.bf16.mxu0 0
      %807 = vmatpush1.bf16.msra.mxu0 %v694
      %808 = vmatprep.subr.bf16.mxu0 0
      %809 = vmatpush1.bf16.msra.mxu0 %v693
      %810 = vmatprep.subr.bf16.mxu0 0
      %811 = vmatpush1.bf16.msra.mxu0 %v692
      %812 = vmatprep.subr.bf16.mxu0 0
      %813 = vmatpush1.bf16.msra.mxu0 %v691
      %814 = vmatprep.subr.bf16.mxu0 0
      %815 = vmatpush1.bf16.msra.mxu0 %v690
      %816 = vmatprep.subr.bf16.mxu0 0
      %817 = vmatpush1.bf16.msra.mxu0 %v689
      %818 = vmatprep.subr.bf16.mxu0 0
      %819 = vmatpush1.bf16.msra.mxu0 %v688
      %820 = vmatprep.subr.bf16.mxu0 0
      %821 = vmatpush2.bf16.msra.mxu0 %v703
      %822 = vmatprep.subr.bf16.mxu0 0
      %823 = vmatpush2.bf16.msra.mxu0 %v702
      %824 = vmatprep.subr.bf16.mxu0 0
      %825 = vmatpush2.bf16.msra.mxu0 %v701
      %826 = vmatprep.subr.bf16.mxu0 0
      %827 = vmatpush2.bf16.msra.mxu0 %v700
      %828 = vmatprep.subr.bf16.mxu0 0
      %829 = vmatpush2.bf16.msra.mxu0 %v699
      %830 = vmatprep.subr.bf16.mxu0 0
      %831 = vmatpush2.bf16.msra.mxu0 %v698
      %832 = vmatprep.subr.bf16.mxu0 0
      %833 = vmatpush2.bf16.msra.mxu0 %v697
      %834 = vmatprep.subr.bf16.mxu0 0
      %835 = vmatpush2.bf16.msra.mxu0 %v696
      %836 = vmatprep.mubr.bf16.mxu0 %v396
      %837 = vmatmul.mubr.bf16.gmra.mxu0 %v392
      %v838 = vpop.f32.mrf.mxu0
      %v839 = vadd.f32 %v798, %v838
      %v840 = vpop.f32.mrf.mxu0
      %v841 = vpop.f32.mrf.mxu0
      %v842 = vadd.f32 %v801, %v841
      %v843 = vpop.f32.mrf.mxu0
      %844 = vdwg.mxu0
      %845 = vmatprep.subr.bf16.mxu0 0
      %846 = vmatpush1.bf16.msra.mxu0 %v711
      %847 = vmatprep.subr.bf16.mxu0 0
      %848 = vmatpush1.bf16.msra.mxu0 %v710
      %849 = vmatprep.subr.bf16.mxu0 0
      %850 = vmatpush1.bf16.msra.mxu0 %v709
      %851 = vmatprep.subr.bf16.mxu0 0
      %852 = vmatpush1.bf16.msra.mxu0 %v708
      %853 = vmatprep.subr.bf16.mxu0 0
      %854 = vmatpush1.bf16.msra.mxu0 %v707
      %855 = vmatprep.subr.bf16.mxu0 0
      %856 = vmatpush1.bf16.msra.mxu0 %v706
      %857 = vmatprep.subr.bf16.mxu0 0
      %858 = vmatpush1.bf16.msra.mxu0 %v705
      %859 = vmatprep.subr.bf16.mxu0 0
      %860 = vmatpush1.bf16.msra.mxu0 %v704
      %861 = vmatprep.subr.bf16.mxu0 0
      %862 = vmatpush2.bf16.msra.mxu0 0
      %863 = vmatprep.subr.bf16.mxu0 0
      %864 = vmatpush2.bf16.msra.mxu0 0
      %865 = vmatprep.subr.bf16.mxu0 0
      %866 = vmatpush2.bf16.msra.mxu0 0
      %867 = vmatprep.subr.bf16.mxu0 0
      %868 = vmatpush2.bf16.msra.mxu0 0
      %869 = vmatprep.subr.bf16.mxu0 0
      %870 = vmatpush2.bf16.msra.mxu0 %v715
      %871 = vmatprep.subr.bf16.mxu0 0
      %872 = vmatpush2.bf16.msra.mxu0 %v714
      %873 = vmatprep.subr.bf16.mxu0 0
      %874 = vmatpush2.bf16.msra.mxu0 %v713
      %875 = vmatprep.subr.bf16.mxu0 0
      %876 = vmatpush2.bf16.msra.mxu0 %v712
      %877 = vmatprep.mubr.bf16.mxu0 %v761
      %878 = vmatmul.mubr.bf16.gmra.mxu0 %v399
      %v879 = vpop.f32.mrf.mxu0
      %v880 = vadd.f32 %v839, %v879
      %v881 = vpop.f32.mrf.mxu0
      %v882 = vpop.f32.mrf.mxu0
      %v883 = vadd.f32 %v842, %v882
      %v884 = vpop.f32.mrf.mxu0
      %885 = vdwg.mxu0
      %v886 = vpack.c.bf16 %v883, %v880
      %v888 = vunpack.c.l.b16 %v886
      %v889 = vunpack.c.h.b16 %v886
      %v890 = vpack.c.b16 %v888, %v888
      %v891 = vpack.c.b16 %v889, %v889
      %vm894 = vcmask 519168
      %895 = vst.msk [vmem:[%s276] sm:$0xf] %vm894, %v890
      %896 = vst.msk [vmem:[%s276 + $0x4] sm:$0xf] %vm894, %v891
      %p897 = scmp.eq.s32.totalorder %s23, 0
      // Predicated region
      $region33: #{citrinet_block_forward.10} parent=31 // pred_check
        %p898 = pneg %p897
      $region34: #{citrinet_block_forward.10} parent=31 // pred_check_branch
        %900 = sbr.rel (%p898) target = $region36
      $region35: #{citrinet_block_forward.10} parent=31 // pred_region
        %vm901 = vcmask 516096
        %902 = vst.msk [vmem:[%s283] sm:$0x1] %vm901, 0.0
      $region36: #{citrinet_block_forward.10} parent=31 // pred_fallthru
        _
      %v903 = vld [vmem:[%s283] sm:$0x1]
      %v904 = vsel %vm382, %v880, 0.0
      %v905 = vsel %vm382, %v883, 0.0
      %v906 = vadd.f32 %v904, %v905
      %v907 = vrot.slane %v906, 4
      %v908 = vadd.f32 %v906, %v907
      %v909 = vrot.slane %v908, 2
      %v910 = vadd.f32 %v908, %v909
      %v911 = vrot.slane %v910, 1
      %v912 = vadd.f32 %v910, %v911
      %v913 = vadd.f32 %v903, %v912
      %vm914 = vcmask 516096
      %915 = vst.msk [vmem:[%s283] sm:$0x1] %vm914, %v913
      %s916 = smul.u32 2, %s23
      %p917 = scmp.lt.s32.totalorder %s21, 1
      %s918 = scalar_select %p917, %s21, 1
      %p919 = scmp.lt.s32.totalorder %s916, 3
      %s920 = scalar_select %p919, %s916, 3
      %p921 = scmp.lt.s32.totalorder %s22, 0
      %s922 = scalar_select %p921, %s22, 0
      %s923 = sadd.s32 %s922, %s920
      %s924 = smul.addr %s918, 4
      %s925 = sadd.s32 %s923, %s924
      %s926 = smul.addr %s925, 4
      %s927 = scalar_lea.vmem %s3, %s926
      %p928 = scmp.lt.s32.totalorder %s21, 1
      %s929 = scalar_select %p928, %s21, 1
      %p930 = scmp.lt.s32.totalorder %s22, 0
      %s931 = scalar_select %p930, %s22, 0
      %s932 = sadd.s32 %s931, %s929
      %s933 = scalar_lea.vmem %s4, %s932
      // Predicated region
      $region37: #{citrinet_block_forward.10} parent=31 // pred_check
        %p934 = pneg %p135
      $region38: #{citrinet_block_forward.10} parent=31 // pred_check_branch
        %936 = sbr.rel (%p934) target = $region40
      $region39: #{citrinet_block_forward.10} parent=31 // pred_region
        %s937 = smul.u32 2, %s23
      $region40: #{citrinet_block_forward.10} parent=31 // pred_fallthru
        _
      // Predicated region
      $region41: #{citrinet_block_forward.10} parent=31 // pred_check
        %p938 = pneg %p163
      $region42: #{citrinet_block_forward.10} parent=31 // pred_check_branch
        %940 = sbr.rel (%p938) target = $region44
      $region43: #{citrinet_block_forward.10} parent=31 // pred_region
        _
      $region44: #{citrinet_block_forward.10} parent=31 // pred_fallthru
        _
    $region32: #{citrinet_block_forward.10} parent=5 // pred_fallthru
      _
    %p941 = scmp.le.s32.totalorder 2, %s11
    // Predicated region
    $region45: #{citrinet_block_forward.10} parent=5 // pred_check
      %p942 = pneg %p941
    $region46: #{citrinet_block_forward.10} parent=5 // pred_check_branch
      %944 = sbr.rel (%p942) target = $region48
    $region47: #{citrinet_block_forward.10} parent=5 // pred_region
      %s945 = ssub.s32 %s11, 2
      // Predicated region
      $region49: #{citrinet_block_forward.10} parent=47 // pred_check
        %p946 = pneg %p141
      $region50: #{citrinet_block_forward.10} parent=47 // pred_check_branch
        %948 = sbr.rel (%p946) target = $region52
      $region51: #{citrinet_block_forward.10} parent=47 // pred_region
        %s949 = smul.u32 2, %s26
        %p950 = scmp.lt.s32.totalorder %s24, 1
        %s951 = scalar_select %p950, %s24, 1
        %p952 = scmp.lt.s32.totalorder %s949, 3
        %s953 = scalar_select %p952, %s949, 3
        %p954 = scmp.lt.s32.totalorder %s25, 0
        %s955 = scalar_select %p954, %s25, 0
        %s956 = sadd.s32 %s955, %s953
        %s957 = smul.addr %s951, 4
        %s958 = sadd.s32 %s956, %s957
        %s959 = smul.addr %s958, 4
        %s960 = scalar_lea.vmem %s3, %s959
      $region52: #{citrinet_block_forward.10} parent=47 // pred_fallthru
        _
      // Predicated region
      $region53: #{citrinet_block_forward.10} parent=47 // pred_check
        %p961 = pneg %p169
      $region54: #{citrinet_block_forward.10} parent=47 // pred_check_branch
        %963 = sbr.rel (%p961) target = $region56
      $region55: #{citrinet_block_forward.10} parent=47 // pred_region
        %p964 = scmp.lt.s32.totalorder %s24, 1
        %s965 = scalar_select %p964, %s24, 1
        %p966 = scmp.lt.s32.totalorder %s25, 0
        %s967 = scalar_select %p966, %s25, 0
        %s968 = sadd.s32 %s967, %s965
        %s969 = scalar_lea.vmem %s4, %s968
      $region56: #{citrinet_block_forward.10} parent=47 // pred_fallthru
        _
    $region48: #{citrinet_block_forward.10} parent=5 // pred_fallthru
      _
  $region6: #{citrinet_block_forward.10} parent=0 // loop_footer
    %s15 = sadd.s32 1, %s11
  $region7: #{citrinet_block_forward.10} parent=0 // loop_footer_branch
    %10 = sbr.rel target = $region3
  $region8: #{citrinet_block_forward.10} parent=0 // loop_exit
    _

</llo_original>
